<compile_context>
chip_gen: v5e
topology: v5e:2x2
jax: 0.10.0
libtpu: 0.0.40
codegen_flags: <defaults>
</compile_context>

<pallas_src>
import functools
import math

import jax
import jax.numpy as jnp
from jax.experimental import pallas as pl
from jax.experimental.pallas import tpu as pltpu


# -----------------------------------------------------------------------------
# Fused input/output MLP kernel (Linear -> LeakyReLU -> Dropout(0) -> Linear)
# -----------------------------------------------------------------------------
def _choose_tm(m):
    # Only tile M when each tile stays large (>=256 rows) so the ~0.35 us
    # per-grid-step overhead is amortized; tiny slabs run as a single block.
    for cand in (512, 256):
        if m % cand == 0 and m // cand >= 2:
            return cand
    return m


def _mlp_kernel(has_add, *refs):
    if has_add:
        x_ref, add_ref, w1_ref, b1_ref, w2_ref, b2_ref, o_ref = refs
    else:
        x_ref, w1_ref, b1_ref, w2_ref, b2_ref, o_ref = refs
        add_ref = None
    h = jnp.dot(x_ref[...], w1_ref[...], preferred_element_type=jnp.float32) + b1_ref[...]
    h = jnp.where(h >= 0, h, 0.01 * h)  # LeakyReLU(0.01); Dropout(p=0) omitted
    out = jnp.dot(h, w2_ref[...], preferred_element_type=jnp.float32) + b2_ref[...]
    if has_add:
        out = out + add_ref[...]
    o_ref[...] = out.astype(o_ref.dtype)


def pallas_mlp(x, w1, b1, w2, b2, *, add=None, lane_pad=None):
    """Fused MLP.  `add` is an optional residual-style additive input with the
    same shape as the output (folds the pid/positional add into the kernel).
    If lane_pad is set, the output's last dim is zero-padded up to a multiple
    of lane_pad (lane-dense, unmasked stores); caller slices."""
    assert add is None or lane_pad is None
    M, K = x.shape
    F = w1.shape[1]
    N = w2.shape[1]
    if lane_pad is not None and N % lane_pad != 0:
        n_pad = lane_pad * pl.cdiv(N, lane_pad)
        w2 = jnp.pad(w2, ((0, 0), (0, n_pad - N)))
        b2 = jnp.pad(b2, ((0, 0), (0, n_pad - N)))
        N = n_pad
    tm = _choose_tm(M)
    has_add = add is not None

    operands = [x] + ([add] if has_add else []) + [w1, b1, w2, b2]
    in_specs = [pl.BlockSpec((tm, K), lambda i: (i, 0))]
    if has_add:
        in_specs.append(pl.BlockSpec((tm, N), lambda i: (i, 0)))
    in_specs += [
        pl.BlockSpec((K, F), lambda i: (0, 0)),
        pl.BlockSpec((1, F), lambda i: (0, 0)),
        pl.BlockSpec((F, N), lambda i: (0, 0)),
        pl.BlockSpec((1, N), lambda i: (0, 0)),
    ]

    return pl.pallas_call(
        functools.partial(_mlp_kernel, has_add),
        out_shape=jax.ShapeDtypeStruct((M, N), jnp.float32),
        grid=(M // tm,),
        in_specs=in_specs,
        out_specs=pl.BlockSpec((tm, N), lambda i: (i, 0)),
        compiler_params=pltpu.CompilerParams(dimension_semantics=("parallel",)),
    )(*operands)


# -----------------------------------------------------------------------------
# ALL transformer layers fused into one kernel.
# Grid = (batch, layer); activation lives in a VMEM scratch across the layer
# axis; per-layer weights are indexed by the layer grid position.
# -----------------------------------------------------------------------------
def _fused_layers_kernel(x_ref, src_ref, bias_ref,
                         ln1g_ref, ln1b_ref, wqkv_ref, bqkv_ref, wo_ref, bo_ref,
                         ln2g_ref, ln2b_ref, wq2_ref, bq2_ref, wkv2_ref, bkv2_ref,
                         wo2_ref, bo2_ref,
                         ln3g_ref, ln3b_ref, w1_ref, b1_ref, w2_ref, b2_ref,
                         o_ref, x_scr,
                         *, seq, heads, dh, scale):
    d_model = heads * dh
    layer = pl.program_id(1)

    @pl.when(layer == 0)
    def _():
        x_scr[...] = x_ref[...].astype(jnp.float32)

    x = x_scr[...]                               # [seq, d_model]
    src = src_ref[...].astype(jnp.float32)       # [seq, d_source]
    bias = bias_ref[0]                           # [1, seq] key-padding bias

    def layer_norm(v, g, b):
        mu = jnp.mean(v, axis=-1, keepdims=True)
        c = v - mu
        var = jnp.mean(c * c, axis=-1, keepdims=True)
        return c * jax.lax.rsqrt(var + 1e-5) * g + b

    def attend(q, k, v):
        # q, k, v: [seq, d_model].  Per-head attention with static lane
        # slices; head outputs kept in registers and concatenated once into a
        # lane-dense [seq, d_model] value (no masked scratch stores).
        outs = []
        for h in range(heads):
            c0 = h * dh
            s = jax.lax.dot_general(
                q[:, c0:c0 + dh], k[:, c0:c0 + dh], (((1,), (1,)), ((), ())),
                preferred_element_type=jnp.float32) * scale + bias
            m = jnp.max(s, axis=-1, keepdims=True)
            p = jnp.exp(s - m)
            denom = jnp.sum(p, axis=-1, keepdims=True)
            o_h = jnp.dot(p, v[:, c0:c0 + dh], preferred_element_type=jnp.float32)
            outs.append(o_h * pl.reciprocal(denom, approx=False))
        return jnp.concatenate(outs, axis=-1)

    # --- self attention (pre-norm) -------------------------------------------
    h1 = layer_norm(x, ln1g_ref[0], ln1b_ref[0])
    qkv = jnp.dot(h1, wqkv_ref[0], preferred_element_type=jnp.float32) + bqkv_ref[0]
    a1 = attend(qkv[:, :d_model], qkv[:, d_model:2 * d_model], qkv[:, 2 * d_model:])
    x = x + jnp.dot(a1, wo_ref[0], preferred_element_type=jnp.float32) + bo_ref[0]

    # --- cross attention to src (= z) ----------------------------------------
    h2 = layer_norm(x, ln2g_ref[0], ln2b_ref[0])
    q2 = jnp.dot(h2, wq2_ref[0], preferred_element_type=jnp.float32) + bq2_ref[0]
    kv = jnp.dot(src, wkv2_ref[0], preferred_element_type=jnp.float32) + bkv2_ref[0]
    a2 = attend(q2, kv[:, :d_model], kv[:, d_model:])
    x = x + jnp.dot(a2, wo2_ref[0], preferred_element_type=jnp.float32) + bo2_ref[0]

    # --- feed-forward ---------------------------------------------------------
    h3 = layer_norm(x, ln3g_ref[0], ln3b_ref[0])
    f = jnp.dot(h3, w1_ref[0], preferred_element_type=jnp.float32) + b1_ref[0]
    f = jnp.where(f >= 0, f, 0.01 * f)
    x = x + jnp.dot(f, w2_ref[0], preferred_element_type=jnp.float32) + b2_ref[0]

    x_scr[...] = x

    @pl.when(layer == pl.num_programs(1) - 1)
    def _():
        o_ref[...] = x_scr[...].astype(o_ref.dtype)


_WEIGHT_ORDER = ["ln1_g", "ln1_b", "qkv_w", "qkv_b", "wo_w", "wo_b",
                 "ln2_g", "ln2_b", "q2_w", "q2_b", "kv2_w", "kv2_b",
                 "wo2_w", "wo2_b", "ln3_g", "ln3_b", "ff1_w", "ff1_b",
                 "ff2_w", "ff2_b"]


def fused_decoder_layers(x2d, src2d, key_bias3, stacked, *, B, S, H):
    """x2d, src2d: batch-major [B*S, *]; key_bias3: [B, 1, S] additive bias.
    stacked[k]: [L, ...] per-layer weights stacked along a leading layer axis."""
    M, D = x2d.shape
    d_source = src2d.shape[1]
    Dh = D // H
    scale = 1.0 / math.sqrt(Dh)
    L = stacked["ln1_g"].shape[0]
    weights = [stacked[k] for k in _WEIGHT_ORDER]

    kernel = functools.partial(_fused_layers_kernel, seq=S, heads=H, dh=Dh,
                               scale=scale)

    in_specs = (
        [pl.BlockSpec((S, D), lambda b, l: (b, 0)),
         pl.BlockSpec((S, d_source), lambda b, l: (b, 0)),
         pl.BlockSpec((1, 1, S), lambda b, l: (b, 0, 0))]
        + [pl.BlockSpec((1,) + w.shape[1:], lambda b, l: (l, 0, 0)) for w in weights]
    )

    return pl.pallas_call(
        kernel,
        out_shape=jax.ShapeDtypeStruct((M, D), jnp.float32),
        grid=(B, L),
        in_specs=in_specs,
        out_specs=pl.BlockSpec((S, D), lambda b, l: (b, 0)),
        scratch_shapes=[pltpu.VMEM((S, D), jnp.float32)],
        compiler_params=pltpu.CompilerParams(
            dimension_semantics=("parallel", "arbitrary"),
            # explicit VMEM budget (kept well under v7x's 64 MiB physical VMEM)
            vmem_limit_bytes=32 * 1024 * 1024),
    )(x2d, src2d, key_bias3, *weights)


# -----------------------------------------------------------------------------
# Model glue (plain JAX around the Pallas kernels)
# -----------------------------------------------------------------------------
def get_positional_encoding(d_model, max_length):
    pos = jnp.arange(max_length, dtype=jnp.float32)[:, None]
    i = jnp.arange(0, d_model, 2, dtype=jnp.float32)
    div = jnp.exp(-jnp.log(10000.0) * i / d_model)
    pe = jnp.zeros((max_length, d_model), jnp.float32)
    pe = pe.at[:, 0::2].set(jnp.sin(pos * div))
    pe = pe.at[:, 1::2].set(jnp.cos(pos * div))
    return pe


def decoder_forward(params, z, pid, mask, *, heads):
    S, B, d_source = z.shape
    d_model = params["ff_in2"]["w"].shape[1]
    d_output = params["ff_out2"]["w"].shape[1]

    # Pad S to a multiple of 8 so per-batch [S, D] blocks satisfy the (8, 128)
    # sublane rule and the batch grid axis (v7x 2-TC parallelism) survives.
    S_pad = 8 * pl.cdiv(S, 8)
    if S_pad != S:
        pad = S_pad - S
        z = jnp.pad(z, ((0, pad), (0, 0), (0, 0)))
        pid = jnp.pad(pid, ((0, pad), (0, 0), (0, 0)))
        mask = jnp.pad(mask, ((0, 0), (0, pad)))   # padded keys masked out

    # batch-major 2-D activation slab [B*S_pad, *] for the whole forward pass
    z2d = jnp.transpose(z, (1, 0, 2)).reshape(B * S_pad, d_source)

    # use_pid branch (embedding / positional gathers stay in XLA glue); folded
    # into the ff_input MLP kernel as an additive input — no extra HBM RMW.
    pid_idx = jnp.argmax(pid, axis=-1)                                    # [S_pad, B]
    pos_idx = jnp.max(jnp.cumsum(pid, axis=0) - 1.0, axis=-1).astype(jnp.int32)
    add = params["pid_emb"][pid_idx] + params["pos_enc"][pos_idx]         # [S_pad, B, D]
    add2d = jnp.transpose(add, (1, 0, 2)).reshape(B * S_pad, d_model)

    # ff_input: Linear -> LeakyReLU -> Dropout(0) -> Linear (+ pid/pos add)
    x2d = pallas_mlp(z2d, params["ff_in1"]["w"], params["ff_in1"]["b"],
                     params["ff_in2"]["w"], params["ff_in2"]["b"], add=add2d)

    # additive key-padding bias from boolean mask (True = valid token)
    key_bias3 = jnp.where(mask, 0.0, -1e9).astype(jnp.float32)[:, None, :]  # [B,1,S_pad]

    # all transformer layers in ONE pallas_call (activation resident in VMEM)
    x2d = fused_decoder_layers(x2d, z2d, key_bias3, params["layers_stacked"],
                               B=B, S=S_pad, H=heads)

    # ff_output with lane-dense (128-padded) store, sliced back to d_output
    out2d = pallas_mlp(x2d, params["ff_out1"]["w"], params["ff_out1"]["b"],
                       params["ff_out2"]["w"], params["ff_out2"]["b"],
                       lane_pad=128)[:, :d_output]
    out = out2d.reshape(B, S_pad, d_output).transpose(1, 0, 2)            # [S_pad, B, d_out]
    return out[:S]


# -----------------------------------------------------------------------------
# Deterministic parameter initialization (per-layer weights stacked on axis 0)
# -----------------------------------------------------------------------------
def init_params(key, *, d_model, d_ff, d_source, d_output, d_pid, heads,
                n_layers, max_length):
    keys = iter(jax.random.split(key, 32 + 32 * n_layers))

    def lin(d_in, d_out):
        bound = 1.0 / math.sqrt(d_in)
        w = jax.random.uniform(next(keys), (d_in, d_out), jnp.float32, -bound, bound)
        b = jax.random.uniform(next(keys), (1, d_out), jnp.float32, -bound, bound)
        return {"w": w, "b": b}

    def lin_cat(d_in, d_out, n):
        # n independent linears fused along the output dim (e.g. Wq|Wk|Wv)
        parts = [lin(d_in, d_out) for _ in range(n)]
        return {"w": jnp.concatenate([q["w"] for q in parts], axis=1),
                "b": jnp.concatenate([q["b"] for q in parts], axis=1)}

    params = {
        "ff_in1": lin(d_source, d_ff),
        "ff_in2": lin(d_ff, d_model),
        "pid_emb": jax.random.normal(next(keys), (d_pid, d_model), jnp.float32),
        "pos_enc": get_positional_encoding(d_model, max_length),
        "ff_out1": lin(d_model, d_ff),
        "ff_out2": lin(d_ff, d_output),
    }

    layer_dicts = []
    for _ in range(n_layers):
        qkv = lin_cat(d_model, d_model, 3)        # fused Wq|Wk|Wv
        wo = lin(d_model, d_model)
        q2 = lin(d_model, d_model)
        kv2 = lin_cat(d_source, d_model, 2)       # fused src Wk|Wv
        wo2 = lin(d_model, d_model)
        ff1 = lin(d_model, d_ff)
        ff2 = lin(d_ff, d_model)
        layer_dicts.append({
            "ln1_g": jnp.ones((1, d_model), jnp.float32),
            "ln1_b": jnp.zeros((1, d_model), jnp.float32),
            "qkv_w": qkv["w"], "qkv_b": qkv["b"],
            "wo_w": wo["w"], "wo_b": wo["b"],
            "ln2_g": jnp.ones((1, d_model), jnp.float32),
            "ln2_b": jnp.zeros((1, d_model), jnp.float32),
            "q2_w": q2["w"], "q2_b": q2["b"],
            "kv2_w": kv2["w"], "kv2_b": kv2["b"],
            "wo2_w": wo2["w"], "wo2_b": wo2["b"],
            "ln3_g": jnp.ones((1, d_model), jnp.float32),
            "ln3_b": jnp.zeros((1, d_model), jnp.float32),
            "ff1_w": ff1["w"], "ff1_b": ff1["b"],
            "ff2_w": ff2["w"], "ff2_b": ff2["b"],
        })
    # Stack each per-layer weight along a new leading layer axis so every
    # layer runs inside ONE pallas_call (grid axis over layers).
    params["layers_stacked"] = {
        k: jnp.stack([ld[k] for ld in layer_dicts], axis=0) for k in layer_dicts[0]
    }
    return params


# -----------------------------------------------------------------------------
# Demo
# -----------------------------------------------------------------------------
if __name__ == "__main__":
    S, B = 8, 2
    d_model, d_ff, d_source, d_output = 32, 64, 32, 3
    d_pid, heads, n_layers, max_length = 8, 4, 2, 128

    root = jax.random.PRNGKey(0)
    kp, kz, kpid = jax.random.split(root, 3)

    params = init_params(kp, d_model=d_model, d_ff=d_ff, d_source=d_source,
                         d_output=d_output, d_pid=d_pid, heads=heads,
                         n_layers=n_layers, max_length=max_length)

    z = jax.random.normal(kz, (S, B, d_source), jnp.float32)          # [S, B, d_source]
    pid_idx = jax.random.randint(kpid, (S, B), 0, d_pid)
    pid = jax.nn.one_hot(pid_idx, d_pid, dtype=jnp.float32)           # [S, B, d_pid]
    lengths = jnp.array([S, 5])
    mask = jnp.arange(S)[None, :] < lengths[:, None]                  # [B, S] True = valid

    fwd = jax.jit(functools.partial(decoder_forward, heads=heads))
    out = jax.block_until_ready(fwd(params, z, pid, mask))

    assert out.shape == (S, B, d_output), out.shape
    assert bool(jnp.all(jnp.isfinite(out)))
    print("KERNEL_OK")
</pallas_src>

<mosaic_0001>
module attributes {stable_mosaic.version = 11 : i64} {
  func.func @_mlp_kernel(%arg0: i32, %arg1: memref<16x32xf32, #tpu.memory_space<vmem>>, %arg2: memref<16x32xf32, #tpu.memory_space<vmem>>, %arg3: memref<32x64xf32, #tpu.memory_space<vmem>>, %arg4: memref<1x64xf32, #tpu.memory_space<vmem>>, %arg5: memref<64x32xf32, #tpu.memory_space<vmem>>, %arg6: memref<1x32xf32, #tpu.memory_space<vmem>>, %arg7: memref<16x32xf32, #tpu.memory_space<vmem>>) attributes {dimension_semantics = [#tpu.dimension_semantics<parallel>], iteration_bounds = array<i64: 1>, scalar_prefetch = 0 : i64, scratch_operands = 0 : i64, tpu.core_type = #tpu.core_type<tc>, window_params = [{transform_indices = @transform_0, window_bounds = array<i64: 16, 32>}, {transform_indices = @transform_1, window_bounds = array<i64: 16, 32>}, {pipeline_mode = #tpu.pipeline_mode<synchronous>, transform_indices = @transform_2, window_bounds = array<i64: 32, 64>}, {pipeline_mode = #tpu.pipeline_mode<synchronous>, transform_indices = @transform_3, window_bounds = array<i64: 1, 64>}, {pipeline_mode = #tpu.pipeline_mode<synchronous>, transform_indices = @transform_4, window_bounds = array<i64: 64, 32>}, {pipeline_mode = #tpu.pipeline_mode<synchronous>, transform_indices = @transform_5, window_bounds = array<i64: 1, 32>}, {transform_indices = @transform_6, window_bounds = array<i64: 16, 32>}]} {
    %c0 = arith.constant 0 : index
    %c0_0 = arith.constant 0 : index
    %0 = vector.load %arg1[%c0, %c0_0] : memref<16x32xf32, #tpu.memory_space<vmem>>, vector<16x32xf32>
    %c0_1 = arith.constant 0 : index
    %c0_2 = arith.constant 0 : index
    %1 = vector.load %arg3[%c0_1, %c0_2] : memref<32x64xf32, #tpu.memory_space<vmem>>, vector<32x64xf32>
    %cst = arith.constant dense<0.000000e+00> : vector<16x64xf32>
    %2 = tpu.matmul %0, %1, %cst {dimension_numbers = #tpu.dot_dimension_numbers<[1], [0], [0], [1], [0, 0, 1, 1], [], []>} : vector<16x32xf32>, vector<32x64xf32>, vector<16x64xf32> -> vector<16x64xf32>
    %c0_3 = arith.constant 0 : index
    %c0_4 = arith.constant 0 : index
    %3 = vector.load %arg4[%c0_3, %c0_4] : memref<1x64xf32, #tpu.memory_space<vmem>>, vector<1x64xf32>
    %4 = vector.broadcast %3 : vector<1x64xf32> to vector<16x64xf32>
    %5 = arith.addf %2, %4 : vector<16x64xf32>
    %cst_5 = arith.constant 0.000000e+00 : f32
    %6 = vector.broadcast %cst_5 : f32 to vector<16x64xf32>
    %7 = arith.cmpf oge, %5, %6 : vector<16x64xf32>
    %cst_6 = arith.constant 0.00999999977 : f32
    %8 = vector.broadcast %cst_6 : f32 to vector<16x64xf32>
    %9 = arith.mulf %8, %5 : vector<16x64xf32>
    %10 = arith.select %7, %5, %9 : vector<16x64xi1>, vector<16x64xf32>
    %c0_7 = arith.constant 0 : index
    %c0_8 = arith.constant 0 : index
    %11 = vector.load %arg5[%c0_7, %c0_8] : memref<64x32xf32, #tpu.memory_space<vmem>>, vector<64x32xf32>
    %cst_9 = arith.constant dense<0.000000e+00> : vector<16x32xf32>
    %12 = tpu.matmul %10, %11, %cst_9 {dimension_numbers = #tpu.dot_dimension_numbers<[1], [0], [0], [1], [0, 0, 1, 1], [], []>} : vector<16x64xf32>, vector<64x32xf32>, vector<16x32xf32> -> vector<16x32xf32>
    %c0_10 = arith.constant 0 : index
    %c0_11 = arith.constant 0 : index
    %13 = vector.load %arg6[%c0_10, %c0_11] : memref<1x32xf32, #tpu.memory_space<vmem>>, vector<1x32xf32>
    %14 = vector.broadcast %13 : vector<1x32xf32> to vector<16x32xf32>
    %15 = arith.addf %12, %14 : vector<16x32xf32>
    %c0_12 = arith.constant 0 : index
    %c0_13 = arith.constant 0 : index
    %16 = vector.load %arg2[%c0_12, %c0_13] : memref<16x32xf32, #tpu.memory_space<vmem>>, vector<16x32xf32>
    %17 = arith.addf %15, %16 : vector<16x32xf32>
    %c0_14 = arith.constant 0 : index
    %c0_15 = arith.constant 0 : index
    %18 = vector.load %arg7[%c0_14, %c0_15] : memref<16x32xf32, #tpu.memory_space<vmem>>, vector<16x32xf32>
    tpu.vector_store %arg7[%c0_14, %c0_15], %17 {strides = array<i32>} : memref<16x32xf32, #tpu.memory_space<vmem>>, vector<16x32xf32>,
    return
  }
  func.func @transform_0(%arg0: i32) -> (i32, i32) {
    %c0_i32 = arith.constant 0 : i32
    %c0_i32_0 = arith.constant 0 : i32
    return %arg0, %c0_i32 : i32, i32
  }
  func.func @transform_1(%arg0: i32) -> (i32, i32) {
    %c0_i32 = arith.constant 0 : i32
    %c0_i32_0 = arith.constant 0 : i32
    return %arg0, %c0_i32 : i32, i32
  }
  func.func @transform_2(%arg0: i32) -> (i32, i32) {
    %c0_i32 = arith.constant 0 : i32
    %c0_i32_0 = arith.constant 0 : i32
    %c0_i32_1 = arith.constant 0 : i32
    return %c0_i32, %c0_i32_0 : i32, i32
  }
  func.func @transform_3(%arg0: i32) -> (i32, i32) {
    %c0_i32 = arith.constant 0 : i32
    %c0_i32_0 = arith.constant 0 : i32
    %c0_i32_1 = arith.constant 0 : i32
    return %c0_i32, %c0_i32_0 : i32, i32
  }
  func.func @transform_4(%arg0: i32) -> (i32, i32) {
    %c0_i32 = arith.constant 0 : i32
    %c0_i32_0 = arith.constant 0 : i32
    %c0_i32_1 = arith.constant 0 : i32
    return %c0_i32, %c0_i32_0 : i32, i32
  }
  func.func @transform_5(%arg0: i32) -> (i32, i32) {
    %c0_i32 = arith.constant 0 : i32
    %c0_i32_0 = arith.constant 0 : i32
    %c0_i32_1 = arith.constant 0 : i32
    return %c0_i32, %c0_i32_0 : i32, i32
  }
  func.func @transform_6(%arg0: i32) -> (i32, i32) {
    %c0_i32 = arith.constant 0 : i32
    %c0_i32_0 = arith.constant 0 : i32
    return %arg0, %c0_i32 : i32, i32
  }
}

module attributes {stable_mosaic.version = 11 : i64} {
  func.func @_mlp_kernel(%arg0: i32, %arg1: memref<16x32xf32, #tpu.memory_space<vmem>>, %arg2: memref<32x64xf32, #tpu.memory_space<vmem>>, %arg3: memref<1x64xf32, #tpu.memory_space<vmem>>, %arg4: memref<64x128xf32, #tpu.memory_space<vmem>>, %arg5: memref<1x128xf32, #tpu.memory_space<vmem>>, %arg6: memref<16x128xf32, #tpu.memory_space<vmem>>) attributes {dimension_semantics = [#tpu.dimension_semantics<parallel>], iteration_bounds = array<i64: 1>, scalar_prefetch = 0 : i64, scratch_operands = 0 : i64, tpu.core_type = #tpu.core_type<tc>, window_params = [{transform_indices = @transform_0, window_bounds = array<i64: 16, 32>}, {pipeline_mode = #tpu.pipeline_mode<synchronous>, transform_indices = @transform_1, window_bounds = array<i64: 32, 64>}, {pipeline_mode = #tpu.pipeline_mode<synchronous>, transform_indices = @transform_2, window_bounds = array<i64: 1, 64>}, {pipeline_mode = #tpu.pipeline_mode<synchronous>, transform_indices = @transform_3, window_bounds = array<i64: 64, 128>}, {pipeline_mode = #tpu.pipeline_mode<synchronous>, transform_indices = @transform_4, window_bounds = array<i64: 1, 128>}, {transform_indices = @transform_5, window_bounds = array<i64: 16, 128>}]} {
    %c0 = arith.constant 0 : index
    %c0_0 = arith.constant 0 : index
    %0 = vector.load %arg1[%c0, %c0_0] : memref<16x32xf32, #tpu.memory_space<vmem>>, vector<16x32xf32>
    %c0_1 = arith.constant 0 : index
    %c0_2 = arith.constant 0 : index
    %1 = vector.load %arg2[%c0_1, %c0_2] : memref<32x64xf32, #tpu.memory_space<vmem>>, vector<32x64xf32>
    %cst = arith.constant dense<0.000000e+00> : vector<16x64xf32>
    %2 = tpu.matmul %0, %1, %cst {dimension_numbers = #tpu.dot_dimension_numbers<[1], [0], [0], [1], [0, 0, 1, 1], [], []>} : vector<16x32xf32>, vector<32x64xf32>, vector<16x64xf32> -> vector<16x64xf32>
    %c0_3 = arith.constant 0 : index
    %c0_4 = arith.constant 0 : index
    %3 = vector.load %arg3[%c0_3, %c0_4] : memref<1x64xf32, #tpu.memory_space<vmem>>, vector<1x64xf32>
    %4 = vector.broadcast %3 : vector<1x64xf32> to vector<16x64xf32>
    %5 = arith.addf %2, %4 : vector<16x64xf32>
    %cst_5 = arith.constant 0.000000e+00 : f32
    %6 = vector.broadcast %cst_5 : f32 to vector<16x64xf32>
    %7 = arith.cmpf oge, %5, %6 : vector<16x64xf32>
    %cst_6 = arith.constant 0.00999999977 : f32
    %8 = vector.broadcast %cst_6 : f32 to vector<16x64xf32>
    %9 = arith.mulf %8, %5 : vector<16x64xf32>
    %10 = arith.select %7, %5, %9 : vector<16x64xi1>, vector<16x64xf32>
    %c0_7 = arith.constant 0 : index
    %c0_8 = arith.constant 0 : index
    %11 = vector.load %arg4[%c0_7, %c0_8] : memref<64x128xf32, #tpu.memory_space<vmem>>, vector<64x128xf32>
    %cst_9 = arith.constant dense<0.000000e+00> : vector<16x128xf32>
    %12 = tpu.matmul %10, %11, %cst_9 {dimension_numbers = #tpu.dot_dimension_numbers<[1], [0], [0], [1], [0, 0, 1, 1], [], []>} : vector<16x64xf32>, vector<64x128xf32>, vector<16x128xf32> -> vector<16x128xf32>
    %c0_10 = arith.constant 0 : index
    %c0_11 = arith.constant 0 : index
    %13 = vector.load %arg5[%c0_10, %c0_11] : memref<1x128xf32, #tpu.memory_space<vmem>>, vector<1x128xf32>
    %14 = vector.broadcast %13 : vector<1x128xf32> to vector<16x128xf32>
    %15 = arith.addf %12, %14 : vector<16x128xf32>
    %c0_12 = arith.constant 0 : index
    %c0_13 = arith.constant 0 : index
    %16 = vector.load %arg6[%c0_12, %c0_13] : memref<16x128xf32, #tpu.memory_space<vmem>>, vector<16x128xf32>
    tpu.vector_store %arg6[%c0_12, %c0_13], %15 {strides = array<i32>} : memref<16x128xf32, #tpu.memory_space<vmem>>, vector<16x128xf32>,
    return
  }
  func.func @transform_0(%arg0: i32) -> (i32, i32) {
    %c0_i32 = arith.constant 0 : i32
    %c0_i32_0 = arith.constant 0 : i32
    return %arg0, %c0_i32 : i32, i32
  }
  func.func @transform_1(%arg0: i32) -> (i32, i32) {
    %c0_i32 = arith.constant 0 : i32
    %c0_i32_0 = arith.constant 0 : i32
    %c0_i32_1 = arith.constant 0 : i32
    return %c0_i32, %c0_i32_0 : i32, i32
  }
  func.func @transform_2(%arg0: i32) -> (i32, i32) {
    %c0_i32 = arith.constant 0 : i32
    %c0_i32_0 = arith.constant 0 : i32
    %c0_i32_1 = arith.constant 0 : i32
    return %c0_i32, %c0_i32_0 : i32, i32
  }
  func.func @transform_3(%arg0: i32) -> (i32, i32) {
    %c0_i32 = arith.constant 0 : i32
    %c0_i32_0 = arith.constant 0 : i32
    %c0_i32_1 = arith.constant 0 : i32
    return %c0_i32, %c0_i32_0 : i32, i32
  }
  func.func @transform_4(%arg0: i32) -> (i32, i32) {
    %c0_i32 = arith.constant 0 : i32
    %c0_i32_0 = arith.constant 0 : i32
    %c0_i32_1 = arith.constant 0 : i32
    return %c0_i32, %c0_i32_0 : i32, i32
  }
  func.func @transform_5(%arg0: i32) -> (i32, i32) {
    %c0_i32 = arith.constant 0 : i32
    %c0_i32_0 = arith.constant 0 : i32
    return %arg0, %c0_i32 : i32, i32
  }
}

module attributes {stable_mosaic.version = 11 : i64} {
  func.func @_fused_layers_kernel(%arg0: i32, %arg1: i32, %arg2: memref<8x32xf32, #tpu.memory_space<vmem>>, %arg3: memref<8x32xf32, #tpu.memory_space<vmem>>, %arg4: memref<1x1x8xf32, #tpu.memory_space<vmem>>, %arg5: memref<1x1x32xf32, #tpu.memory_space<vmem>>, %arg6: memref<1x1x32xf32, #tpu.memory_space<vmem>>, %arg7: memref<1x32x96xf32, #tpu.memory_space<vmem>>, %arg8: memref<1x1x96xf32, #tpu.memory_space<vmem>>, %arg9: memref<1x32x32xf32, #tpu.memory_space<vmem>>, %arg10: memref<1x1x32xf32, #tpu.memory_space<vmem>>, %arg11: memref<1x1x32xf32, #tpu.memory_space<vmem>>, %arg12: memref<1x1x32xf32, #tpu.memory_space<vmem>>, %arg13: memref<1x32x32xf32, #tpu.memory_space<vmem>>, %arg14: memref<1x1x32xf32, #tpu.memory_space<vmem>>, %arg15: memref<1x32x64xf32, #tpu.memory_space<vmem>>, %arg16: memref<1x1x64xf32, #tpu.memory_space<vmem>>, %arg17: memref<1x32x32xf32, #tpu.memory_space<vmem>>, %arg18: memref<1x1x32xf32, #tpu.memory_space<vmem>>, %arg19: memref<1x1x32xf32, #tpu.memory_space<vmem>>, %arg20: memref<1x1x32xf32, #tpu.memory_space<vmem>>, %arg21: memref<1x32x64xf32, #tpu.memory_space<vmem>>, %arg22: memref<1x1x64xf32, #tpu.memory_space<vmem>>, %arg23: memref<1x64x32xf32, #tpu.memory_space<vmem>>, %arg24: memref<1x1x32xf32, #tpu.memory_space<vmem>>, %arg25: memref<8x32xf32, #tpu.memory_space<vmem>>, %arg26: memref<8x32xf32, #tpu.memory_space<vmem>>) attributes {dimension_semantics = [#tpu.dimension_semantics<parallel>, #tpu.dimension_semantics<arbitrary>], iteration_bounds = array<i64: 2, 2>, scalar_prefetch = 0 : i64, scratch_operands = 1 : i64, tpu.core_type = #tpu.core_type<tc>, window_params = [{transform_indices = @transform_0, window_bounds = array<i64: 8, 32>}, {transform_indices = @transform_1, window_bounds = array<i64: 8, 32>}, {transform_indices = @transform_2, window_bounds = array<i64: 1, 1, 8>}, {transform_indices = @transform_3, window_bounds = array<i64: 1, 1, 32>}, {transform_indices = @transform_4, window_bounds = array<i64: 1, 1, 32>}, {transform_indices = @transform_5, window_bounds = array<i64: 1, 32, 96>}, {transform_indices = @transform_6, window_bounds = array<i64: 1, 1, 96>}, {transform_indices = @transform_7, window_bounds = array<i64: 1, 32, 32>}, {transform_indices = @transform_8, window_bounds = array<i64: 1, 1, 32>}, {transform_indices = @transform_9, window_bounds = array<i64: 1, 1, 32>}, {transform_indices = @transform_10, window_bounds = array<i64: 1, 1, 32>}, {transform_indices = @transform_11, window_bounds = array<i64: 1, 32, 32>}, {transform_indices = @transform_12, window_bounds = array<i64: 1, 1, 32>}, {transform_indices = @transform_13, window_bounds = array<i64: 1, 32, 64>}, {transform_indices = @transform_14, window_bounds = array<i64: 1, 1, 64>}, {transform_indices = @transform_15, window_bounds = array<i64: 1, 32, 32>}, {transform_indices = @transform_16, window_bounds = array<i64: 1, 1, 32>}, {transform_indices = @transform_17, window_bounds = array<i64: 1, 1, 32>}, {transform_indices = @transform_18, window_bounds = array<i64: 1, 1, 32>}, {transform_indices = @transform_19, window_bounds = array<i64: 1, 32, 64>}, {transform_indices = @transform_20, window_bounds = array<i64: 1, 1, 64>}, {transform_indices = @transform_21, window_bounds = array<i64: 1, 64, 32>}, {transform_indices = @transform_22, window_bounds = array<i64: 1, 1, 32>}, {transform_indices = @transform_23, window_bounds = array<i64: 8, 32>}]} {
    %c0_i32 = arith.constant 0 : i32
    %0 = arith.cmpi eq, %arg1, %c0_i32 : i32
    %1 = arith.extui %0 : i1 to i32
    %c0_i32_0 = arith.constant 0 : i32
    %2 = arith.cmpi ne, %1, %c0_i32_0 : i32
    scf.if %2 {
      %c0_133 = arith.constant 0 : index
      %c0_134 = arith.constant 0 : index
      %299 = vector.load %arg2[%c0_133, %c0_134] : memref<8x32xf32, #tpu.memory_space<vmem>>, vector<8x32xf32>
      %c0_135 = arith.constant 0 : index
      %c0_136 = arith.constant 0 : index
      %300 = vector.load %arg26[%c0_135, %c0_136] : memref<8x32xf32, #tpu.memory_space<vmem>>, vector<8x32xf32>
      tpu.vector_store %arg26[%c0_135, %c0_136], %299 {strides = array<i32>} : memref<8x32xf32, #tpu.memory_space<vmem>>, vector<8x32xf32>,
    } else {
    }
    %c0 = arith.constant 0 : index
    %c0_1 = arith.constant 0 : index
    %3 = vector.load %arg26[%c0, %c0_1] : memref<8x32xf32, #tpu.memory_space<vmem>>, vector<8x32xf32>
    %c0_2 = arith.constant 0 : index
    %c0_3 = arith.constant 0 : index
    %4 = vector.load %arg3[%c0_2, %c0_3] : memref<8x32xf32, #tpu.memory_space<vmem>>, vector<8x32xf32>
    %c0_4 = arith.constant 0 : index
    %c0_5 = arith.constant 0 : index
    %c0_6 = arith.constant 0 : index
    %5 = vector.load %arg4[%c0_4, %c0_5, %c0_6] : memref<1x1x8xf32, #tpu.memory_space<vmem>>, vector<1x1x8xf32>
    %6 = vector.shape_cast %5 : vector<1x1x8xf32> to vector<1x8xf32>
    %c0_7 = arith.constant 0 : index
    %c0_8 = arith.constant 0 : index
    %c0_9 = arith.constant 0 : index
    %7 = vector.load %arg5[%c0_7, %c0_8, %c0_9] : memref<1x1x32xf32, #tpu.memory_space<vmem>>, vector<1x1x32xf32>
    %8 = vector.shape_cast %7 : vector<1x1x32xf32> to vector<1x32xf32>
    %c0_10 = arith.constant 0 : index
    %c0_11 = arith.constant 0 : index
    %c0_12 = arith.constant 0 : index
    %9 = vector.load %arg6[%c0_10, %c0_11, %c0_12] : memref<1x1x32xf32, #tpu.memory_space<vmem>>, vector<1x1x32xf32>
    %10 = vector.shape_cast %9 : vector<1x1x32xf32> to vector<1x32xf32>
    %cst = arith.constant dense<0.000000e+00> : vector<8xf32>
    %11 = vector.multi_reduction <add>, %3, %cst [1] : vector<8x32xf32> to vector<8xf32>
    %12 = vector.shape_cast %11 : vector<8xf32> to vector<8x1xf32>
    %cst_13 = arith.constant 3.200000e+01 : f32
    %13 = vector.broadcast %cst_13 : f32 to vector<8x1xf32>
    %14 = arith.divf %12, %13 : vector<8x1xf32>
    %15 = vector.broadcast %14 : vector<8x1xf32> to vector<8x32xf32>
    %16 = arith.subf %3, %15 : vector<8x32xf32>
    %17 = arith.mulf %16, %16 : vector<8x32xf32>
    %cst_14 = arith.constant dense<0.000000e+00> : vector<8xf32>
    %18 = vector.multi_reduction <add>, %17, %cst_14 [1] : vector<8x32xf32> to vector<8xf32>
    %19 = vector.shape_cast %18 : vector<8xf32> to vector<8x1xf32>
    %cst_15 = arith.constant 3.200000e+01 : f32
    %20 = vector.broadcast %cst_15 : f32 to vector<8x1xf32>
    %21 = arith.divf %19, %20 : vector<8x1xf32>
    %cst_16 = arith.constant 9.99999974E-6 : f32
    %22 = vector.broadcast %cst_16 : f32 to vector<8x1xf32>
    %23 = arith.addf %21, %22 : vector<8x1xf32>
    %24 = math.rsqrt %23 : vector<8x1xf32>
    %25 = vector.broadcast %24 : vector<8x1xf32> to vector<8x32xf32>
    %26 = arith.mulf %16, %25 : vector<8x32xf32>
    %27 = vector.broadcast %8 : vector<1x32xf32> to vector<8x32xf32>
    %28 = arith.mulf %26, %27 : vector<8x32xf32>
    %29 = vector.broadcast %10 : vector<1x32xf32> to vector<8x32xf32>
    %30 = arith.addf %28, %29 : vector<8x32xf32>
    %c0_17 = arith.constant 0 : index
    %c0_18 = arith.constant 0 : index
    %c0_19 = arith.constant 0 : index
    %31 = vector.load %arg7[%c0_17, %c0_18, %c0_19] : memref<1x32x96xf32, #tpu.memory_space<vmem>>, vector<1x32x96xf32>
    %32 = vector.shape_cast %31 : vector<1x32x96xf32> to vector<32x96xf32>
    %cst_20 = arith.constant dense<0.000000e+00> : vector<8x96xf32>
    %33 = tpu.matmul %30, %32, %cst_20 {dimension_numbers = #tpu.dot_dimension_numbers<[1], [0], [0], [1], [0, 0, 1, 1], [], []>} : vector<8x32xf32>, vector<32x96xf32>, vector<8x96xf32> -> vector<8x96xf32>
    %c0_21 = arith.constant 0 : index
    %c0_22 = arith.constant 0 : index
    %c0_23 = arith.constant 0 : index
    %34 = vector.load %arg8[%c0_21, %c0_22, %c0_23] : memref<1x1x96xf32, #tpu.memory_space<vmem>>, vector<1x1x96xf32>
    %35 = vector.shape_cast %34 : vector<1x1x96xf32> to vector<1x96xf32>
    %36 = vector.broadcast %35 : vector<1x96xf32> to vector<8x96xf32>
    %37 = arith.addf %33, %36 : vector<8x96xf32>
    %38 = vector.extract_strided_slice %37 {offsets = [0, 0], sizes = [8, 32], strides = [1, 1]} : vector<8x96xf32> to vector<8x32xf32>
    %39 = vector.extract_strided_slice %37 {offsets = [0, 32], sizes = [8, 32], strides = [1, 1]} : vector<8x96xf32> to vector<8x32xf32>
    %40 = vector.extract_strided_slice %37 {offsets = [0, 64], sizes = [8, 32], strides = [1, 1]} : vector<8x96xf32> to vector<8x32xf32>
    %41 = vector.extract_strided_slice %38 {offsets = [0, 0], sizes = [8, 8], strides = [1, 1]} : vector<8x32xf32> to vector<8x8xf32>
    %42 = vector.extract_strided_slice %39 {offsets = [0, 0], sizes = [8, 8], strides = [1, 1]} : vector<8x32xf32> to vector<8x8xf32>
    %cst_24 = arith.constant dense<0.000000e+00> : vector<8x8xf32>
    %43 = tpu.matmul %41, %42, %cst_24 {dimension_numbers = #tpu.dot_dimension_numbers<[1], [1], [0], [0], [0, 0, 1, 0], [], []>} : vector<8x8xf32>, vector<8x8xf32>, vector<8x8xf32> -> vector<8x8xf32>
    %cst_25 = arith.constant 0.353553385 : f32
    %44 = vector.broadcast %cst_25 : f32 to vector<8x8xf32>
    %45 = arith.mulf %43, %44 : vector<8x8xf32>
    %46 = vector.broadcast %6 : vector<1x8xf32> to vector<8x8xf32>
    %47 = arith.addf %45, %46 : vector<8x8xf32>
    %cst_26 = arith.constant dense<0xFF800000> : vector<8xf32>
    %48 = vector.multi_reduction <maximumf>, %47, %cst_26 [1] : vector<8x8xf32> to vector<8xf32>
    %49 = vector.shape_cast %48 : vector<8xf32> to vector<8x1xf32>
    %50 = vector.broadcast %49 : vector<8x1xf32> to vector<8x8xf32>
    %51 = arith.subf %47, %50 : vector<8x8xf32>
    %52 = math.exp %51 : vector<8x8xf32>
    %cst_27 = arith.constant dense<0.000000e+00> : vector<8xf32>
    %53 = vector.multi_reduction <add>, %52, %cst_27 [1] : vector<8x8xf32> to vector<8xf32>
    %54 = vector.shape_cast %53 : vector<8xf32> to vector<8x1xf32>
    %55 = vector.extract_strided_slice %40 {offsets = [0, 0], sizes = [8, 8], strides = [1, 1]} : vector<8x32xf32> to vector<8x8xf32>
    %cst_28 = arith.constant dense<0.000000e+00> : vector<8x8xf32>
    %56 = tpu.matmul %52, %55, %cst_28 {dimension_numbers = #tpu.dot_dimension_numbers<[1], [0], [0], [1], [0, 0, 1, 1], [], []>} : vector<8x8xf32>, vector<8x8xf32>, vector<8x8xf32> -> vector<8x8xf32>
    %57 = tpu.reciprocal %54 : vector<8x1xf32> -> vector<8x1xf32>
    %58 = vector.broadcast %57 : vector<8x1xf32> to vector<8x8xf32>
    %59 = arith.mulf %56, %58 : vector<8x8xf32>
    %60 = vector.extract_strided_slice %38 {offsets = [0, 8], sizes = [8, 8], strides = [1, 1]} : vector<8x32xf32> to vector<8x8xf32>
    %61 = vector.extract_strided_slice %39 {offsets = [0, 8], sizes = [8, 8], strides = [1, 1]} : vector<8x32xf32> to vector<8x8xf32>
    %cst_29 = arith.constant dense<0.000000e+00> : vector<8x8xf32>
    %62 = tpu.matmul %60, %61, %cst_29 {dimension_numbers = #tpu.dot_dimension_numbers<[1], [1], [0], [0], [0, 0, 1, 0], [], []>} : vector<8x8xf32>, vector<8x8xf32>, vector<8x8xf32> -> vector<8x8xf32>
    %cst_30 = arith.constant 0.353553385 : f32
    %63 = vector.broadcast %cst_30 : f32 to vector<8x8xf32>
    %64 = arith.mulf %62, %63 : vector<8x8xf32>
    %65 = vector.broadcast %6 : vector<1x8xf32> to vector<8x8xf32>
    %66 = arith.addf %64, %65 : vector<8x8xf32>
    %cst_31 = arith.constant dense<0xFF800000> : vector<8xf32>
    %67 = vector.multi_reduction <maximumf>, %66, %cst_31 [1] : vector<8x8xf32> to vector<8xf32>
    %68 = vector.shape_cast %67 : vector<8xf32> to vector<8x1xf32>
    %69 = vector.broadcast %68 : vector<8x1xf32> to vector<8x8xf32>
    %70 = arith.subf %66, %69 : vector<8x8xf32>
    %71 = math.exp %70 : vector<8x8xf32>
    %cst_32 = arith.constant dense<0.000000e+00> : vector<8xf32>
    %72 = vector.multi_reduction <add>, %71, %cst_32 [1] : vector<8x8xf32> to vector<8xf32>
    %73 = vector.shape_cast %72 : vector<8xf32> to vector<8x1xf32>
    %74 = vector.extract_strided_slice %40 {offsets = [0, 8], sizes = [8, 8], strides = [1, 1]} : vector<8x32xf32> to vector<8x8xf32>
    %cst_33 = arith.constant dense<0.000000e+00> : vector<8x8xf32>
    %75 = tpu.matmul %71, %74, %cst_33 {dimension_numbers = #tpu.dot_dimension_numbers<[1], [0], [0], [1], [0, 0, 1, 1], [], []>} : vector<8x8xf32>, vector<8x8xf32>, vector<8x8xf32> -> vector<8x8xf32>
    %76 = tpu.reciprocal %73 : vector<8x1xf32> -> vector<8x1xf32>
    %77 = vector.broadcast %76 : vector<8x1xf32> to vector<8x8xf32>
    %78 = arith.mulf %75, %77 : vector<8x8xf32>
    %79 = vector.extract_strided_slice %38 {offsets = [0, 16], sizes = [8, 8], strides = [1, 1]} : vector<8x32xf32> to vector<8x8xf32>
    %80 = vector.extract_strided_slice %39 {offsets = [0, 16], sizes = [8, 8], strides = [1, 1]} : vector<8x32xf32> to vector<8x8xf32>
    %cst_34 = arith.constant dense<0.000000e+00> : vector<8x8xf32>
    %81 = tpu.matmul %79, %80, %cst_34 {dimension_numbers = #tpu.dot_dimension_numbers<[1], [1], [0], [0], [0, 0, 1, 0], [], []>} : vector<8x8xf32>, vector<8x8xf32>, vector<8x8xf32> -> vector<8x8xf32>
    %cst_35 = arith.constant 0.353553385 : f32
    %82 = vector.broadcast %cst_35 : f32 to vector<8x8xf32>
    %83 = arith.mulf %81, %82 : vector<8x8xf32>
    %84 = vector.broadcast %6 : vector<1x8xf32> to vector<8x8xf32>
    %85 = arith.addf %83, %84 : vector<8x8xf32>
    %cst_36 = arith.constant dense<0xFF800000> : vector<8xf32>
    %86 = vector.multi_reduction <maximumf>, %85, %cst_36 [1] : vector<8x8xf32> to vector<8xf32>
    %87 = vector.shape_cast %86 : vector<8xf32> to vector<8x1xf32>
    %88 = vector.broadcast %87 : vector<8x1xf32> to vector<8x8xf32>
    %89 = arith.subf %85, %88 : vector<8x8xf32>
    %90 = math.exp %89 : vector<8x8xf32>
    %cst_37 = arith.constant dense<0.000000e+00> : vector<8xf32>
    %91 = vector.multi_reduction <add>, %90, %cst_37 [1] : vector<8x8xf32> to vector<8xf32>
    %92 = vector.shape_cast %91 : vector<8xf32> to vector<8x1xf32>
    %93 = vector.extract_strided_slice %40 {offsets = [0, 16], sizes = [8, 8], strides = [1, 1]} : vector<8x32xf32> to vector<8x8xf32>
    %cst_38 = arith.constant dense<0.000000e+00> : vector<8x8xf32>
    %94 = tpu.matmul %90, %93, %cst_38 {dimension_numbers = #tpu.dot_dimension_numbers<[1], [0], [0], [1], [0, 0, 1, 1], [], []>} : vector<8x8xf32>, vector<8x8xf32>, vector<8x8xf32> -> vector<8x8xf32>
    %95 = tpu.reciprocal %92 : vector<8x1xf32> -> vector<8x1xf32>
    %96 = vector.broadcast %95 : vector<8x1xf32> to vector<8x8xf32>
    %97 = arith.mulf %94, %96 : vector<8x8xf32>
    %98 = vector.extract_strided_slice %38 {offsets = [0, 24], sizes = [8, 8], strides = [1, 1]} : vector<8x32xf32> to vector<8x8xf32>
    %99 = vector.extract_strided_slice %39 {offsets = [0, 24], sizes = [8, 8], strides = [1, 1]} : vector<8x32xf32> to vector<8x8xf32>
    %cst_39 = arith.constant dense<0.000000e+00> : vector<8x8xf32>
    %100 = tpu.matmul %98, %99, %cst_39 {dimension_numbers = #tpu.dot_dimension_numbers<[1], [1], [0], [0], [0, 0, 1, 0], [], []>} : vector<8x8xf32>, vector<8x8xf32>, vector<8x8xf32> -> vector<8x8xf32>
    %cst_40 = arith.constant 0.353553385 : f32
    %101 = vector.broadcast %cst_40 : f32 to vector<8x8xf32>
    %102 = arith.mulf %100, %101 : vector<8x8xf32>
    %103 = vector.broadcast %6 : vector<1x8xf32> to vector<8x8xf32>
    %104 = arith.addf %102, %103 : vector<8x8xf32>
    %cst_41 = arith.constant dense<0xFF800000> : vector<8xf32>
    %105 = vector.multi_reduction <maximumf>, %104, %cst_41 [1] : vector<8x8xf32> to vector<8xf32>
    %106 = vector.shape_cast %105 : vector<8xf32> to vector<8x1xf32>
    %107 = vector.broadcast %106 : vector<8x1xf32> to vector<8x8xf32>
    %108 = arith.subf %104, %107 : vector<8x8xf32>
    %109 = math.exp %108 : vector<8x8xf32>
    %cst_42 = arith.constant dense<0.000000e+00> : vector<8xf32>
    %110 = vector.multi_reduction <add>, %109, %cst_42 [1] : vector<8x8xf32> to vector<8xf32>
    %111 = vector.shape_cast %110 : vector<8xf32> to vector<8x1xf32>
    %112 = vector.extract_strided_slice %40 {offsets = [0, 24], sizes = [8, 8], strides = [1, 1]} : vector<8x32xf32> to vector<8x8xf32>
    %cst_43 = arith.constant dense<0.000000e+00> : vector<8x8xf32>
    %113 = tpu.matmul %109, %112, %cst_43 {dimension_numbers = #tpu.dot_dimension_numbers<[1], [0], [0], [1], [0, 0, 1, 1], [], []>} : vector<8x8xf32>, vector<8x8xf32>, vector<8x8xf32> -> vector<8x8xf32>
    %114 = tpu.reciprocal %111 : vector<8x1xf32> -> vector<8x1xf32>
    %115 = vector.broadcast %114 : vector<8x1xf32> to vector<8x8xf32>
    %116 = arith.mulf %113, %115 : vector<8x8xf32>
    %117 = tpu.concatenate %59, %78, %97, %116 in 1 : vector<8x8xf32>, vector<8x8xf32>, vector<8x8xf32>, vector<8x8xf32> -> vector<8x32xf32>
    %c0_44 = arith.constant 0 : index
    %c0_45 = arith.constant 0 : index
    %c0_46 = arith.constant 0 : index
    %118 = vector.load %arg9[%c0_44, %c0_45, %c0_46] : memref<1x32x32xf32, #tpu.memory_space<vmem>>, vector<1x32x32xf32>
    %119 = vector.shape_cast %118 : vector<1x32x32xf32> to vector<32x32xf32>
    %cst_47 = arith.constant dense<0.000000e+00> : vector<8x32xf32>
    %120 = tpu.matmul %117, %119, %cst_47 {dimension_numbers = #tpu.dot_dimension_numbers<[1], [0], [0], [1], [0, 0, 1, 1], [], []>} : vector<8x32xf32>, vector<32x32xf32>, vector<8x32xf32> -> vector<8x32xf32>
    %121 = arith.addf %3, %120 : vector<8x32xf32>
    %c0_48 = arith.constant 0 : index
    %c0_49 = arith.constant 0 : index
    %c0_50 = arith.constant 0 : index
    %122 = vector.load %arg10[%c0_48, %c0_49, %c0_50] : memref<1x1x32xf32, #tpu.memory_space<vmem>>, vector<1x1x32xf32>
    %123 = vector.shape_cast %122 : vector<1x1x32xf32> to vector<1x32xf32>
    %124 = vector.broadcast %123 : vector<1x32xf32> to vector<8x32xf32>
    %125 = arith.addf %121, %124 : vector<8x32xf32>
    %c0_51 = arith.constant 0 : index
    %c0_52 = arith.constant 0 : index
    %c0_53 = arith.constant 0 : index
    %126 = vector.load %arg11[%c0_51, %c0_52, %c0_53] : memref<1x1x32xf32, #tpu.memory_space<vmem>>, vector<1x1x32xf32>
    %127 = vector.shape_cast %126 : vector<1x1x32xf32> to vector<1x32xf32>
    %c0_54 = arith.constant 0 : index
    %c0_55 = arith.constant 0 : index
    %c0_56 = arith.constant 0 : index
    %128 = vector.load %arg12[%c0_54, %c0_55, %c0_56] : memref<1x1x32xf32, #tpu.memory_space<vmem>>, vector<1x1x32xf32>
    %129 = vector.shape_cast %128 : vector<1x1x32xf32> to vector<1x32xf32>
    %cst_57 = arith.constant dense<0.000000e+00> : vector<8xf32>
    %130 = vector.multi_reduction <add>, %125, %cst_57 [1] : vector<8x32xf32> to vector<8xf32>
    %131 = vector.shape_cast %130 : vector<8xf32> to vector<8x1xf32>
    %cst_58 = arith.constant 3.200000e+01 : f32
    %132 = vector.broadcast %cst_58 : f32 to vector<8x1xf32>
    %133 = arith.divf %131, %132 : vector<8x1xf32>
    %134 = vector.broadcast %133 : vector<8x1xf32> to vector<8x32xf32>
    %135 = arith.subf %125, %134 : vector<8x32xf32>
    %136 = arith.mulf %135, %135 : vector<8x32xf32>
    %cst_59 = arith.constant dense<0.000000e+00> : vector<8xf32>
    %137 = vector.multi_reduction <add>, %136, %cst_59 [1] : vector<8x32xf32> to vector<8xf32>
    %138 = vector.shape_cast %137 : vector<8xf32> to vector<8x1xf32>
    %cst_60 = arith.constant 3.200000e+01 : f32
    %139 = vector.broadcast %cst_60 : f32 to vector<8x1xf32>
    %140 = arith.divf %138, %139 : vector<8x1xf32>
    %cst_61 = arith.constant 9.99999974E-6 : f32
    %141 = vector.broadcast %cst_61 : f32 to vector<8x1xf32>
    %142 = arith.addf %140, %141 : vector<8x1xf32>
    %143 = math.rsqrt %142 : vector<8x1xf32>
    %144 = vector.broadcast %143 : vector<8x1xf32> to vector<8x32xf32>
    %145 = arith.mulf %135, %144 : vector<8x32xf32>
    %146 = vector.broadcast %127 : vector<1x32xf32> to vector<8x32xf32>
    %147 = arith.mulf %145, %146 : vector<8x32xf32>
    %148 = vector.broadcast %129 : vector<1x32xf32> to vector<8x32xf32>
    %149 = arith.addf %147, %148 : vector<8x32xf32>
    %c0_62 = arith.constant 0 : index
    %c0_63 = arith.constant 0 : index
    %c0_64 = arith.constant 0 : index
    %150 = vector.load %arg13[%c0_62, %c0_63, %c0_64] : memref<1x32x32xf32, #tpu.memory_space<vmem>>, vector<1x32x32xf32>
    %151 = vector.shape_cast %150 : vector<1x32x32xf32> to vector<32x32xf32>
    %cst_65 = arith.constant dense<0.000000e+00> : vector<8x32xf32>
    %152 = tpu.matmul %149, %151, %cst_65 {dimension_numbers = #tpu.dot_dimension_numbers<[1], [0], [0], [1], [0, 0, 1, 1], [], []>} : vector<8x32xf32>, vector<32x32xf32>, vector<8x32xf32> -> vector<8x32xf32>
    %c0_66 = arith.constant 0 : index
    %c0_67 = arith.constant 0 : index
    %c0_68 = arith.constant 0 : index
    %153 = vector.load %arg14[%c0_66, %c0_67, %c0_68] : memref<1x1x32xf32, #tpu.memory_space<vmem>>, vector<1x1x32xf32>
    %154 = vector.shape_cast %153 : vector<1x1x32xf32> to vector<1x32xf32>
    %155 = vector.broadcast %154 : vector<1x32xf32> to vector<8x32xf32>
    %156 = arith.addf %152, %155 : vector<8x32xf32>
    %c0_69 = arith.constant 0 : index
    %c0_70 = arith.constant 0 : index
    %c0_71 = arith.constant 0 : index
    %157 = vector.load %arg15[%c0_69, %c0_70, %c0_71] : memref<1x32x64xf32, #tpu.memory_space<vmem>>, vector<1x32x64xf32>
    %158 = vector.shape_cast %157 : vector<1x32x64xf32> to vector<32x64xf32>
    %cst_72 = arith.constant dense<0.000000e+00> : vector<8x64xf32>
    %159 = tpu.matmul %4, %158, %cst_72 {dimension_numbers = #tpu.dot_dimension_numbers<[1], [0], [0], [1], [0, 0, 1, 1], [], []>} : vector<8x32xf32>, vector<32x64xf32>, vector<8x64xf32> -> vector<8x64xf32>
    %c0_73 = arith.constant 0 : index
    %c0_74 = arith.constant 0 : index
    %c0_75 = arith.constant 0 : index
    %160 = vector.load %arg16[%c0_73, %c0_74, %c0_75] : memref<1x1x64xf32, #tpu.memory_space<vmem>>, vector<1x1x64xf32>
    %161 = vector.shape_cast %160 : vector<1x1x64xf32> to vector<1x64xf32>
    %162 = vector.broadcast %161 : vector<1x64xf32> to vector<8x64xf32>
    %163 = arith.addf %159, %162 : vector<8x64xf32>
    %164 = vector.extract_strided_slice %163 {offsets = [0, 0], sizes = [8, 32], strides = [1, 1]} : vector<8x64xf32> to vector<8x32xf32>
    %165 = vector.extract_strided_slice %163 {offsets = [0, 32], sizes = [8, 32], strides = [1, 1]} : vector<8x64xf32> to vector<8x32xf32>
    %166 = vector.extract_strided_slice %156 {offsets = [0, 0], sizes = [8, 8], strides = [1, 1]} : vector<8x32xf32> to vector<8x8xf32>
    %167 = vector.extract_strided_slice %164 {offsets = [0, 0], sizes = [8, 8], strides = [1, 1]} : vector<8x32xf32> to vector<8x8xf32>
    %cst_76 = arith.constant dense<0.000000e+00> : vector<8x8xf32>
    %168 = tpu.matmul %166, %167, %cst_76 {dimension_numbers = #tpu.dot_dimension_numbers<[1], [1], [0], [0], [0, 0, 1, 0], [], []>} : vector<8x8xf32>, vector<8x8xf32>, vector<8x8xf32> -> vector<8x8xf32>
    %cst_77 = arith.constant 0.353553385 : f32
    %169 = vector.broadcast %cst_77 : f32 to vector<8x8xf32>
    %170 = arith.mulf %168, %169 : vector<8x8xf32>
    %171 = vector.broadcast %6 : vector<1x8xf32> to vector<8x8xf32>
    %172 = arith.addf %170, %171 : vector<8x8xf32>
    %cst_78 = arith.constant dense<0xFF800000> : vector<8xf32>
    %173 = vector.multi_reduction <maximumf>, %172, %cst_78 [1] : vector<8x8xf32> to vector<8xf32>
    %174 = vector.shape_cast %173 : vector<8xf32> to vector<8x1xf32>
    %175 = vector.broadcast %174 : vector<8x1xf32> to vector<8x8xf32>
    %176 = arith.subf %172, %175 : vector<8x8xf32>
    %177 = math.exp %176 : vector<8x8xf32>
    %cst_79 = arith.constant dense<0.000000e+00> : vector<8xf32>
    %178 = vector.multi_reduction <add>, %177, %cst_79 [1] : vector<8x8xf32> to vector<8xf32>
    %179 = vector.shape_cast %178 : vector<8xf32> to vector<8x1xf32>
    %180 = vector.extract_strided_slice %165 {offsets = [0, 0], sizes = [8, 8], strides = [1, 1]} : vector<8x32xf32> to vector<8x8xf32>
    %cst_80 = arith.constant dense<0.000000e+00> : vector<8x8xf32>
    %181 = tpu.matmul %177, %180, %cst_80 {dimension_numbers = #tpu.dot_dimension_numbers<[1], [0], [0], [1], [0, 0, 1, 1], [], []>} : vector<8x8xf32>, vector<8x8xf32>, vector<8x8xf32> -> vector<8x8xf32>
    %182 = tpu.reciprocal %179 : vector<8x1xf32> -> vector<8x1xf32>
    %183 = vector.broadcast %182 : vector<8x1xf32> to vector<8x8xf32>
    %184 = arith.mulf %181, %183 : vector<8x8xf32>
    %185 = vector.extract_strided_slice %156 {offsets = [0, 8], sizes = [8, 8], strides = [1, 1]} : vector<8x32xf32> to vector<8x8xf32>
    %186 = vector.extract_strided_slice %164 {offsets = [0, 8], sizes = [8, 8], strides = [1, 1]} : vector<8x32xf32> to vector<8x8xf32>
    %cst_81 = arith.constant dense<0.000000e+00> : vector<8x8xf32>
    %187 = tpu.matmul %185, %186, %cst_81 {dimension_numbers = #tpu.dot_dimension_numbers<[1], [1], [0], [0], [0, 0, 1, 0], [], []>} : vector<8x8xf32>, vector<8x8xf32>, vector<8x8xf32> -> vector<8x8xf32>
    %cst_82 = arith.constant 0.353553385 : f32
    %188 = vector.broadcast %cst_82 : f32 to vector<8x8xf32>
    %189 = arith.mulf %187, %188 : vector<8x8xf32>
    %190 = vector.broadcast %6 : vector<1x8xf32> to vector<8x8xf32>
    %191 = arith.addf %189, %190 : vector<8x8xf32>
    %cst_83 = arith.constant dense<0xFF800000> : vector<8xf32>
    %192 = vector.multi_reduction <maximumf>, %191, %cst_83 [1] : vector<8x8xf32> to vector<8xf32>
    %193 = vector.shape_cast %192 : vector<8xf32> to vector<8x1xf32>
    %194 = vector.broadcast %193 : vector<8x1xf32> to vector<8x8xf32>
    %195 = arith.subf %191, %194 : vector<8x8xf32>
    %196 = math.exp %195 : vector<8x8xf32>
    %cst_84 = arith.constant dense<0.000000e+00> : vector<8xf32>
    %197 = vector.multi_reduction <add>, %196, %cst_84 [1] : vector<8x8xf32> to vector<8xf32>
    %198 = vector.shape_cast %197 : vector<8xf32> to vector<8x1xf32>
    %199 = vector.extract_strided_slice %165 {offsets = [0, 8], sizes = [8, 8], strides = [1, 1]} : vector<8x32xf32> to vector<8x8xf32>
    %cst_85 = arith.constant dense<0.000000e+00> : vector<8x8xf32>
    %200 = tpu.matmul %196, %199, %cst_85 {dimension_numbers = #tpu.dot_dimension_numbers<[1], [0], [0], [1], [0, 0, 1, 1], [], []>} : vector<8x8xf32>, vector<8x8xf32>, vector<8x8xf32> -> vector<8x8xf32>
    %201 = tpu.reciprocal %198 : vector<8x1xf32> -> vector<8x1xf32>
    %202 = vector.broadcast %201 : vector<8x1xf32> to vector<8x8xf32>
    %203 = arith.mulf %200, %202 : vector<8x8xf32>
    %204 = vector.extract_strided_slice %156 {offsets = [0, 16], sizes = [8, 8], strides = [1, 1]} : vector<8x32xf32> to vector<8x8xf32>
    %205 = vector.extract_strided_slice %164 {offsets = [0, 16], sizes = [8, 8], strides = [1, 1]} : vector<8x32xf32> to vector<8x8xf32>
    %cst_86 = arith.constant dense<0.000000e+00> : vector<8x8xf32>
    %206 = tpu.matmul %204, %205, %cst_86 {dimension_numbers = #tpu.dot_dimension_numbers<[1], [1], [0], [0], [0, 0, 1, 0], [], []>} : vector<8x8xf32>, vector<8x8xf32>, vector<8x8xf32> -> vector<8x8xf32>
    %cst_87 = arith.constant 0.353553385 : f32
    %207 = vector.broadcast %cst_87 : f32 to vector<8x8xf32>
    %208 = arith.mulf %206, %207 : vector<8x8xf32>
    %209 = vector.broadcast %6 : vector<1x8xf32> to vector<8x8xf32>
    %210 = arith.addf %208, %209 : vector<8x8xf32>
    %cst_88 = arith.constant dense<0xFF800000> : vector<8xf32>
    %211 = vector.multi_reduction <maximumf>, %210, %cst_88 [1] : vector<8x8xf32> to vector<8xf32>
    %212 = vector.shape_cast %211 : vector<8xf32> to vector<8x1xf32>
    %213 = vector.broadcast %212 : vector<8x1xf32> to vector<8x8xf32>
    %214 = arith.subf %210, %213 : vector<8x8xf32>
    %215 = math.exp %214 : vector<8x8xf32>
    %cst_89 = arith.constant dense<0.000000e+00> : vector<8xf32>
    %216 = vector.multi_reduction <add>, %215, %cst_89 [1] : vector<8x8xf32> to vector<8xf32>
    %217 = vector.shape_cast %216 : vector<8xf32> to vector<8x1xf32>
    %218 = vector.extract_strided_slice %165 {offsets = [0, 16], sizes = [8, 8], strides = [1, 1]} : vector<8x32xf32> to vector<8x8xf32>
    %cst_90 = arith.constant dense<0.000000e+00> : vector<8x8xf32>
    %219 = tpu.matmul %215, %218, %cst_90 {dimension_numbers = #tpu.dot_dimension_numbers<[1], [0], [0], [1], [0, 0, 1, 1], [], []>} : vector<8x8xf32>, vector<8x8xf32>, vector<8x8xf32> -> vector<8x8xf32>
    %220 = tpu.reciprocal %217 : vector<8x1xf32> -> vector<8x1xf32>
    %221 = vector.broadcast %220 : vector<8x1xf32> to vector<8x8xf32>
    %222 = arith.mulf %219, %221 : vector<8x8xf32>
    %223 = vector.extract_strided_slice %156 {offsets = [0, 24], sizes = [8, 8], strides = [1, 1]} : vector<8x32xf32> to vector<8x8xf32>
    %224 = vector.extract_strided_slice %164 {offsets = [0, 24], sizes = [8, 8], strides = [1, 1]} : vector<8x32xf32> to vector<8x8xf32>
    %cst_91 = arith.constant dense<0.000000e+00> : vector<8x8xf32>
    %225 = tpu.matmul %223, %224, %cst_91 {dimension_numbers = #tpu.dot_dimension_numbers<[1], [1], [0], [0], [0, 0, 1, 0], [], []>} : vector<8x8xf32>, vector<8x8xf32>, vector<8x8xf32> -> vector<8x8xf32>
    %cst_92 = arith.constant 0.353553385 : f32
    %226 = vector.broadcast %cst_92 : f32 to vector<8x8xf32>
    %227 = arith.mulf %225, %226 : vector<8x8xf32>
    %228 = vector.broadcast %6 : vector<1x8xf32> to vector<8x8xf32>
    %229 = arith.addf %227, %228 : vector<8x8xf32>
    %cst_93 = arith.constant dense<0xFF800000> : vector<8xf32>
    %230 = vector.multi_reduction <maximumf>, %229, %cst_93 [1] : vector<8x8xf32> to vector<8xf32>
    %231 = vector.shape_cast %230 : vector<8xf32> to vector<8x1xf32>
    %232 = vector.broadcast %231 : vector<8x1xf32> to vector<8x8xf32>
    %233 = arith.subf %229, %232 : vector<8x8xf32>
    %234 = math.exp %233 : vector<8x8xf32>
    %cst_94 = arith.constant dense<0.000000e+00> : vector<8xf32>
    %235 = vector.multi_reduction <add>, %234, %cst_94 [1] : vector<8x8xf32> to vector<8xf32>
    %236 = vector.shape_cast %235 : vector<8xf32> to vector<8x1xf32>
    %237 = vector.extract_strided_slice %165 {offsets = [0, 24], sizes = [8, 8], strides = [1, 1]} : vector<8x32xf32> to vector<8x8xf32>
    %cst_95 = arith.constant dense<0.000000e+00> : vector<8x8xf32>
    %238 = tpu.matmul %234, %237, %cst_95 {dimension_numbers = #tpu.dot_dimension_numbers<[1], [0], [0], [1], [0, 0, 1, 1], [], []>} : vector<8x8xf32>, vector<8x8xf32>, vector<8x8xf32> -> vector<8x8xf32>
    %239 = tpu.reciprocal %236 : vector<8x1xf32> -> vector<8x1xf32>
    %240 = vector.broadcast %239 : vector<8x1xf32> to vector<8x8xf32>
    %241 = arith.mulf %238, %240 : vector<8x8xf32>
    %242 = tpu.concatenate %184, %203, %222, %241 in 1 : vector<8x8xf32>, vector<8x8xf32>, vector<8x8xf32>, vector<8x8xf32> -> vector<8x32xf32>
    %c0_96 = arith.constant 0 : index
    %c0_97 = arith.constant 0 : index
    %c0_98 = arith.constant 0 : index
    %243 = vector.load %arg17[%c0_96, %c0_97, %c0_98] : memref<1x32x32xf32, #tpu.memory_space<vmem>>, vector<1x32x32xf32>
    %244 = vector.shape_cast %243 : vector<1x32x32xf32> to vector<32x32xf32>
    %cst_99 = arith.constant dense<0.000000e+00> : vector<8x32xf32>
    %245 = tpu.matmul %242, %244, %cst_99 {dimension_numbers = #tpu.dot_dimension_numbers<[1], [0], [0], [1], [0, 0, 1, 1], [], []>} : vector<8x32xf32>, vector<32x32xf32>, vector<8x32xf32> -> vector<8x32xf32>
    %246 = arith.addf %125, %245 : vector<8x32xf32>
    %c0_100 = arith.constant 0 : index
    %c0_101 = arith.constant 0 : index
    %c0_102 = arith.constant 0 : index
    %247 = vector.load %arg18[%c0_100, %c0_101, %c0_102] : memref<1x1x32xf32, #tpu.memory_space<vmem>>, vector<1x1x32xf32>
    %248 = vector.shape_cast %247 : vector<1x1x32xf32> to vector<1x32xf32>
    %249 = vector.broadcast %248 : vector<1x32xf32> to vector<8x32xf32>
    %250 = arith.addf %246, %249 : vector<8x32xf32>
    %c0_103 = arith.constant 0 : index
    %c0_104 = arith.constant 0 : index
    %c0_105 = arith.constant 0 : index
    %251 = vector.load %arg19[%c0_103, %c0_104, %c0_105] : memref<1x1x32xf32, #tpu.memory_space<vmem>>, vector<1x1x32xf32>
    %252 = vector.shape_cast %251 : vector<1x1x32xf32> to vector<1x32xf32>
    %c0_106 = arith.constant 0 : index
    %c0_107 = arith.constant 0 : index
    %c0_108 = arith.constant 0 : index
    %253 = vector.load %arg20[%c0_106, %c0_107, %c0_108] : memref<1x1x32xf32, #tpu.memory_space<vmem>>, vector<1x1x32xf32>
    %254 = vector.shape_cast %253 : vector<1x1x32xf32> to vector<1x32xf32>
    %cst_109 = arith.constant dense<0.000000e+00> : vector<8xf32>
    %255 = vector.multi_reduction <add>, %250, %cst_109 [1] : vector<8x32xf32> to vector<8xf32>
    %256 = vector.shape_cast %255 : vector<8xf32> to vector<8x1xf32>
    %cst_110 = arith.constant 3.200000e+01 : f32
    %257 = vector.broadcast %cst_110 : f32 to vector<8x1xf32>
    %258 = arith.divf %256, %257 : vector<8x1xf32>
    %259 = vector.broadcast %258 : vector<8x1xf32> to vector<8x32xf32>
    %260 = arith.subf %250, %259 : vector<8x32xf32>
    %261 = arith.mulf %260, %260 : vector<8x32xf32>
    %cst_111 = arith.constant dense<0.000000e+00> : vector<8xf32>
    %262 = vector.multi_reduction <add>, %261, %cst_111 [1] : vector<8x32xf32> to vector<8xf32>
    %263 = vector.shape_cast %262 : vector<8xf32> to vector<8x1xf32>
    %cst_112 = arith.constant 3.200000e+01 : f32
    %264 = vector.broadcast %cst_112 : f32 to vector<8x1xf32>
    %265 = arith.divf %263, %264 : vector<8x1xf32>
    %cst_113 = arith.constant 9.99999974E-6 : f32
    %266 = vector.broadcast %cst_113 : f32 to vector<8x1xf32>
    %267 = arith.addf %265, %266 : vector<8x1xf32>
    %268 = math.rsqrt %267 : vector<8x1xf32>
    %269 = vector.broadcast %268 : vector<8x1xf32> to vector<8x32xf32>
    %270 = arith.mulf %260, %269 : vector<8x32xf32>
    %271 = vector.broadcast %252 : vector<1x32xf32> to vector<8x32xf32>
    %272 = arith.mulf %270, %271 : vector<8x32xf32>
    %273 = vector.broadcast %254 : vector<1x32xf32> to vector<8x32xf32>
    %274 = arith.addf %272, %273 : vector<8x32xf32>
    %c0_114 = arith.constant 0 : index
    %c0_115 = arith.constant 0 : index
    %c0_116 = arith.constant 0 : index
    %275 = vector.load %arg21[%c0_114, %c0_115, %c0_116] : memref<1x32x64xf32, #tpu.memory_space<vmem>>, vector<1x32x64xf32>
    %276 = vector.shape_cast %275 : vector<1x32x64xf32> to vector<32x64xf32>
    %cst_117 = arith.constant dense<0.000000e+00> : vector<8x64xf32>
    %277 = tpu.matmul %274, %276, %cst_117 {dimension_numbers = #tpu.dot_dimension_numbers<[1], [0], [0], [1], [0, 0, 1, 1], [], []>} : vector<8x32xf32>, vector<32x64xf32>, vector<8x64xf32> -> vector<8x64xf32>
    %c0_118 = arith.constant 0 : index
    %c0_119 = arith.constant 0 : index
    %c0_120 = arith.constant 0 : index
    %278 = vector.load %arg22[%c0_118, %c0_119, %c0_120] : memref<1x1x64xf32, #tpu.memory_space<vmem>>, vector<1x1x64xf32>
    %279 = vector.shape_cast %278 : vector<1x1x64xf32> to vector<1x64xf32>
    %280 = vector.broadcast %279 : vector<1x64xf32> to vector<8x64xf32>
    %281 = arith.addf %277, %280 : vector<8x64xf32>
    %cst_121 = arith.constant 0.000000e+00 : f32
    %282 = vector.broadcast %cst_121 : f32 to vector<8x64xf32>
    %283 = arith.cmpf oge, %281, %282 : vector<8x64xf32>
    %cst_122 = arith.constant 0.00999999977 : f32
    %284 = vector.broadcast %cst_122 : f32 to vector<8x64xf32>
    %285 = arith.mulf %284, %281 : vector<8x64xf32>
    %286 = arith.select %283, %281, %285 : vector<8x64xi1>, vector<8x64xf32>
    %c0_123 = arith.constant 0 : index
    %c0_124 = arith.constant 0 : index
    %c0_125 = arith.constant 0 : index
    %287 = vector.load %arg23[%c0_123, %c0_124, %c0_125] : memref<1x64x32xf32, #tpu.memory_space<vmem>>, vector<1x64x32xf32>
    %288 = vector.shape_cast %287 : vector<1x64x32xf32> to vector<64x32xf32>
    %cst_126 = arith.constant dense<0.000000e+00> : vector<8x32xf32>
    %289 = tpu.matmul %286, %288, %cst_126 {dimension_numbers = #tpu.dot_dimension_numbers<[1], [0], [0], [1], [0, 0, 1, 1], [], []>} : vector<8x64xf32>, vector<64x32xf32>, vector<8x32xf32> -> vector<8x32xf32>
    %290 = arith.addf %250, %289 : vector<8x32xf32>
    %c0_127 = arith.constant 0 : index
    %c0_128 = arith.constant 0 : index
    %c0_129 = arith.constant 0 : index
    %291 = vector.load %arg24[%c0_127, %c0_128, %c0_129] : memref<1x1x32xf32, #tpu.memory_space<vmem>>, vector<1x1x32xf32>
    %292 = vector.shape_cast %291 : vector<1x1x32xf32> to vector<1x32xf32>
    %293 = vector.broadcast %292 : vector<1x32xf32> to vector<8x32xf32>
    %294 = arith.addf %290, %293 : vector<8x32xf32>
    %c0_130 = arith.constant 0 : index
    %c0_131 = arith.constant 0 : index
    %295 = vector.load %arg26[%c0_130, %c0_131] : memref<8x32xf32, #tpu.memory_space<vmem>>, vector<8x32xf32>
    tpu.vector_store %arg26[%c0_130, %c0_131], %294 {strides = array<i32>} : memref<8x32xf32, #tpu.memory_space<vmem>>, vector<8x32xf32>,
    %c1_i32 = arith.constant 1 : i32
    %296 = arith.cmpi eq, %arg1, %c1_i32 : i32
    %297 = arith.extui %296 : i1 to i32
    %c0_i32_132 = arith.constant 0 : i32
    %298 = arith.cmpi ne, %297, %c0_i32_132 : i32
    scf.if %298 {
      %c0_133 = arith.constant 0 : index
      %c0_134 = arith.constant 0 : index
      %299 = vector.load %arg26[%c0_133, %c0_134] : memref<8x32xf32, #tpu.memory_space<vmem>>, vector<8x32xf32>
      %c0_135 = arith.constant 0 : index
      %c0_136 = arith.constant 0 : index
      %300 = vector.load %arg25[%c0_135, %c0_136] : memref<8x32xf32, #tpu.memory_space<vmem>>, vector<8x32xf32>
      tpu.vector_store %arg25[%c0_135, %c0_136], %299 {strides = array<i32>} : memref<8x32xf32, #tpu.memory_space<vmem>>, vector<8x32xf32>,
    } else {
    }
    return
  }
  func.func @transform_0(%arg0: i32, %arg1: i32) -> (i32, i32) {
    %c0_i32 = arith.constant 0 : i32
    %c0_i32_0 = arith.constant 0 : i32
    return %arg0, %c0_i32 : i32, i32
  }
  func.func @transform_1(%arg0: i32, %arg1: i32) -> (i32, i32) {
    %c0_i32 = arith.constant 0 : i32
    %c0_i32_0 = arith.constant 0 : i32
    return %arg0, %c0_i32 : i32, i32
  }
  func.func @transform_2(%arg0: i32, %arg1: i32) -> (i32, i32, i32) {
    %c0_i32 = arith.constant 0 : i32
    %c0_i32_0 = arith.constant 0 : i32
    %c0_i32_1 = arith.constant 0 : i32
    return %arg0, %c0_i32, %c0_i32_0 : i32, i32, i32
  }
  func.func @transform_3(%arg0: i32, %arg1: i32) -> (i32, i32, i32) {
    %c0_i32 = arith.constant 0 : i32
    %c0_i32_0 = arith.constant 0 : i32
    %c0_i32_1 = arith.constant 0 : i32
    return %arg1, %c0_i32, %c0_i32_0 : i32, i32, i32
  }
  func.func @transform_4(%arg0: i32, %arg1: i32) -> (i32, i32, i32) {
    %c0_i32 = arith.constant 0 : i32
    %c0_i32_0 = arith.constant 0 : i32
    %c0_i32_1 = arith.constant 0 : i32
    return %arg1, %c0_i32, %c0_i32_0 : i32, i32, i32
  }
  func.func @transform_5(%arg0: i32, %arg1: i32) -> (i32, i32, i32) {
    %c0_i32 = arith.constant 0 : i32
    %c0_i32_0 = arith.constant 0 : i32
    %c0_i32_1 = arith.constant 0 : i32
    return %arg1, %c0_i32, %c0_i32_0 : i32, i32, i32
  }
  func.func @transform_6(%arg0: i32, %arg1: i32) -> (i32, i32, i32) {
    %c0_i32 = arith.constant 0 : i32
    %c0_i32_0 = arith.constant 0 : i32
    %c0_i32_1 = arith.constant 0 : i32
    return %arg1, %c0_i32, %c0_i32_0 : i32, i32, i32
  }
  func.func @transform_7(%arg0: i32, %arg1: i32) -> (i32, i32, i32) {
    %c0_i32 = arith.constant 0 : i32
    %c0_i32_0 = arith.constant 0 : i32
    %c0_i32_1 = arith.constant 0 : i32
    return %arg1, %c0_i32, %c0_i32_0 : i32, i32, i32
  }
  func.func @transform_8(%arg0: i32, %arg1: i32) -> (i32, i32, i32) {
    %c0_i32 = arith.constant 0 : i32
    %c0_i32_0 = arith.constant 0 : i32
    %c0_i32_1 = arith.constant 0 : i32
    return %arg1, %c0_i32, %c0_i32_0 : i32, i32, i32
  }
  func.func @transform_9(%arg0: i32, %arg1: i32) -> (i32, i32, i32) {
    %c0_i32 = arith.constant 0 : i32
    %c0_i32_0 = arith.constant 0 : i32
    %c0_i32_1 = arith.constant 0 : i32
    return %arg1, %c0_i32, %c0_i32_0 : i32, i32, i32
  }
  func.func @transform_10(%arg0: i32, %arg1: i32) -> (i32, i32, i32) {
    %c0_i32 = arith.constant 0 : i32
    %c0_i32_0 = arith.constant 0 : i32
    %c0_i32_1 = arith.constant 0 : i32
    return %arg1, %c0_i32, %c0_i32_0 : i32, i32, i32
  }
  func.func @transform_11(%arg0: i32, %arg1: i32) -> (i32, i32, i32) {
    %c0_i32 = arith.constant 0 : i32
    %c0_i32_0 = arith.constant 0 : i32
    %c0_i32_1 = arith.constant 0 : i32
    return %arg1, %c0_i32, %c0_i32_0 : i32, i32, i32
  }
  func.func @transform_12(%arg0: i32, %arg1: i32) -> (i32, i32, i32) {
    %c0_i32 = arith.constant 0 : i32
    %c0_i32_0 = arith.constant 0 : i32
    %c0_i32_1 = arith.constant 0 : i32
    return %arg1, %c0_i32, %c0_i32_0 : i32, i32, i32
  }
  func.func @transform_13(%arg0: i32, %arg1: i32) -> (i32, i32, i32) {
    %c0_i32 = arith.constant 0 : i32
    %c0_i32_0 = arith.constant 0 : i32
    %c0_i32_1 = arith.constant 0 : i32
    return %arg1, %c0_i32, %c0_i32_0 : i32, i32, i32
  }
  func.func @transform_14(%arg0: i32, %arg1: i32) -> (i32, i32, i32) {
    %c0_i32 = arith.constant 0 : i32
    %c0_i32_0 = arith.constant 0 : i32
    %c0_i32_1 = arith.constant 0 : i32
    return %arg1, %c0_i32, %c0_i32_0 : i32, i32, i32
  }
  func.func @transform_15(%arg0: i32, %arg1: i32) -> (i32, i32, i32) {
    %c0_i32 = arith.constant 0 : i32
    %c0_i32_0 = arith.constant 0 : i32
    %c0_i32_1 = arith.constant 0 : i32
    return %arg1, %c0_i32, %c0_i32_0 : i32, i32, i32
  }
  func.func @transform_16(%arg0: i32, %arg1: i32) -> (i32, i32, i32) {
    %c0_i32 = arith.constant 0 : i32
    %c0_i32_0 = arith.constant 0 : i32
    %c0_i32_1 = arith.constant 0 : i32
    return %arg1, %c0_i32, %c0_i32_0 : i32, i32, i32
  }
  func.func @transform_17(%arg0: i32, %arg1: i32) -> (i32, i32, i32) {
    %c0_i32 = arith.constant 0 : i32
    %c0_i32_0 = arith.constant 0 : i32
    %c0_i32_1 = arith.constant 0 : i32
    return %arg1, %c0_i32, %c0_i32_0 : i32, i32, i32
  }
  func.func @transform_18(%arg0: i32, %arg1: i32) -> (i32, i32, i32) {
    %c0_i32 = arith.constant 0 : i32
    %c0_i32_0 = arith.constant 0 : i32
    %c0_i32_1 = arith.constant 0 : i32
    return %arg1, %c0_i32, %c0_i32_0 : i32, i32, i32
  }
  func.func @transform_19(%arg0: i32, %arg1: i32) -> (i32, i32, i32) {
    %c0_i32 = arith.constant 0 : i32
    %c0_i32_0 = arith.constant 0 : i32
    %c0_i32_1 = arith.constant 0 : i32
    return %arg1, %c0_i32, %c0_i32_0 : i32, i32, i32
  }
  func.func @transform_20(%arg0: i32, %arg1: i32) -> (i32, i32, i32) {
    %c0_i32 = arith.constant 0 : i32
    %c0_i32_0 = arith.constant 0 : i32
    %c0_i32_1 = arith.constant 0 : i32
    return %arg1, %c0_i32, %c0_i32_0 : i32, i32, i32
  }
  func.func @transform_21(%arg0: i32, %arg1: i32) -> (i32, i32, i32) {
    %c0_i32 = arith.constant 0 : i32
    %c0_i32_0 = arith.constant 0 : i32
    %c0_i32_1 = arith.constant 0 : i32
    return %arg1, %c0_i32, %c0_i32_0 : i32, i32, i32
  }
  func.func @transform_22(%arg0: i32, %arg1: i32) -> (i32, i32, i32) {
    %c0_i32 = arith.constant 0 : i32
    %c0_i32_0 = arith.constant 0 : i32
    %c0_i32_1 = arith.constant 0 : i32
    return %arg1, %c0_i32, %c0_i32_0 : i32, i32, i32
  }
  func.func @transform_23(%arg0: i32, %arg1: i32) -> (i32, i32) {
    %c0_i32 = arith.constant 0 : i32
    %c0_i32_0 = arith.constant 0 : i32
    return %arg0, %c0_i32 : i32, i32
  }
}

</mosaic_0001>

<llo_original>
// kernel: decoder_forward.3
$region0: #{decoder_forward.3}
  #allocation0 [shape = 'u32[]', space=smem, size = 0x4, offset = 0x4, fixed_abs, tag = 'smem constant byte address 0x4 - core index']
  #allocation1 [shape = 'u32[72,128]{1,0:T(1,128)}', space=vmem, size = 0x9000, scoped, tag = 'internal scratch']
  %s0 = inlined_call_operand.vmem [shape: f32[16,32], index: 0, kind: input, shape index: {}]
  %s1 = inlined_call_operand.vmem [shape: f32[16,32], index: 1, kind: input, shape index: {}]
  %s2 = inlined_call_operand.vmem [shape: f32[32,64], index: 2, kind: input, shape index: {}]
  %s3 = inlined_call_operand.vmem [shape: f32[1,64], index: 3, kind: input, shape index: {}]
  %s4 = inlined_call_operand.vmem [shape: f32[64,32], index: 4, kind: input, shape index: {}]
  %s5 = inlined_call_operand.vmem [shape: f32[1,32], index: 5, kind: input, shape index: {}]
  %s6 = inlined_call_operand.vmem [shape: f32[16,32], index: 6, kind: output, shape index: {}]
  %s7 = sld [smem:[#allocation0]]
  $region34: #{decoder_forward.3} parent=0
    _
  %s9 = ssub.s32 1, %s7
  %s10 = scalar_select 0, %s9, %s7
  // Predicated region
  $region2: #{decoder_forward.3} parent=0 // pred_check
    _
  $region3: #{decoder_forward.3} parent=0 // pred_check_branch
    %12 = sbr.rel (0) target = $region5
  $region4: #{decoder_forward.3} parent=0 // pred_region
    _
  $region5: #{decoder_forward.3} parent=0 // pred_fallthru
    _
  // Predicated region
  $region6: #{decoder_forward.3} parent=0 // pred_check
    _
  $region7: #{decoder_forward.3} parent=0 // pred_check_branch
    %14 = sbr.rel (0) target = $region9
  $region8: #{decoder_forward.3} parent=0 // pred_region
    _
  $region9: #{decoder_forward.3} parent=0 // pred_fallthru
    _
  // Predicated region
  $region10: #{decoder_forward.3} parent=0 // pred_check
    _
  $region11: #{decoder_forward.3} parent=0 // pred_check_branch
    %16 = sbr.rel (0) target = $region13
  $region12: #{decoder_forward.3} parent=0 // pred_region
    _
  $region13: #{decoder_forward.3} parent=0 // pred_fallthru
    _
  // Predicated region
  $region14: #{decoder_forward.3} parent=0 // pred_check
    _
  $region15: #{decoder_forward.3} parent=0 // pred_check_branch
    %18 = sbr.rel (0) target = $region17
  $region16: #{decoder_forward.3} parent=0 // pred_region
    _
  $region17: #{decoder_forward.3} parent=0 // pred_fallthru
    _
  // Predicated region
  $region18: #{decoder_forward.3} parent=0 // pred_check
    _
  $region19: #{decoder_forward.3} parent=0 // pred_check_branch
    %20 = sbr.rel (0) target = $region21
  $region20: #{decoder_forward.3} parent=0 // pred_region
    _
  $region21: #{decoder_forward.3} parent=0 // pred_fallthru
    _
  // Predicated region
  $region22: #{decoder_forward.3} parent=0 // pred_check
    _
  $region23: #{decoder_forward.3} parent=0 // pred_check_branch
    %22 = sbr.rel (0) target = $region25
  $region24: #{decoder_forward.3} parent=0 // pred_region
    _
  $region25: #{decoder_forward.3} parent=0 // pred_fallthru
    _
  %v23 = vld [vmem:[%s0] sm:$0xff]
  %v24 = vld [vmem:[%s0 + $0x8] sm:$0xff]
  %v25 = vld [vmem:[%s2] sm:$0xff]
  %v26 = vld [vmem:[%s2 + $0x8] sm:$0xff]
  %v27 = vld [vmem:[%s2 + $0x10] sm:$0xff]
  %v28 = vld [vmem:[%s2 + $0x18] sm:$0xff]
  %v29 = vld [vmem:[%s3] sm:$0x1]
  %v31 = vperm.slane %v29, 0
  %vm33 = vcmask 261120
  %v35 = vsel %vm33, %v23, 0
  %v38 = vsel %vm33, %v24, 0
  %40 = vmatpush.msra.mxu0 0.0
  %41 = vmatpush.msra.mxu0 0.0
  %42 = vmatpush.msra.mxu0 0.0
  %43 = vmatpush.msra.mxu0 0.0
  %44 = vmatpush.msra.mxu0 0.0
  %45 = vmatpush.msra.mxu0 0.0
  %46 = vmatpush.msra.mxu0 0.0
  %47 = vmatpush.msra.mxu0 0.0
  %48 = vmatpush.msra.mxu0 0.0
  %49 = vmatpush.msra.mxu0 0.0
  %50 = vmatpush.msra.mxu0 0.0
  %51 = vmatpush.msra.mxu0 0.0
  %52 = vmatpush.msra.mxu0 %v28
  %53 = vmatpush.msra.mxu0 %v27
  %54 = vmatpush.msra.mxu0 %v26
  %55 = vmatpush.msra.mxu0 %v25
  %56 = vmatmul.f32.gmra.mxu0 %v35
  %v57 = vpop.f32.mrf.mxu0
  %v58 = vadd.f32 %v31, %v57
  %59 = vmatmul.f32.gmra.mxu0 %v38
  %v60 = vpop.f32.mrf.mxu0
  %v61 = vadd.f32 %v31, %v60
  %62 = vdwg.mxu0
  %vm63 = vcmp.ge.f32.partialorder %v58, 0.0
  %vm64 = vcmp.ge.f32.partialorder %v61, 0.0
  %v65 = vmul.f32 %v58, 0.01
  %v66 = vmul.f32 %v61, 0.01
  %v67 = vsel %vm63, %v58, %v65
  %v68 = vsel %vm64, %v61, %v66
  %v69 = vld [vmem:[%s4] sm:$0xff]
  %v70 = vld [vmem:[%s4 + $0x8] sm:$0xff]
  %v71 = vld [vmem:[%s4 + $0x10] sm:$0xff]
  %v72 = vld [vmem:[%s4 + $0x18] sm:$0xff]
  %v73 = vld [vmem:[%s4 + $0x20] sm:$0xff]
  %v74 = vld [vmem:[%s4 + $0x28] sm:$0xff]
  %v75 = vld [vmem:[%s4 + $0x30] sm:$0xff]
  %v76 = vld [vmem:[%s4 + $0x38] sm:$0xff]
  %v77 = vld [vmem:[%s5] sm:$0x1]
  %v79 = vperm.slane %v77, 0
  %vm81 = vcmask 523264
  %v83 = vsel %vm81, %v67, 0
  %v86 = vsel %vm81, %v68, 0
  %88 = vmatpush.msra.mxu0 0.0
  %89 = vmatpush.msra.mxu0 0.0
  %90 = vmatpush.msra.mxu0 0.0
  %91 = vmatpush.msra.mxu0 0.0
  %92 = vmatpush.msra.mxu0 0.0
  %93 = vmatpush.msra.mxu0 0.0
  %94 = vmatpush.msra.mxu0 0.0
  %95 = vmatpush.msra.mxu0 0.0
  %96 = vmatpush.msra.mxu0 %v76
  %97 = vmatpush.msra.mxu0 %v75
  %98 = vmatpush.msra.mxu0 %v74
  %99 = vmatpush.msra.mxu0 %v73
  %100 = vmatpush.msra.mxu0 %v72
  %101 = vmatpush.msra.mxu0 %v71
  %102 = vmatpush.msra.mxu0 %v70
  %103 = vmatpush.msra.mxu0 %v69
  %104 = vmatmul.f32.gmra.mxu0 %v83
  %v105 = vpop.f32.mrf.mxu0
  %v106 = vadd.f32 %v79, %v105
  %107 = vmatmul.f32.gmra.mxu0 %v86
  %v108 = vpop.f32.mrf.mxu0
  %v109 = vadd.f32 %v79, %v108
  %110 = vdwg.mxu0
  %v111 = vld [vmem:[%s1] sm:$0xff]
  %v112 = vld [vmem:[%s1 + $0x8] sm:$0xff]
  %v113 = vadd.f32 %v106, %v111
  %v114 = vadd.f32 %v109, %v112
  %115 = vst.msk [vmem:[%s6] sm:$0xff] %vm33, %v113
  %116 = vst.msk [vmem:[%s6 + $0x8] sm:$0xff] %vm33, %v114
  // Predicated region
  $region26: #{decoder_forward.3} parent=0 // pred_check
    _
  $region27: #{decoder_forward.3} parent=0 // pred_check_branch
    %118 = sbr.rel (0) target = $region29
  $region28: #{decoder_forward.3} parent=0 // pred_region
    _
  $region29: #{decoder_forward.3} parent=0 // pred_fallthru
    _
  // Predicated region
  $region30: #{decoder_forward.3} parent=0 // pred_check
    _
  $region31: #{decoder_forward.3} parent=0 // pred_check_branch
    %120 = sbr.rel (0) target = $region33
  $region32: #{decoder_forward.3} parent=0 // pred_region
    _
  $region33: #{decoder_forward.3} parent=0 // pred_fallthru
    _

// kernel: decoder_forward.5
$region0: #{decoder_forward.5}
  #allocation0 [shape = 'u32[]', space=smem, size = 0x4, offset = 0x4, fixed_abs, tag = 'smem constant byte address 0x4 - core index']
  #allocation1 [shape = 'u32[72,128]{1,0:T(1,128)}', space=vmem, size = 0x9000, scoped, tag = 'internal scratch']
  %s0 = inlined_call_operand.vmem [shape: f32[16,32], index: 0, kind: input, shape index: {}]
  %s1 = inlined_call_operand.vmem [shape: f32[32,64], index: 1, kind: input, shape index: {}]
  %s2 = inlined_call_operand.vmem [shape: f32[1,64], index: 2, kind: input, shape index: {}]
  %s3 = inlined_call_operand.vmem [shape: f32[64,128], index: 3, kind: input, shape index: {}]
  %s4 = inlined_call_operand.vmem [shape: f32[1,128], index: 4, kind: input, shape index: {}]
  %s5 = inlined_call_operand.vmem [shape: f32[16,128], index: 5, kind: output, shape index: {}]
  %s6 = sld [smem:[#allocation0]]
  $region30: #{decoder_forward.5} parent=0
    _
  %s8 = ssub.s32 1, %s6
  %s9 = scalar_select 0, %s8, %s6
  // Predicated region
  $region2: #{decoder_forward.5} parent=0 // pred_check
    _
  $region3: #{decoder_forward.5} parent=0 // pred_check_branch
    %11 = sbr.rel (0) target = $region5
  $region4: #{decoder_forward.5} parent=0 // pred_region
    _
  $region5: #{decoder_forward.5} parent=0 // pred_fallthru
    _
  // Predicated region
  $region6: #{decoder_forward.5} parent=0 // pred_check
    _
  $region7: #{decoder_forward.5} parent=0 // pred_check_branch
    %13 = sbr.rel (0) target = $region9
  $region8: #{decoder_forward.5} parent=0 // pred_region
    _
  $region9: #{decoder_forward.5} parent=0 // pred_fallthru
    _
  // Predicated region
  $region10: #{decoder_forward.5} parent=0 // pred_check
    _
  $region11: #{decoder_forward.5} parent=0 // pred_check_branch
    %15 = sbr.rel (0) target = $region13
  $region12: #{decoder_forward.5} parent=0 // pred_region
    _
  $region13: #{decoder_forward.5} parent=0 // pred_fallthru
    _
  // Predicated region
  $region14: #{decoder_forward.5} parent=0 // pred_check
    _
  $region15: #{decoder_forward.5} parent=0 // pred_check_branch
    %17 = sbr.rel (0) target = $region17
  $region16: #{decoder_forward.5} parent=0 // pred_region
    _
  $region17: #{decoder_forward.5} parent=0 // pred_fallthru
    _
  // Predicated region
  $region18: #{decoder_forward.5} parent=0 // pred_check
    _
  $region19: #{decoder_forward.5} parent=0 // pred_check_branch
    %19 = sbr.rel (0) target = $region21
  $region20: #{decoder_forward.5} parent=0 // pred_region
    _
  $region21: #{decoder_forward.5} parent=0 // pred_fallthru
    _
  %v20 = vld [vmem:[%s0] sm:$0xff]
  %v21 = vld [vmem:[%s0 + $0x8] sm:$0xff]
  %v22 = vld [vmem:[%s1] sm:$0xff]
  %v23 = vld [vmem:[%s1 + $0x8] sm:$0xff]
  %v24 = vld [vmem:[%s1 + $0x10] sm:$0xff]
  %v25 = vld [vmem:[%s1 + $0x18] sm:$0xff]
  %v26 = vld [vmem:[%s2] sm:$0x1]
  %v28 = vperm.slane %v26, 0
  %vm30 = vcmask 261120
  %v32 = vsel %vm30, %v20, 0
  %v35 = vsel %vm30, %v21, 0
  %37 = vmatpush.msra.mxu0 0.0
  %38 = vmatpush.msra.mxu0 0.0
  %39 = vmatpush.msra.mxu0 0.0
  %40 = vmatpush.msra.mxu0 0.0
  %41 = vmatpush.msra.mxu0 0.0
  %42 = vmatpush.msra.mxu0 0.0
  %43 = vmatpush.msra.mxu0 0.0
  %44 = vmatpush.msra.mxu0 0.0
  %45 = vmatpush.msra.mxu0 0.0
  %46 = vmatpush.msra.mxu0 0.0
  %47 = vmatpush.msra.mxu0 0.0
  %48 = vmatpush.msra.mxu0 0.0
  %49 = vmatpush.msra.mxu0 %v25
  %50 = vmatpush.msra.mxu0 %v24
  %51 = vmatpush.msra.mxu0 %v23
  %52 = vmatpush.msra.mxu0 %v22
  %53 = vmatmul.f32.gmra.mxu0 %v32
  %v54 = vpop.f32.mrf.mxu0
  %v55 = vadd.f32 %v28, %v54
  %56 = vmatmul.f32.gmra.mxu0 %v35
  %v57 = vpop.f32.mrf.mxu0
  %v58 = vadd.f32 %v28, %v57
  %59 = vdwg.mxu0
  %vm60 = vcmp.ge.f32.partialorder %v55, 0.0
  %vm61 = vcmp.ge.f32.partialorder %v58, 0.0
  %v62 = vmul.f32 %v55, 0.01
  %v63 = vmul.f32 %v58, 0.01
  %v64 = vsel %vm60, %v55, %v62
  %v65 = vsel %vm61, %v58, %v63
  %v66 = vld [vmem:[%s3] sm:$0xff]
  %v67 = vld [vmem:[%s3 + $0x8] sm:$0xff]
  %v68 = vld [vmem:[%s3 + $0x10] sm:$0xff]
  %v69 = vld [vmem:[%s3 + $0x18] sm:$0xff]
  %v70 = vld [vmem:[%s3 + $0x20] sm:$0xff]
  %v71 = vld [vmem:[%s3 + $0x28] sm:$0xff]
  %v72 = vld [vmem:[%s3 + $0x30] sm:$0xff]
  %v73 = vld [vmem:[%s3 + $0x38] sm:$0xff]
  %v74 = vld [vmem:[%s4] sm:$0x1]
  %v76 = vperm.slane %v74, 0
  %vm78 = vcmask 523264
  %v80 = vsel %vm78, %v64, 0
  %v83 = vsel %vm78, %v65, 0
  %85 = vmatpush.msra.mxu0 0.0
  %86 = vmatpush.msra.mxu0 0.0
  %87 = vmatpush.msra.mxu0 0.0
  %88 = vmatpush.msra.mxu0 0.0
  %89 = vmatpush.msra.mxu0 0.0
  %90 = vmatpush.msra.mxu0 0.0
  %91 = vmatpush.msra.mxu0 0.0
  %92 = vmatpush.msra.mxu0 0.0
  %93 = vmatpush.msra.mxu0 %v73
  %94 = vmatpush.msra.mxu0 %v72
  %95 = vmatpush.msra.mxu0 %v71
  %96 = vmatpush.msra.mxu0 %v70
  %97 = vmatpush.msra.mxu0 %v69
  %98 = vmatpush.msra.mxu0 %v68
  %99 = vmatpush.msra.mxu0 %v67
  %100 = vmatpush.msra.mxu0 %v66
  %101 = vmatmul.f32.gmra.mxu0 %v80
  %v102 = vpop.f32.mrf.mxu0
  %v103 = vadd.f32 %v76, %v102
  %104 = vmatmul.f32.gmra.mxu0 %v83
  %v105 = vpop.f32.mrf.mxu0
  %v106 = vadd.f32 %v76, %v105
  %107 = vdwg.mxu0
  %108 = vst [vmem:[%s5] sm:$0xff] %v103
  %109 = vst [vmem:[%s5 + $0x8] sm:$0xff] %v106
  // Predicated region
  $region22: #{decoder_forward.5} parent=0 // pred_check
    _
  $region23: #{decoder_forward.5} parent=0 // pred_check_branch
    %111 = sbr.rel (0) target = $region25
  $region24: #{decoder_forward.5} parent=0 // pred_region
    _
  $region25: #{decoder_forward.5} parent=0 // pred_fallthru
    _
  // Predicated region
  $region26: #{decoder_forward.5} parent=0 // pred_check
    _
  $region27: #{decoder_forward.5} parent=0 // pred_check_branch
    %113 = sbr.rel (0) target = $region29
  $region28: #{decoder_forward.5} parent=0 // pred_region
    _
  $region29: #{decoder_forward.5} parent=0 // pred_fallthru
    _

// kernel: decoder_forward.4
$region0: #{decoder_forward.4}
  #allocation0 [shape = 'u32[]', space=smem, size = 0x4, offset = 0x4, fixed_abs, tag = 'smem constant byte address 0x4 - core index']
  #allocation1 [shape = 'u32[72,128]{1,0:T(1,128)}', space=vmem, size = 0x9000, scoped, tag = 'internal scratch']
  #allocation2 [shape = 'f32[8,32]{1,0:T(8,128)}', space=vmem, size = 0x1000, scoped, tag = 'scratch operand']
  %s0 = inlined_call_operand.vmem [shape: f32[16,32], index: 0, kind: input, shape index: {}]
  %s1 = inlined_call_operand.vmem [shape: f32[16,32], index: 1, kind: input, shape index: {}]
  %s2 = inlined_call_operand.vmem [shape: f32[2,1,8], index: 2, kind: input, shape index: {}]
  %s3 = inlined_call_operand.vmem [shape: f32[2,1,32], index: 3, kind: input, shape index: {}]
  %s4 = inlined_call_operand.vmem [shape: f32[2,1,32], index: 4, kind: input, shape index: {}]
  %s5 = inlined_call_operand.vmem [shape: f32[2,32,96], index: 5, kind: input, shape index: {}]
  %s6 = inlined_call_operand.vmem [shape: f32[2,1,96], index: 6, kind: input, shape index: {}]
  %s7 = inlined_call_operand.vmem [shape: f32[2,32,32], index: 7, kind: input, shape index: {}]
  %s8 = inlined_call_operand.vmem [shape: f32[2,1,32], index: 8, kind: input, shape index: {}]
  %s9 = inlined_call_operand.vmem [shape: f32[2,1,32], index: 9, kind: input, shape index: {}]
  %s10 = inlined_call_operand.vmem [shape: f32[2,1,32], index: 10, kind: input, shape index: {}]
  %s11 = inlined_call_operand.vmem [shape: f32[2,32,32], index: 11, kind: input, shape index: {}]
  %s12 = inlined_call_operand.vmem [shape: f32[2,1,32], index: 12, kind: input, shape index: {}]
  %s13 = inlined_call_operand.vmem [shape: f32[2,32,64], index: 13, kind: input, shape index: {}]
  %s14 = inlined_call_operand.vmem [shape: f32[2,1,64], index: 14, kind: input, shape index: {}]
  %s15 = inlined_call_operand.vmem [shape: f32[2,32,32], index: 15, kind: input, shape index: {}]
  %s16 = inlined_call_operand.vmem [shape: f32[2,1,32], index: 16, kind: input, shape index: {}]
  %s17 = inlined_call_operand.vmem [shape: f32[2,1,32], index: 17, kind: input, shape index: {}]
  %s18 = inlined_call_operand.vmem [shape: f32[2,1,32], index: 18, kind: input, shape index: {}]
  %s19 = inlined_call_operand.vmem [shape: f32[2,32,64], index: 19, kind: input, shape index: {}]
  %s20 = inlined_call_operand.vmem [shape: f32[2,1,64], index: 20, kind: input, shape index: {}]
  %s21 = inlined_call_operand.vmem [shape: f32[2,64,32], index: 21, kind: input, shape index: {}]
  %s22 = inlined_call_operand.vmem [shape: f32[2,1,32], index: 22, kind: input, shape index: {}]
  %s23 = inlined_call_operand.vmem [shape: f32[16,32], index: 23, kind: output, shape index: {}]
  %s24 = sld [smem:[#allocation0]]
  $region133: #{decoder_forward.4} parent=0
    _
  %s26 = ssub.s32 1, %s24
  %s27 = scalar_select 0, %s26, %s24
  loop: start=0, step=1, limit=6
  $region2: #{decoder_forward.4} parent=0 // loop_pre_header
    _
  $region3: #{decoder_forward.4} parent=0 // loop_header
    %s29 = sphi 0, %s33
    %p30 = scmp.ge.s32.totalorder %s29, 6
    %s36 = sphi 0, %s48
    %s37 = sphi 0, %s44
    %s38 = sphi 0, %s36
    %s39 = sphi 0, %s37
    %s40 = sphi 0, %s38
    %s41 = sphi 0, %s39
    %s51 = sphi 0, %s53
    %s54 = sphi 0, %s51
    %s55 = sphi 0, %s54
    %s71 = sphi 0, %s55
    %s77 = sphi 0, %s79
    %s80 = sphi 0, %s77
    %s81 = sphi 0, %s80
    %s97 = sphi 0, %s81
    %s103 = sphi 0, %s105
    %s106 = sphi 0, %s103
    %s107 = sphi 0, %s106
    %s123 = sphi 0, %s107
    %s129 = sphi 0, %s131
    %s132 = sphi 0, %s129
    %s133 = sphi 0, %s132
    %s149 = sphi 0, %s133
    %s155 = sphi 0, %s157
    %s158 = sphi 0, %s155
    %s159 = sphi 0, %s158
    %s175 = sphi 0, %s159
    %s181 = sphi 0, %s183
    %s184 = sphi 0, %s181
    %s185 = sphi 0, %s184
    %s201 = sphi 0, %s185
    %s207 = sphi 0, %s209
    %s210 = sphi 0, %s207
    %s211 = sphi 0, %s210
    %s227 = sphi 0, %s211
    %s233 = sphi 0, %s235
    %s236 = sphi 0, %s233
    %s237 = sphi 0, %s236
    %s253 = sphi 0, %s237
    %s259 = sphi 0, %s261
    %s262 = sphi 0, %s259
    %s263 = sphi 0, %s262
    %s279 = sphi 0, %s263
    %s285 = sphi 0, %s287
    %s288 = sphi 0, %s285
    %s289 = sphi 0, %s288
    %s305 = sphi 0, %s289
    %s311 = sphi 0, %s313
    %s314 = sphi 0, %s311
    %s315 = sphi 0, %s314
    %s331 = sphi 0, %s315
    %s337 = sphi 0, %s339
    %s340 = sphi 0, %s337
    %s341 = sphi 0, %s340
    %s357 = sphi 0, %s341
    %s363 = sphi 0, %s365
    %s366 = sphi 0, %s363
    %s367 = sphi 0, %s366
    %s383 = sphi 0, %s367
    %s389 = sphi 0, %s391
    %s392 = sphi 0, %s389
    %s393 = sphi 0, %s392
    %s409 = sphi 0, %s393
    %s415 = sphi 0, %s417
    %s418 = sphi 0, %s415
    %s419 = sphi 0, %s418
    %s435 = sphi 0, %s419
    %s441 = sphi 0, %s443
    %s444 = sphi 0, %s441
    %s445 = sphi 0, %s444
    %s461 = sphi 0, %s445
    %s467 = sphi 0, %s469
    %s470 = sphi 0, %s467
    %s471 = sphi 0, %s470
    %s487 = sphi 0, %s471
    %s493 = sphi 0, %s495
    %s496 = sphi 0, %s493
    %s497 = sphi 0, %s496
    %s513 = sphi 0, %s497
    %s519 = sphi 0, %s521
    %s522 = sphi 0, %s519
    %s523 = sphi 0, %s522
    %s539 = sphi 0, %s523
    %s545 = sphi 0, %s547
    %s548 = sphi 0, %s545
    %s549 = sphi 0, %s548
    %s565 = sphi 0, %s549
    %s571 = sphi 0, %s573
    %s574 = sphi 0, %s571
    %s575 = sphi 0, %s574
    %s591 = sphi 0, %s575
    %s597 = sphi 0, %s599
    %s600 = sphi 0, %s597
    %s601 = sphi 0, %s600
    %s617 = sphi 0, %s601
    %s623 = sphi 0, %s625
    %s626 = sphi 0, %s623
    %s627 = sphi 0, %s626
    %s643 = sphi 0, %s627
    %s649 = sphi 0, %s651
    %s652 = sphi 0, %s649
    %s653 = sphi 0, %s652
    %s669 = sphi 0, %s653
  $region4: #{decoder_forward.4} parent=0 // loop_header_branch
    %32 = sbr.rel (%p30) target = $region8
  $region5: #{decoder_forward.4} parent=0 // loop_body
    %s34 = ssub.s32 %s29, 1
    %s35 = ssub.s32 %s29, 2
    %s42 = sadd.s32 1, %s37
    %p43 = scmp.ge.s32.totalorder %s42, 2
    %s44 = scalar_select %p43, 0, %s42
    %s45 = sadd.s32 1, %s36
    %s46 = scalar_select %p43, %s45, %s36
    %p47 = scmp.ge.s32.totalorder %s46, 2
    %s48 = scalar_select %p47, 0, %s46
    %s49 = ssub.s32 %s36, %s48
    %p50 = scmp.eq.s32.totalorder %s49, 0
    %s52 = sadd.s32 %s51, 1
    %s53 = scalar_select %p50, %s51, %s52
    %p56 = pneg %p50
    %p57 = scmp.eq.s32.totalorder %s29, 3
    %p58 = por %p56, %p57
    %p59 = scmp.ne.s32.totalorder %s51, %s54
    %p60 = scmp.eq.s32.totalorder %s29, 0
    %p61 = por %p59, %p60
    %p62 = scmp.ne.s32.totalorder %s51, %s54
    %p63 = scmp.eq.s32.totalorder %s34, 3
    %p64 = por %p62, %p63
    %p65 = scmp.ne.s32.totalorder %s54, %s55
    %p66 = scmp.eq.s32.totalorder %s34, 0
    %p67 = por %p65, %p66
    %p68 = scmp.ne.s32.totalorder %s54, %s55
    %p69 = scmp.eq.s32.totalorder %s35, 3
    %p70 = por %p68, %p69
    %p72 = scmp.ne.s32.totalorder %s55, %s71
    %p73 = scmp.eq.s32.totalorder %s35, 0
    %p74 = por %p72, %p73
    %s75 = ssub.s32 %s36, %s48
    %p76 = scmp.eq.s32.totalorder %s75, 0
    %s78 = sadd.s32 %s77, 1
    %s79 = scalar_select %p76, %s77, %s78
    %p82 = pneg %p76
    %p83 = scmp.eq.s32.totalorder %s29, 3
    %p84 = por %p82, %p83
    %p85 = scmp.ne.s32.totalorder %s77, %s80
    %p86 = scmp.eq.s32.totalorder %s29, 0
    %p87 = por %p85, %p86
    %p88 = scmp.ne.s32.totalorder %s77, %s80
    %p89 = scmp.eq.s32.totalorder %s34, 3
    %p90 = por %p88, %p89
    %p91 = scmp.ne.s32.totalorder %s80, %s81
    %p92 = scmp.eq.s32.totalorder %s34, 0
    %p93 = por %p91, %p92
    %p94 = scmp.ne.s32.totalorder %s80, %s81
    %p95 = scmp.eq.s32.totalorder %s35, 3
    %p96 = por %p94, %p95
    %p98 = scmp.ne.s32.totalorder %s81, %s97
    %p99 = scmp.eq.s32.totalorder %s35, 0
    %p100 = por %p98, %p99
    %s101 = ssub.s32 %s36, %s48
    %p102 = scmp.eq.s32.totalorder %s101, 0
    %s104 = sadd.s32 %s103, 1
    %s105 = scalar_select %p102, %s103, %s104
    %p108 = pneg %p102
    %p109 = scmp.eq.s32.totalorder %s29, 3
    %p110 = por %p108, %p109
    %p111 = scmp.ne.s32.totalorder %s103, %s106
    %p112 = scmp.eq.s32.totalorder %s29, 0
    %p113 = por %p111, %p112
    %p114 = scmp.ne.s32.totalorder %s103, %s106
    %p115 = scmp.eq.s32.totalorder %s34, 3
    %p116 = por %p114, %p115
    %p117 = scmp.ne.s32.totalorder %s106, %s107
    %p118 = scmp.eq.s32.totalorder %s34, 0
    %p119 = por %p117, %p118
    %p120 = scmp.ne.s32.totalorder %s106, %s107
    %p121 = scmp.eq.s32.totalorder %s35, 3
    %p122 = por %p120, %p121
    %p124 = scmp.ne.s32.totalorder %s107, %s123
    %p125 = scmp.eq.s32.totalorder %s35, 0
    %p126 = por %p124, %p125
    %s127 = ssub.s32 %s37, %s44
    %p128 = scmp.eq.s32.totalorder %s127, 0
    %s130 = sadd.s32 %s129, 1
    %s131 = scalar_select %p128, %s129, %s130
    %p134 = pneg %p128
    %p135 = scmp.eq.s32.totalorder %s29, 3
    %p136 = por %p134, %p135
    %p137 = scmp.ne.s32.totalorder %s129, %s132
    %p138 = scmp.eq.s32.totalorder %s29, 0
    %p139 = por %p137, %p138
    %p140 = scmp.ne.s32.totalorder %s129, %s132
    %p141 = scmp.eq.s32.totalorder %s34, 3
    %p142 = por %p140, %p141
    %p143 = scmp.ne.s32.totalorder %s132, %s133
    %p144 = scmp.eq.s32.totalorder %s34, 0
    %p145 = por %p143, %p144
    %p146 = scmp.ne.s32.totalorder %s132, %s133
    %p147 = scmp.eq.s32.totalorder %s35, 3
    %p148 = por %p146, %p147
    %p150 = scmp.ne.s32.totalorder %s133, %s149
    %p151 = scmp.eq.s32.totalorder %s35, 0
    %p152 = por %p150, %p151
    %s153 = ssub.s32 %s37, %s44
    %p154 = scmp.eq.s32.totalorder %s153, 0
    %s156 = sadd.s32 %s155, 1
    %s157 = scalar_select %p154, %s155, %s156
    %p160 = pneg %p154
    %p161 = scmp.eq.s32.totalorder %s29, 3
    %p162 = por %p160, %p161
    %p163 = scmp.ne.s32.totalorder %s155, %s158
    %p164 = scmp.eq.s32.totalorder %s29, 0
    %p165 = por %p163, %p164
    %p166 = scmp.ne.s32.totalorder %s155, %s158
    %p167 = scmp.eq.s32.totalorder %s34, 3
    %p168 = por %p166, %p167
    %p169 = scmp.ne.s32.totalorder %s158, %s159
    %p170 = scmp.eq.s32.totalorder %s34, 0
    %p171 = por %p169, %p170
    %p172 = scmp.ne.s32.totalorder %s158, %s159
    %p173 = scmp.eq.s32.totalorder %s35, 3
    %p174 = por %p172, %p173
    %p176 = scmp.ne.s32.totalorder %s159, %s175
    %p177 = scmp.eq.s32.totalorder %s35, 0
    %p178 = por %p176, %p177
    %s179 = ssub.s32 %s37, %s44
    %p180 = scmp.eq.s32.totalorder %s179, 0
    %s182 = sadd.s32 %s181, 1
    %s183 = scalar_select %p180, %s181, %s182
    %p186 = pneg %p180
    %p187 = scmp.eq.s32.totalorder %s29, 3
    %p188 = por %p186, %p187
    %p189 = scmp.ne.s32.totalorder %s181, %s184
    %p190 = scmp.eq.s32.totalorder %s29, 0
    %p191 = por %p189, %p190
    %p192 = scmp.ne.s32.totalorder %s181, %s184
    %p193 = scmp.eq.s32.totalorder %s34, 3
    %p194 = por %p192, %p193
    %p195 = scmp.ne.s32.totalorder %s184, %s185
    %p196 = scmp.eq.s32.totalorder %s34, 0
    %p197 = por %p195, %p196
    %p198 = scmp.ne.s32.totalorder %s184, %s185
    %p199 = scmp.eq.s32.totalorder %s35, 3
    %p200 = por %p198, %p199
    %p202 = scmp.ne.s32.totalorder %s185, %s201
    %p203 = scmp.eq.s32.totalorder %s35, 0
    %p204 = por %p202, %p203
    %s205 = ssub.s32 %s37, %s44
    %p206 = scmp.eq.s32.totalorder %s205, 0
    %s208 = sadd.s32 %s207, 1
    %s209 = scalar_select %p206, %s207, %s208
    %p212 = pneg %p206
    %p213 = scmp.eq.s32.totalorder %s29, 3
    %p214 = por %p212, %p213
    %p215 = scmp.ne.s32.totalorder %s207, %s210
    %p216 = scmp.eq.s32.totalorder %s29, 0
    %p217 = por %p215, %p216
    %p218 = scmp.ne.s32.totalorder %s207, %s210
    %p219 = scmp.eq.s32.totalorder %s34, 3
    %p220 = por %p218, %p219
    %p221 = scmp.ne.s32.totalorder %s210, %s211
    %p222 = scmp.eq.s32.totalorder %s34, 0
    %p223 = por %p221, %p222
    %p224 = scmp.ne.s32.totalorder %s210, %s211
    %p225 = scmp.eq.s32.totalorder %s35, 3
    %p226 = por %p224, %p225
    %p228 = scmp.ne.s32.totalorder %s211, %s227
    %p229 = scmp.eq.s32.totalorder %s35, 0
    %p230 = por %p228, %p229
    %s231 = ssub.s32 %s37, %s44
    %p232 = scmp.eq.s32.totalorder %s231, 0
    %s234 = sadd.s32 %s233, 1
    %s235 = scalar_select %p232, %s233, %s234
    %p238 = pneg %p232
    %p239 = scmp.eq.s32.totalorder %s29, 3
    %p240 = por %p238, %p239
    %p241 = scmp.ne.s32.totalorder %s233, %s236
    %p242 = scmp.eq.s32.totalorder %s29, 0
    %p243 = por %p241, %p242
    %p244 = scmp.ne.s32.totalorder %s233, %s236
    %p245 = scmp.eq.s32.totalorder %s34, 3
    %p246 = por %p244, %p245
    %p247 = scmp.ne.s32.totalorder %s236, %s237
    %p248 = scmp.eq.s32.totalorder %s34, 0
    %p249 = por %p247, %p248
    %p250 = scmp.ne.s32.totalorder %s236, %s237
    %p251 = scmp.eq.s32.totalorder %s35, 3
    %p252 = por %p250, %p251
    %p254 = scmp.ne.s32.totalorder %s237, %s253
    %p255 = scmp.eq.s32.totalorder %s35, 0
    %p256 = por %p254, %p255
    %s257 = ssub.s32 %s37, %s44
    %p258 = scmp.eq.s32.totalorder %s257, 0
    %s260 = sadd.s32 %s259, 1
    %s261 = scalar_select %p258, %s259, %s260
    %p264 = pneg %p258
    %p265 = scmp.eq.s32.totalorder %s29, 3
    %p266 = por %p264, %p265
    %p267 = scmp.ne.s32.totalorder %s259, %s262
    %p268 = scmp.eq.s32.totalorder %s29, 0
    %p269 = por %p267, %p268
    %p270 = scmp.ne.s32.totalorder %s259, %s262
    %p271 = scmp.eq.s32.totalorder %s34, 3
    %p272 = por %p270, %p271
    %p273 = scmp.ne.s32.totalorder %s262, %s263
    %p274 = scmp.eq.s32.totalorder %s34, 0
    %p275 = por %p273, %p274
    %p276 = scmp.ne.s32.totalorder %s262, %s263
    %p277 = scmp.eq.s32.totalorder %s35, 3
    %p278 = por %p276, %p277
    %p280 = scmp.ne.s32.totalorder %s263, %s279
    %p281 = scmp.eq.s32.totalorder %s35, 0
    %p282 = por %p280, %p281
    %s283 = ssub.s32 %s37, %s44
    %p284 = scmp.eq.s32.totalorder %s283, 0
    %s286 = sadd.s32 %s285, 1
    %s287 = scalar_select %p284, %s285, %s286
    %p290 = pneg %p284
    %p291 = scmp.eq.s32.totalorder %s29, 3
    %p292 = por %p290, %p291
    %p293 = scmp.ne.s32.totalorder %s285, %s288
    %p294 = scmp.eq.s32.totalorder %s29, 0
    %p295 = por %p293, %p294
    %p296 = scmp.ne.s32.totalorder %s285, %s288
    %p297 = scmp.eq.s32.totalorder %s34, 3
    %p298 = por %p296, %p297
    %p299 = scmp.ne.s32.totalorder %s288, %s289
    %p300 = scmp.eq.s32.totalorder %s34, 0
    %p301 = por %p299, %p300
    %p302 = scmp.ne.s32.totalorder %s288, %s289
    %p303 = scmp.eq.s32.totalorder %s35, 3
    %p304 = por %p302, %p303
    %p306 = scmp.ne.s32.totalorder %s289, %s305
    %p307 = scmp.eq.s32.totalorder %s35, 0
    %p308 = por %p306, %p307
    %s309 = ssub.s32 %s37, %s44
    %p310 = scmp.eq.s32.totalorder %s309, 0
    %s312 = sadd.s32 %s311, 1
    %s313 = scalar_select %p310, %s311, %s312
    %p316 = pneg %p310
    %p317 = scmp.eq.s32.totalorder %s29, 3
    %p318 = por %p316, %p317
    %p319 = scmp.ne.s32.totalorder %s311, %s314
    %p320 = scmp.eq.s32.totalorder %s29, 0
    %p321 = por %p319, %p320
    %p322 = scmp.ne.s32.totalorder %s311, %s314
    %p323 = scmp.eq.s32.totalorder %s34, 3
    %p324 = por %p322, %p323
    %p325 = scmp.ne.s32.totalorder %s314, %s315
    %p326 = scmp.eq.s32.totalorder %s34, 0
    %p327 = por %p325, %p326
    %p328 = scmp.ne.s32.totalorder %s314, %s315
    %p329 = scmp.eq.s32.totalorder %s35, 3
    %p330 = por %p328, %p329
    %p332 = scmp.ne.s32.totalorder %s315, %s331
    %p333 = scmp.eq.s32.totalorder %s35, 0
    %p334 = por %p332, %p333
    %s335 = ssub.s32 %s37, %s44
    %p336 = scmp.eq.s32.totalorder %s335, 0
    %s338 = sadd.s32 %s337, 1
    %s339 = scalar_select %p336, %s337, %s338
    %p342 = pneg %p336
    %p343 = scmp.eq.s32.totalorder %s29, 3
    %p344 = por %p342, %p343
    %p345 = scmp.ne.s32.totalorder %s337, %s340
    %p346 = scmp.eq.s32.totalorder %s29, 0
    %p347 = por %p345, %p346
    %p348 = scmp.ne.s32.totalorder %s337, %s340
    %p349 = scmp.eq.s32.totalorder %s34, 3
    %p350 = por %p348, %p349
    %p351 = scmp.ne.s32.totalorder %s340, %s341
    %p352 = scmp.eq.s32.totalorder %s34, 0
    %p353 = por %p351, %p352
    %p354 = scmp.ne.s32.totalorder %s340, %s341
    %p355 = scmp.eq.s32.totalorder %s35, 3
    %p356 = por %p354, %p355
    %p358 = scmp.ne.s32.totalorder %s341, %s357
    %p359 = scmp.eq.s32.totalorder %s35, 0
    %p360 = por %p358, %p359
    %s361 = ssub.s32 %s37, %s44
    %p362 = scmp.eq.s32.totalorder %s361, 0
    %s364 = sadd.s32 %s363, 1
    %s365 = scalar_select %p362, %s363, %s364
    %p368 = pneg %p362
    %p369 = scmp.eq.s32.totalorder %s29, 3
    %p370 = por %p368, %p369
    %p371 = scmp.ne.s32.totalorder %s363, %s366
    %p372 = scmp.eq.s32.totalorder %s29, 0
    %p373 = por %p371, %p372
    %p374 = scmp.ne.s32.totalorder %s363, %s366
    %p375 = scmp.eq.s32.totalorder %s34, 3
    %p376 = por %p374, %p375
    %p377 = scmp.ne.s32.totalorder %s366, %s367
    %p378 = scmp.eq.s32.totalorder %s34, 0
    %p379 = por %p377, %p378
    %p380 = scmp.ne.s32.totalorder %s366, %s367
    %p381 = scmp.eq.s32.totalorder %s35, 3
    %p382 = por %p380, %p381
    %p384 = scmp.ne.s32.totalorder %s367, %s383
    %p385 = scmp.eq.s32.totalorder %s35, 0
    %p386 = por %p384, %p385
    %s387 = ssub.s32 %s37, %s44
    %p388 = scmp.eq.s32.totalorder %s387, 0
    %s390 = sadd.s32 %s389, 1
    %s391 = scalar_select %p388, %s389, %s390
    %p394 = pneg %p388
    %p395 = scmp.eq.s32.totalorder %s29, 3
    %p396 = por %p394, %p395
    %p397 = scmp.ne.s32.totalorder %s389, %s392
    %p398 = scmp.eq.s32.totalorder %s29, 0
    %p399 = por %p397, %p398
    %p400 = scmp.ne.s32.totalorder %s389, %s392
    %p401 = scmp.eq.s32.totalorder %s34, 3
    %p402 = por %p400, %p401
    %p403 = scmp.ne.s32.totalorder %s392, %s393
    %p404 = scmp.eq.s32.totalorder %s34, 0
    %p405 = por %p403, %p404
    %p406 = scmp.ne.s32.totalorder %s392, %s393
    %p407 = scmp.eq.s32.totalorder %s35, 3
    %p408 = por %p406, %p407
    %p410 = scmp.ne.s32.totalorder %s393, %s409
    %p411 = scmp.eq.s32.totalorder %s35, 0
    %p412 = por %p410, %p411
    %s413 = ssub.s32 %s37, %s44
    %p414 = scmp.eq.s32.totalorder %s413, 0
    %s416 = sadd.s32 %s415, 1
    %s417 = scalar_select %p414, %s415, %s416
    %p420 = pneg %p414
    %p421 = scmp.eq.s32.totalorder %s29, 3
    %p422 = por %p420, %p421
    %p423 = scmp.ne.s32.totalorder %s415, %s418
    %p424 = scmp.eq.s32.totalorder %s29, 0
    %p425 = por %p423, %p424
    %p426 = scmp.ne.s32.totalorder %s415, %s418
    %p427 = scmp.eq.s32.totalorder %s34, 3
    %p428 = por %p426, %p427
    %p429 = scmp.ne.s32.totalorder %s418, %s419
    %p430 = scmp.eq.s32.totalorder %s34, 0
    %p431 = por %p429, %p430
    %p432 = scmp.ne.s32.totalorder %s418, %s419
    %p433 = scmp.eq.s32.totalorder %s35, 3
    %p434 = por %p432, %p433
    %p436 = scmp.ne.s32.totalorder %s419, %s435
    %p437 = scmp.eq.s32.totalorder %s35, 0
    %p438 = por %p436, %p437
    %s439 = ssub.s32 %s37, %s44
    %p440 = scmp.eq.s32.totalorder %s439, 0
    %s442 = sadd.s32 %s441, 1
    %s443 = scalar_select %p440, %s441, %s442
    %p446 = pneg %p440
    %p447 = scmp.eq.s32.totalorder %s29, 3
    %p448 = por %p446, %p447
    %p449 = scmp.ne.s32.totalorder %s441, %s444
    %p450 = scmp.eq.s32.totalorder %s29, 0
    %p451 = por %p449, %p450
    %p452 = scmp.ne.s32.totalorder %s441, %s444
    %p453 = scmp.eq.s32.totalorder %s34, 3
    %p454 = por %p452, %p453
    %p455 = scmp.ne.s32.totalorder %s444, %s445
    %p456 = scmp.eq.s32.totalorder %s34, 0
    %p457 = por %p455, %p456
    %p458 = scmp.ne.s32.totalorder %s444, %s445
    %p459 = scmp.eq.s32.totalorder %s35, 3
    %p460 = por %p458, %p459
    %p462 = scmp.ne.s32.totalorder %s445, %s461
    %p463 = scmp.eq.s32.totalorder %s35, 0
    %p464 = por %p462, %p463
    %s465 = ssub.s32 %s37, %s44
    %p466 = scmp.eq.s32.totalorder %s465, 0
    %s468 = sadd.s32 %s467, 1
    %s469 = scalar_select %p466, %s467, %s468
    %p472 = pneg %p466
    %p473 = scmp.eq.s32.totalorder %s29, 3
    %p474 = por %p472, %p473
    %p475 = scmp.ne.s32.totalorder %s467, %s470
    %p476 = scmp.eq.s32.totalorder %s29, 0
    %p477 = por %p475, %p476
    %p478 = scmp.ne.s32.totalorder %s467, %s470
    %p479 = scmp.eq.s32.totalorder %s34, 3
    %p480 = por %p478, %p479
    %p481 = scmp.ne.s32.totalorder %s470, %s471
    %p482 = scmp.eq.s32.totalorder %s34, 0
    %p483 = por %p481, %p482
    %p484 = scmp.ne.s32.totalorder %s470, %s471
    %p485 = scmp.eq.s32.totalorder %s35, 3
    %p486 = por %p484, %p485
    %p488 = scmp.ne.s32.totalorder %s471, %s487
    %p489 = scmp.eq.s32.totalorder %s35, 0
    %p490 = por %p488, %p489
    %s491 = ssub.s32 %s37, %s44
    %p492 = scmp.eq.s32.totalorder %s491, 0
    %s494 = sadd.s32 %s493, 1
    %s495 = scalar_select %p492, %s493, %s494
    %p498 = pneg %p492
    %p499 = scmp.eq.s32.totalorder %s29, 3
    %p500 = por %p498, %p499
    %p501 = scmp.ne.s32.totalorder %s493, %s496
    %p502 = scmp.eq.s32.totalorder %s29, 0
    %p503 = por %p501, %p502
    %p504 = scmp.ne.s32.totalorder %s493, %s496
    %p505 = scmp.eq.s32.totalorder %s34, 3
    %p506 = por %p504, %p505
    %p507 = scmp.ne.s32.totalorder %s496, %s497
    %p508 = scmp.eq.s32.totalorder %s34, 0
    %p509 = por %p507, %p508
    %p510 = scmp.ne.s32.totalorder %s496, %s497
    %p511 = scmp.eq.s32.totalorder %s35, 3
    %p512 = por %p510, %p511
    %p514 = scmp.ne.s32.totalorder %s497, %s513
    %p515 = scmp.eq.s32.totalorder %s35, 0
    %p516 = por %p514, %p515
    %s517 = ssub.s32 %s37, %s44
    %p518 = scmp.eq.s32.totalorder %s517, 0
    %s520 = sadd.s32 %s519, 1
    %s521 = scalar_select %p518, %s519, %s520
    %p524 = pneg %p518
    %p525 = scmp.eq.s32.totalorder %s29, 3
    %p526 = por %p524, %p525
    %p527 = scmp.ne.s32.totalorder %s519, %s522
    %p528 = scmp.eq.s32.totalorder %s29, 0
    %p529 = por %p527, %p528
    %p530 = scmp.ne.s32.totalorder %s519, %s522
    %p531 = scmp.eq.s32.totalorder %s34, 3
    %p532 = por %p530, %p531
    %p533 = scmp.ne.s32.totalorder %s522, %s523
    %p534 = scmp.eq.s32.totalorder %s34, 0
    %p535 = por %p533, %p534
    %p536 = scmp.ne.s32.totalorder %s522, %s523
    %p537 = scmp.eq.s32.totalorder %s35, 3
    %p538 = por %p536, %p537
    %p540 = scmp.ne.s32.totalorder %s523, %s539
    %p541 = scmp.eq.s32.totalorder %s35, 0
    %p542 = por %p540, %p541
    %s543 = ssub.s32 %s37, %s44
    %p544 = scmp.eq.s32.totalorder %s543, 0
    %s546 = sadd.s32 %s545, 1
    %s547 = scalar_select %p544, %s545, %s546
    %p550 = pneg %p544
    %p551 = scmp.eq.s32.totalorder %s29, 3
    %p552 = por %p550, %p551
    %p553 = scmp.ne.s32.totalorder %s545, %s548
    %p554 = scmp.eq.s32.totalorder %s29, 0
    %p555 = por %p553, %p554
    %p556 = scmp.ne.s32.totalorder %s545, %s548
    %p557 = scmp.eq.s32.totalorder %s34, 3
    %p558 = por %p556, %p557
    %p559 = scmp.ne.s32.totalorder %s548, %s549
    %p560 = scmp.eq.s32.totalorder %s34, 0
    %p561 = por %p559, %p560
    %p562 = scmp.ne.s32.totalorder %s548, %s549
    %p563 = scmp.eq.s32.totalorder %s35, 3
    %p564 = por %p562, %p563
    %p566 = scmp.ne.s32.totalorder %s549, %s565
    %p567 = scmp.eq.s32.totalorder %s35, 0
    %p568 = por %p566, %p567
    %s569 = ssub.s32 %s37, %s44
    %p570 = scmp.eq.s32.totalorder %s569, 0
    %s572 = sadd.s32 %s571, 1
    %s573 = scalar_select %p570, %s571, %s572
    %p576 = pneg %p570
    %p577 = scmp.eq.s32.totalorder %s29, 3
    %p578 = por %p576, %p577
    %p579 = scmp.ne.s32.totalorder %s571, %s574
    %p580 = scmp.eq.s32.totalorder %s29, 0
    %p581 = por %p579, %p580
    %p582 = scmp.ne.s32.totalorder %s571, %s574
    %p583 = scmp.eq.s32.totalorder %s34, 3
    %p584 = por %p582, %p583
    %p585 = scmp.ne.s32.totalorder %s574, %s575
    %p586 = scmp.eq.s32.totalorder %s34, 0
    %p587 = por %p585, %p586
    %p588 = scmp.ne.s32.totalorder %s574, %s575
    %p589 = scmp.eq.s32.totalorder %s35, 3
    %p590 = por %p588, %p589
    %p592 = scmp.ne.s32.totalorder %s575, %s591
    %p593 = scmp.eq.s32.totalorder %s35, 0
    %p594 = por %p592, %p593
    %s595 = ssub.s32 %s37, %s44
    %p596 = scmp.eq.s32.totalorder %s595, 0
    %s598 = sadd.s32 %s597, 1
    %s599 = scalar_select %p596, %s597, %s598
    %p602 = pneg %p596
    %p603 = scmp.eq.s32.totalorder %s29, 3
    %p604 = por %p602, %p603
    %p605 = scmp.ne.s32.totalorder %s597, %s600
    %p606 = scmp.eq.s32.totalorder %s29, 0
    %p607 = por %p605, %p606
    %p608 = scmp.ne.s32.totalorder %s597, %s600
    %p609 = scmp.eq.s32.totalorder %s34, 3
    %p610 = por %p608, %p609
    %p611 = scmp.ne.s32.totalorder %s600, %s601
    %p612 = scmp.eq.s32.totalorder %s34, 0
    %p613 = por %p611, %p612
    %p614 = scmp.ne.s32.totalorder %s600, %s601
    %p615 = scmp.eq.s32.totalorder %s35, 3
    %p616 = por %p614, %p615
    %p618 = scmp.ne.s32.totalorder %s601, %s617
    %p619 = scmp.eq.s32.totalorder %s35, 0
    %p620 = por %p618, %p619
    %s621 = ssub.s32 %s37, %s44
    %p622 = scmp.eq.s32.totalorder %s621, 0
    %s624 = sadd.s32 %s623, 1
    %s625 = scalar_select %p622, %s623, %s624
    %p628 = pneg %p622
    %p629 = scmp.eq.s32.totalorder %s29, 3
    %p630 = por %p628, %p629
    %p631 = scmp.ne.s32.totalorder %s623, %s626
    %p632 = scmp.eq.s32.totalorder %s29, 0
    %p633 = por %p631, %p632
    %p634 = scmp.ne.s32.totalorder %s623, %s626
    %p635 = scmp.eq.s32.totalorder %s34, 3
    %p636 = por %p634, %p635
    %p637 = scmp.ne.s32.totalorder %s626, %s627
    %p638 = scmp.eq.s32.totalorder %s34, 0
    %p639 = por %p637, %p638
    %p640 = scmp.ne.s32.totalorder %s626, %s627
    %p641 = scmp.eq.s32.totalorder %s35, 3
    %p642 = por %p640, %p641
    %p644 = scmp.ne.s32.totalorder %s627, %s643
    %p645 = scmp.eq.s32.totalorder %s35, 0
    %p646 = por %p644, %p645
    %s647 = ssub.s32 %s36, %s48
    %p648 = scmp.eq.s32.totalorder %s647, 0
    %s650 = sadd.s32 %s649, 1
    %s651 = scalar_select %p648, %s649, %s650
    %p654 = pneg %p648
    %p655 = scmp.eq.s32.totalorder %s29, 3
    %p656 = por %p654, %p655
    %p657 = scmp.ne.s32.totalorder %s649, %s652
    %p658 = scmp.eq.s32.totalorder %s29, 0
    %p659 = por %p657, %p658
    %p660 = scmp.ne.s32.totalorder %s649, %s652
    %p661 = scmp.eq.s32.totalorder %s34, 3
    %p662 = por %p660, %p661
    %p663 = scmp.ne.s32.totalorder %s652, %s653
    %p664 = scmp.eq.s32.totalorder %s34, 0
    %p665 = por %p663, %p664
    %p666 = scmp.ne.s32.totalorder %s652, %s653
    %p667 = scmp.eq.s32.totalorder %s35, 3
    %p668 = por %p666, %p667
    %p670 = scmp.ne.s32.totalorder %s653, %s669
    %p671 = scmp.eq.s32.totalorder %s35, 0
    %p672 = por %p670, %p671
    %p673 = scmp.le.s32.totalorder 1, %s29
    %p674 = scmp.lt.s32.totalorder %s29, 5
    %p675 = pnand %p673, %p674
    %p676 = pneg %p675
    // Predicated region
    $region9: #{decoder_forward.4} parent=5 // pred_check
      _
    $region10: #{decoder_forward.4} parent=5 // pred_check_branch
      %678 = sbr.rel (%p675) target = $region12
    $region11: #{decoder_forward.4} parent=5 // pred_region
      %s679 = ssub.s32 %s29, 1
    $region12: #{decoder_forward.4} parent=5 // pred_fallthru
      _
    %p680 = scmp.lt.s32.totalorder %s29, 4
    // Predicated region
    $region13: #{decoder_forward.4} parent=5 // pred_check
      %p681 = pneg %p680
    $region14: #{decoder_forward.4} parent=5 // pred_check_branch
      %683 = sbr.rel (%p681) target = $region16
    $region15: #{decoder_forward.4} parent=5 // pred_region
      // Predicated region
      $region17: #{decoder_forward.4} parent=15 // pred_check
        %p684 = pneg %p61
      $region18: #{decoder_forward.4} parent=15 // pred_check_branch
        %686 = sbr.rel (%p684) target = $region20
      $region19: #{decoder_forward.4} parent=15 // pred_region
        %p687 = scmp.lt.s32.totalorder %s36, 1
        %s688 = scalar_select %p687, %s36, 1
        %s689 = smul.addr %s688, 8
        %s690 = scalar_lea.vmem %s0, %s689
      $region20: #{decoder_forward.4} parent=15 // pred_fallthru
        _
      // Predicated region
      $region21: #{decoder_forward.4} parent=15 // pred_check
        %p691 = pneg %p87
      $region22: #{decoder_forward.4} parent=15 // pred_check_branch
        %693 = sbr.rel (%p691) target = $region24
      $region23: #{decoder_forward.4} parent=15 // pred_region
        %p694 = scmp.lt.s32.totalorder %s36, 1
        %s695 = scalar_select %p694, %s36, 1
        %s696 = smul.addr %s695, 8
        %s697 = scalar_lea.vmem %s1, %s696
      $region24: #{decoder_forward.4} parent=15 // pred_fallthru
        _
      // Predicated region
      $region25: #{decoder_forward.4} parent=15 // pred_check
        %p698 = pneg %p113
      $region26: #{decoder_forward.4} parent=15 // pred_check_branch
        %700 = sbr.rel (%p698) target = $region28
      $region27: #{decoder_forward.4} parent=15 // pred_region
        %p701 = scmp.lt.s32.totalorder %s36, 1
        %s702 = scalar_select %p701, %s36, 1
        %s703 = scalar_lea.vmem %s2, %s702
      $region28: #{decoder_forward.4} parent=15 // pred_fallthru
        _
      // Predicated region
      $region29: #{decoder_forward.4} parent=15 // pred_check
        %p704 = pneg %p139
      $region30: #{decoder_forward.4} parent=15 // pred_check_branch
        %706 = sbr.rel (%p704) target = $region32
      $region31: #{decoder_forward.4} parent=15 // pred_region
        %p707 = scmp.lt.s32.totalorder %s37, 1
        %s708 = scalar_select %p707, %s37, 1
        %s709 = scalar_lea.vmem %s3, %s708
      $region32: #{decoder_forward.4} parent=15 // pred_fallthru
        _
      // Predicated region
      $region33: #{decoder_forward.4} parent=15 // pred_check
        %p710 = pneg %p165
      $region34: #{decoder_forward.4} parent=15 // pred_check_branch
        %712 = sbr.rel (%p710) target = $region36
      $region35: #{decoder_forward.4} parent=15 // pred_region
        %p713 = scmp.lt.s32.totalorder %s37, 1
        %s714 = scalar_select %p713, %s37, 1
        %s715 = scalar_lea.vmem %s4, %s714
      $region36: #{decoder_forward.4} parent=15 // pred_fallthru
        _
      // Predicated region
      $region37: #{decoder_forward.4} parent=15 // pred_check
        %p716 = pneg %p191
      $region38: #{decoder_forward.4} parent=15 // pred_check_branch
        %718 = sbr.rel (%p716) target = $region40
      $region39: #{decoder_forward.4} parent=15 // pred_region
        %p719 = scmp.lt.s32.totalorder %s37, 1
        %s720 = scalar_select %p719, %s37, 1
        %s721 = smul.addr %s720, 4
        %s722 = smul.addr %s721, 8
        %s723 = scalar_lea.vmem %s5, %s722
      $region40: #{decoder_forward.4} parent=15 // pred_fallthru
        _
      // Predicated region
      $region41: #{decoder_forward.4} parent=15 // pred_check
        %p724 = pneg %p217
      $region42: #{decoder_forward.4} parent=15 // pred_check_branch
        %726 = sbr.rel (%p724) target = $region44
      $region43: #{decoder_forward.4} parent=15 // pred_region
        %p727 = scmp.lt.s32.totalorder %s37, 1
        %s728 = scalar_select %p727, %s37, 1
        %s729 = scalar_lea.vmem %s6, %s728
      $region44: #{decoder_forward.4} parent=15 // pred_fallthru
        _
      // Predicated region
      $region45: #{decoder_forward.4} parent=15 // pred_check
        %p730 = pneg %p243
      $region46: #{decoder_forward.4} parent=15 // pred_check_branch
        %732 = sbr.rel (%p730) target = $region48
      $region47: #{decoder_forward.4} parent=15 // pred_region
        %p733 = scmp.lt.s32.totalorder %s37, 1
        %s734 = scalar_select %p733, %s37, 1
        %s735 = smul.addr %s734, 4
        %s736 = smul.addr %s735, 8
        %s737 = scalar_lea.vmem %s7, %s736
      $region48: #{decoder_forward.4} parent=15 // pred_fallthru
        _
      // Predicated region
      $region49: #{decoder_forward.4} parent=15 // pred_check
        %p738 = pneg %p269
      $region50: #{decoder_forward.4} parent=15 // pred_check_branch
        %740 = sbr.rel (%p738) target = $region52
      $region51: #{decoder_forward.4} parent=15 // pred_region
        %p741 = scmp.lt.s32.totalorder %s37, 1
        %s742 = scalar_select %p741, %s37, 1
        %s743 = scalar_lea.vmem %s8, %s742
      $region52: #{decoder_forward.4} parent=15 // pred_fallthru
        _
      // Predicated region
      $region53: #{decoder_forward.4} parent=15 // pred_check
        %p744 = pneg %p295
      $region54: #{decoder_forward.4} parent=15 // pred_check_branch
        %746 = sbr.rel (%p744) target = $region56
      $region55: #{decoder_forward.4} parent=15 // pred_region
        %p747 = scmp.lt.s32.totalorder %s37, 1
        %s748 = scalar_select %p747, %s37, 1
        %s749 = scalar_lea.vmem %s9, %s748
      $region56: #{decoder_forward.4} parent=15 // pred_fallthru
        _
      // Predicated region
      $region57: #{decoder_forward.4} parent=15 // pred_check
        %p750 = pneg %p321
      $region58: #{decoder_forward.4} parent=15 // pred_check_branch
        %752 = sbr.rel (%p750) target = $region60
      $region59: #{decoder_forward.4} parent=15 // pred_region
        %p753 = scmp.lt.s32.totalorder %s37, 1
        %s754 = scalar_select %p753, %s37, 1
        %s755 = scalar_lea.vmem %s10, %s754
      $region60: #{decoder_forward.4} parent=15 // pred_fallthru
        _
      // Predicated region
      $region61: #{decoder_forward.4} parent=15 // pred_check
        %p756 = pneg %p347
      $region62: #{decoder_forward.4} parent=15 // pred_check_branch
        %758 = sbr.rel (%p756) target = $region64
      $region63: #{decoder_forward.4} parent=15 // pred_region
        %p759 = scmp.lt.s32.totalorder %s37, 1
        %s760 = scalar_select %p759, %s37, 1
        %s761 = smul.addr %s760, 4
        %s762 = smul.addr %s761, 8
        %s763 = scalar_lea.vmem %s11, %s762
      $region64: #{decoder_forward.4} parent=15 // pred_fallthru
        _
      // Predicated region
      $region65: #{decoder_forward.4} parent=15 // pred_check
        %p764 = pneg %p373
      $region66: #{decoder_forward.4} parent=15 // pred_check_branch
        %766 = sbr.rel (%p764) target = $region68
      $region67: #{decoder_forward.4} parent=15 // pred_region
        %p767 = scmp.lt.s32.totalorder %s37, 1
        %s768 = scalar_select %p767, %s37, 1
        %s769 = scalar_lea.vmem %s12, %s768
      $region68: #{decoder_forward.4} parent=15 // pred_fallthru
        _
      // Predicated region
      $region69: #{decoder_forward.4} parent=15 // pred_check
        %p770 = pneg %p399
      $region70: #{decoder_forward.4} parent=15 // pred_check_branch
        %772 = sbr.rel (%p770) target = $region72
      $region71: #{decoder_forward.4} parent=15 // pred_region
        %p773 = scmp.lt.s32.totalorder %s37, 1
        %s774 = scalar_select %p773, %s37, 1
        %s775 = smul.addr %s774, 4
        %s776 = smul.addr %s775, 8
        %s777 = scalar_lea.vmem %s13, %s776
      $region72: #{decoder_forward.4} parent=15 // pred_fallthru
        _
      // Predicated region
      $region73: #{decoder_forward.4} parent=15 // pred_check
        %p778 = pneg %p425
      $region74: #{decoder_forward.4} parent=15 // pred_check_branch
        %780 = sbr.rel (%p778) target = $region76
      $region75: #{decoder_forward.4} parent=15 // pred_region
        %p781 = scmp.lt.s32.totalorder %s37, 1
        %s782 = scalar_select %p781, %s37, 1
        %s783 = scalar_lea.vmem %s14, %s782
      $region76: #{decoder_forward.4} parent=15 // pred_fallthru
        _
      // Predicated region
      $region77: #{decoder_forward.4} parent=15 // pred_check
        %p784 = pneg %p451
      $region78: #{decoder_forward.4} parent=15 // pred_check_branch
        %786 = sbr.rel (%p784) target = $region80
      $region79: #{decoder_forward.4} parent=15 // pred_region
        %p787 = scmp.lt.s32.totalorder %s37, 1
        %s788 = scalar_select %p787, %s37, 1
        %s789 = smul.addr %s788, 4
        %s790 = smul.addr %s789, 8
        %s791 = scalar_lea.vmem %s15, %s790
      $region80: #{decoder_forward.4} parent=15 // pred_fallthru
        _
      // Predicated region
      $region81: #{decoder_forward.4} parent=15 // pred_check
        %p792 = pneg %p477
      $region82: #{decoder_forward.4} parent=15 // pred_check_branch
        %794 = sbr.rel (%p792) target = $region84
      $region83: #{decoder_forward.4} parent=15 // pred_region
        %p795 = scmp.lt.s32.totalorder %s37, 1
        %s796 = scalar_select %p795, %s37, 1
        %s797 = scalar_lea.vmem %s16, %s796
      $region84: #{decoder_forward.4} parent=15 // pred_fallthru
        _
      // Predicated region
      $region85: #{decoder_forward.4} parent=15 // pred_check
        %p798 = pneg %p503
      $region86: #{decoder_forward.4} parent=15 // pred_check_branch
        %800 = sbr.rel (%p798) target = $region88
      $region87: #{decoder_forward.4} parent=15 // pred_region
        %p801 = scmp.lt.s32.totalorder %s37, 1
        %s802 = scalar_select %p801, %s37, 1
        %s803 = scalar_lea.vmem %s17, %s802
      $region88: #{decoder_forward.4} parent=15 // pred_fallthru
        _
      // Predicated region
      $region89: #{decoder_forward.4} parent=15 // pred_check
        %p804 = pneg %p529
      $region90: #{decoder_forward.4} parent=15 // pred_check_branch
        %806 = sbr.rel (%p804) target = $region92
      $region91: #{decoder_forward.4} parent=15 // pred_region
        %p807 = scmp.lt.s32.totalorder %s37, 1
        %s808 = scalar_select %p807, %s37, 1
        %s809 = scalar_lea.vmem %s18, %s808
      $region92: #{decoder_forward.4} parent=15 // pred_fallthru
        _
      // Predicated region
      $region93: #{decoder_forward.4} parent=15 // pred_check
        %p810 = pneg %p555
      $region94: #{decoder_forward.4} parent=15 // pred_check_branch
        %812 = sbr.rel (%p810) target = $region96
      $region95: #{decoder_forward.4} parent=15 // pred_region
        %p813 = scmp.lt.s32.totalorder %s37, 1
        %s814 = scalar_select %p813, %s37, 1
        %s815 = smul.addr %s814, 4
        %s816 = smul.addr %s815, 8
        %s817 = scalar_lea.vmem %s19, %s816
      $region96: #{decoder_forward.4} parent=15 // pred_fallthru
        _
      // Predicated region
      $region97: #{decoder_forward.4} parent=15 // pred_check
        %p818 = pneg %p581
      $region98: #{decoder_forward.4} parent=15 // pred_check_branch
        %820 = sbr.rel (%p818) target = $region100
      $region99: #{decoder_forward.4} parent=15 // pred_region
        %p821 = scmp.lt.s32.totalorder %s37, 1
        %s822 = scalar_select %p821, %s37, 1
        %s823 = scalar_lea.vmem %s20, %s822
      $region100: #{decoder_forward.4} parent=15 // pred_fallthru
        _
      // Predicated region
      $region101: #{decoder_forward.4} parent=15 // pred_check
        %p824 = pneg %p607
      $region102: #{decoder_forward.4} parent=15 // pred_check_branch
        %826 = sbr.rel (%p824) target = $region104
      $region103: #{decoder_forward.4} parent=15 // pred_region
        %p827 = scmp.lt.s32.totalorder %s37, 1
        %s828 = scalar_select %p827, %s37, 1
        %s829 = smul.addr %s828, 8
        %s830 = smul.addr %s829, 8
        %s831 = scalar_lea.vmem %s21, %s830
      $region104: #{decoder_forward.4} parent=15 // pred_fallthru
        _
      // Predicated region
      $region105: #{decoder_forward.4} parent=15 // pred_check
        %p832 = pneg %p633
      $region106: #{decoder_forward.4} parent=15 // pred_check_branch
        %834 = sbr.rel (%p832) target = $region108
      $region107: #{decoder_forward.4} parent=15 // pred_region
        %p835 = scmp.lt.s32.totalorder %s37, 1
        %s836 = scalar_select %p835, %s37, 1
        %s837 = scalar_lea.vmem %s22, %s836
      $region108: #{decoder_forward.4} parent=15 // pred_fallthru
        _
    $region16: #{decoder_forward.4} parent=5 // pred_fallthru
      _
    %p838 = scmp.le.s32.totalorder 1, %s29
    %p839 = scmp.lt.s32.totalorder %s29, 5
    %p840 = pnand %p838, %p839
    %p841 = pneg %p840
    // Predicated region
    $region109: #{decoder_forward.4} parent=5 // pred_check
      _
    $region110: #{decoder_forward.4} parent=5 // pred_check_branch
      %843 = sbr.rel (%p840) target = $region112
    $region111: #{decoder_forward.4} parent=5 // pred_region
      %s844 = ssub.s32 %s29, 1
      %p845 = scmp.lt.s32.totalorder %s38, 1
      %s846 = scalar_select %p845, %s38, 1
      %s847 = smul.addr %s846, 8
      %s848 = scalar_lea.vmem %s0, %s847
      %p849 = pneg %p67
      %p850 = pneg %p64
      %p851 = scmp.lt.s32.totalorder %s38, 1
      %s852 = scalar_select %p851, %s38, 1
      %s853 = smul.addr %s852, 8
      %s854 = scalar_lea.vmem %s1, %s853
      %p855 = pneg %p93
      %p856 = pneg %p90
      %p857 = scmp.lt.s32.totalorder %s38, 1
      %s858 = scalar_select %p857, %s38, 1
      %s859 = scalar_lea.vmem %s2, %s858
      %p860 = pneg %p119
      %p861 = pneg %p116
      %p862 = scmp.lt.s32.totalorder %s39, 1
      %s863 = scalar_select %p862, %s39, 1
      %s864 = scalar_lea.vmem %s3, %s863
      %p865 = pneg %p145
      %p866 = pneg %p142
      %p867 = scmp.lt.s32.totalorder %s39, 1
      %s868 = scalar_select %p867, %s39, 1
      %s869 = scalar_lea.vmem %s4, %s868
      %p870 = pneg %p171
      %p871 = pneg %p168
      %p872 = scmp.lt.s32.totalorder %s39, 1
      %s873 = scalar_select %p872, %s39, 1
      %s874 = smul.addr %s873, 4
      %s875 = smul.addr %s874, 8
      %s876 = scalar_lea.vmem %s5, %s875
      %p877 = pneg %p197
      %p878 = pneg %p194
      %p879 = scmp.lt.s32.totalorder %s39, 1
      %s880 = scalar_select %p879, %s39, 1
      %s881 = scalar_lea.vmem %s6, %s880
      %p882 = pneg %p223
      %p883 = pneg %p220
      %p884 = scmp.lt.s32.totalorder %s39, 1
      %s885 = scalar_select %p884, %s39, 1
      %s886 = smul.addr %s885, 4
      %s887 = smul.addr %s886, 8
      %s888 = scalar_lea.vmem %s7, %s887
      %p889 = pneg %p249
      %p890 = pneg %p246
      %p891 = scmp.lt.s32.totalorder %s39, 1
      %s892 = scalar_select %p891, %s39, 1
      %s893 = scalar_lea.vmem %s8, %s892
      %p894 = pneg %p275
      %p895 = pneg %p272
      %p896 = scmp.lt.s32.totalorder %s39, 1
      %s897 = scalar_select %p896, %s39, 1
      %s898 = scalar_lea.vmem %s9, %s897
      %p899 = pneg %p301
      %p900 = pneg %p298
      %p901 = scmp.lt.s32.totalorder %s39, 1
      %s902 = scalar_select %p901, %s39, 1
      %s903 = scalar_lea.vmem %s10, %s902
      %p904 = pneg %p327
      %p905 = pneg %p324
      %p906 = scmp.lt.s32.totalorder %s39, 1
      %s907 = scalar_select %p906, %s39, 1
      %s908 = smul.addr %s907, 4
      %s909 = smul.addr %s908, 8
      %s910 = scalar_lea.vmem %s11, %s909
      %p911 = pneg %p353
      %p912 = pneg %p350
      %p913 = scmp.lt.s32.totalorder %s39, 1
      %s914 = scalar_select %p913, %s39, 1
      %s915 = scalar_lea.vmem %s12, %s914
      %p916 = pneg %p379
      %p917 = pneg %p376
      %p918 = scmp.lt.s32.totalorder %s39, 1
      %s919 = scalar_select %p918, %s39, 1
      %s920 = smul.addr %s919, 4
      %s921 = smul.addr %s920, 8
      %s922 = scalar_lea.vmem %s13, %s921
      %p923 = pneg %p405
      %p924 = pneg %p402
      %p925 = scmp.lt.s32.totalorder %s39, 1
      %s926 = scalar_select %p925, %s39, 1
      %s927 = scalar_lea.vmem %s14, %s926
      %p928 = pneg %p431
      %p929 = pneg %p428
      %p930 = scmp.lt.s32.totalorder %s39, 1
      %s931 = scalar_select %p930, %s39, 1
      %s932 = smul.addr %s931, 4
      %s933 = smul.addr %s932, 8
      %s934 = scalar_lea.vmem %s15, %s933
      %p935 = pneg %p457
      %p936 = pneg %p454
      %p937 = scmp.lt.s32.totalorder %s39, 1
      %s938 = scalar_select %p937, %s39, 1
      %s939 = scalar_lea.vmem %s16, %s938
      %p940 = pneg %p483
      %p941 = pneg %p480
      %p942 = scmp.lt.s32.totalorder %s39, 1
      %s943 = scalar_select %p942, %s39, 1
      %s944 = scalar_lea.vmem %s17, %s943
      %p945 = pneg %p509
      %p946 = pneg %p506
      %p947 = scmp.lt.s32.totalorder %s39, 1
      %s948 = scalar_select %p947, %s39, 1
      %s949 = scalar_lea.vmem %s18, %s948
      %p950 = pneg %p535
      %p951 = pneg %p532
      %p952 = scmp.lt.s32.totalorder %s39, 1
      %s953 = scalar_select %p952, %s39, 1
      %s954 = smul.addr %s953, 4
      %s955 = smul.addr %s954, 8
      %s956 = scalar_lea.vmem %s19, %s955
      %p957 = pneg %p561
      %p958 = pneg %p558
      %p959 = scmp.lt.s32.totalorder %s39, 1
      %s960 = scalar_select %p959, %s39, 1
      %s961 = scalar_lea.vmem %s20, %s960
      %p962 = pneg %p587
      %p963 = pneg %p584
      %p964 = scmp.lt.s32.totalorder %s39, 1
      %s965 = scalar_select %p964, %s39, 1
      %s966 = smul.addr %s965, 8
      %s967 = smul.addr %s966, 8
      %s968 = scalar_lea.vmem %s21, %s967
      %p969 = pneg %p613
      %p970 = pneg %p610
      %p971 = scmp.lt.s32.totalorder %s39, 1
      %s972 = scalar_select %p971, %s39, 1
      %s973 = scalar_lea.vmem %s22, %s972
      %p974 = pneg %p639
      %p975 = pneg %p636
      %p976 = pneg %p665
      %p977 = pneg %p662
      %p978 = scmp.lt.s32.totalorder %s38, 1
      %s979 = scalar_select %p978, %s38, 1
      %s980 = smul.addr %s979, 8
      %s981 = scalar_lea.vmem %s23, %s980
      %p982 = scmp.lt.s32.totalorder %s38, 1
      %s983 = scalar_select %p982, %s38, 1
      %s984 = smul.addr %s983, 8
      %s985 = scalar_lea.vmem %s0, %s984
      %p986 = scmp.lt.s32.totalorder %s38, 1
      %s987 = scalar_select %p986, %s38, 1
      %s988 = smul.addr %s987, 8
      %s989 = scalar_lea.vmem %s1, %s988
      %p990 = scmp.lt.s32.totalorder %s38, 1
      %s991 = scalar_select %p990, %s38, 1
      %s992 = scalar_lea.vmem %s2, %s991
      %p993 = scmp.lt.s32.totalorder %s39, 1
      %s994 = scalar_select %p993, %s39, 1
      %s995 = scalar_lea.vmem %s3, %s994
      %p996 = scmp.lt.s32.totalorder %s39, 1
      %s997 = scalar_select %p996, %s39, 1
      %s998 = scalar_lea.vmem %s4, %s997
      %p999 = scmp.lt.s32.totalorder %s39, 1
      %s1000 = scalar_select %p999, %s39, 1
      %s1001 = smul.addr %s1000, 4
      %s1002 = smul.addr %s1001, 8
      %s1003 = scalar_lea.vmem %s5, %s1002
      %p1004 = scmp.lt.s32.totalorder %s39, 1
      %s1005 = scalar_select %p1004, %s39, 1
      %s1006 = scalar_lea.vmem %s6, %s1005
      %p1007 = scmp.lt.s32.totalorder %s39, 1
      %s1008 = scalar_select %p1007, %s39, 1
      %s1009 = smul.addr %s1008, 4
      %s1010 = smul.addr %s1009, 8
      %s1011 = scalar_lea.vmem %s7, %s1010
      %p1012 = scmp.lt.s32.totalorder %s39, 1
      %s1013 = scalar_select %p1012, %s39, 1
      %s1014 = scalar_lea.vmem %s8, %s1013
      %p1015 = scmp.lt.s32.totalorder %s39, 1
      %s1016 = scalar_select %p1015, %s39, 1
      %s1017 = scalar_lea.vmem %s9, %s1016
      %p1018 = scmp.lt.s32.totalorder %s39, 1
      %s1019 = scalar_select %p1018, %s39, 1
      %s1020 = scalar_lea.vmem %s10, %s1019
      %p1021 = scmp.lt.s32.totalorder %s39, 1
      %s1022 = scalar_select %p1021, %s39, 1
      %s1023 = smul.addr %s1022, 4
      %s1024 = smul.addr %s1023, 8
      %s1025 = scalar_lea.vmem %s11, %s1024
      %p1026 = scmp.lt.s32.totalorder %s39, 1
      %s1027 = scalar_select %p1026, %s39, 1
      %s1028 = scalar_lea.vmem %s12, %s1027
      %p1029 = scmp.lt.s32.totalorder %s39, 1
      %s1030 = scalar_select %p1029, %s39, 1
      %s1031 = smul.addr %s1030, 4
      %s1032 = smul.addr %s1031, 8
      %s1033 = scalar_lea.vmem %s13, %s1032
      %p1034 = scmp.lt.s32.totalorder %s39, 1
      %s1035 = scalar_select %p1034, %s39, 1
      %s1036 = scalar_lea.vmem %s14, %s1035
      %p1037 = scmp.lt.s32.totalorder %s39, 1
      %s1038 = scalar_select %p1037, %s39, 1
      %s1039 = smul.addr %s1038, 4
      %s1040 = smul.addr %s1039, 8
      %s1041 = scalar_lea.vmem %s15, %s1040
      %p1042 = scmp.lt.s32.totalorder %s39, 1
      %s1043 = scalar_select %p1042, %s39, 1
      %s1044 = scalar_lea.vmem %s16, %s1043
      %p1045 = scmp.lt.s32.totalorder %s39, 1
      %s1046 = scalar_select %p1045, %s39, 1
      %s1047 = scalar_lea.vmem %s17, %s1046
      %p1048 = scmp.lt.s32.totalorder %s39, 1
      %s1049 = scalar_select %p1048, %s39, 1
      %s1050 = scalar_lea.vmem %s18, %s1049
      %p1051 = scmp.lt.s32.totalorder %s39, 1
      %s1052 = scalar_select %p1051, %s39, 1
      %s1053 = smul.addr %s1052, 4
      %s1054 = smul.addr %s1053, 8
      %s1055 = scalar_lea.vmem %s19, %s1054
      %p1056 = scmp.lt.s32.totalorder %s39, 1
      %s1057 = scalar_select %p1056, %s39, 1
      %s1058 = scalar_lea.vmem %s20, %s1057
      %p1059 = scmp.lt.s32.totalorder %s39, 1
      %s1060 = scalar_select %p1059, %s39, 1
      %s1061 = smul.addr %s1060, 8
      %s1062 = smul.addr %s1061, 8
      %s1063 = scalar_lea.vmem %s21, %s1062
      %p1064 = scmp.lt.s32.totalorder %s39, 1
      %s1065 = scalar_select %p1064, %s39, 1
      %s1066 = scalar_lea.vmem %s22, %s1065
      %p1067 = scmp.lt.s32.totalorder %s38, 1
      %s1068 = scalar_select %p1067, %s38, 1
      %s1069 = smul.addr %s1068, 8
      %s1070 = scalar_lea.vmem %s23, %s1069
      %p1071 = scmp.eq.s32.totalorder %s39, 0
      // Predicated region
      $region113: #{decoder_forward.4} parent=111 // pred_check
        %p1072 = pneg %p1071
      $region114: #{decoder_forward.4} parent=111 // pred_check_branch
        %1074 = sbr.rel (%p1072) target = $region116
      $region115: #{decoder_forward.4} parent=111 // pred_region
        %v1075 = vld [vmem:[%s985] sm:$0xff]
        %vm1076 = vcmask 261120
        %1077 = vst.msk [vmem:[#allocation2] sm:$0xff] %vm1076, %v1075
      $region116: #{decoder_forward.4} parent=111 // pred_fallthru
        _
      %v1078 = vld [vmem:[#allocation2] sm:$0xff]
      %v1079 = vld [vmem:[%s989] sm:$0xff]
      %v1080 = vld [vmem:[%s992] sm:$0x1]
      %v1081 = vld [vmem:[%s995] sm:$0x1]
      %v1082 = vld [vmem:[%s998] sm:$0x1]
      %vm1083 = vcmask 261120
      %v1084 = vsel %vm1083, %v1078, 0.0
      %1085 = vadd.xlane.f32.xlu0 %v1084
      %v1086 = vpop.xlane.xlu0 %1085
      %v1087 = vrcp.pop 32.0
      %v1088 = vmul.f32 32.0, %v1087
      %v1089 = vsub.f32 1.0, %v1088
      %v1090 = vmul.f32 %v1087, %v1089
      %v1091 = vadd.f32 %v1087, %v1090
      %vm1092 = vweird.f32 %v1087
      %v1093 = vsel %vm1092, %v1087, %v1091
      %v1094 = vmul.f32 %v1086, %v1093
      %v1095 = vsub.f32 %v1078, %v1094
      %v1096 = vmul.f32 %v1095, %v1095
      %v1097 = vsel %vm1083, %v1096, 0.0
      %1098 = vadd.xlane.f32.xlu0 %v1097
      %v1099 = vpop.xlane.xlu0 %1098
      %v1100 = vmul.f32 %v1099, %v1093
      %v1101 = vadd.f32 %v1100, 1e-05
      %v1102 = vrsqrt.pop %v1101
      %v1103 = vmul.f32 %v1102, %v1101
      %v1104 = vmul.f32 %v1103, %v1102
      %v1105 = vmul.f32 0.5, %v1104
      %v1106 = vsub.f32 1.5, %v1105
      %v1107 = vmul.f32 %v1102, %v1106
      %vm1108 = vweird.f32 %v1101
      %vm1109 = vweird.f32 %v1102
      %vm1110 = vmor %vm1108, %vm1109
      %v1111 = vsel %vm1110, %v1102, %v1107
      %v1112 = vmul.f32 %v1095, %v1111
      %v1114 = vperm.slane %v1081, 0
      %v1116 = vmul.f32 %v1112, %v1114
      %v1118 = vperm.slane %v1082, 0
      %v1120 = vadd.f32 %v1116, %v1118
      %v1121 = vld [vmem:[%s1003] sm:$0xff]
      %v1122 = vld [vmem:[%s1003 + $0x8] sm:$0xff]
      %v1123 = vld [vmem:[%s1003 + $0x10] sm:$0xff]
      %v1124 = vld [vmem:[%s1003 + $0x18] sm:$0xff]
      %v1125 = vld [vmem:[%s1006] sm:$0x1]
      %v1127 = vperm.slane %v1125, 0
      %v1130 = vsel %vm1083, %v1120, 0
      %1132 = vmatpush.msra.mxu0 0.0
      %1133 = vmatpush.msra.mxu0 0.0
      %1134 = vmatpush.msra.mxu0 0.0
      %1135 = vmatpush.msra.mxu0 0.0
      %1136 = vmatpush.msra.mxu0 0.0
      %1137 = vmatpush.msra.mxu0 0.0
      %1138 = vmatpush.msra.mxu0 0.0
      %1139 = vmatpush.msra.mxu0 0.0
      %1140 = vmatpush.msra.mxu0 0.0
      %1141 = vmatpush.msra.mxu0 0.0
      %1142 = vmatpush.msra.mxu0 0.0
      %1143 = vmatpush.msra.mxu0 0.0
      %1144 = vmatpush.msra.mxu0 %v1124
      %1145 = vmatpush.msra.mxu0 %v1123
      %1146 = vmatpush.msra.mxu0 %v1122
      %1147 = vmatpush.msra.mxu0 %v1121
      %1148 = vmatmul.f32.gmra.mxu0 %v1130
      %v1149 = vpop.f32.mrf.mxu0
      %v1150 = vadd.f32 %v1127, %v1149
      %1151 = vdwg.mxu0
      %1153 = vrot.lane.b32.xlu0 %v1150, 96
      %v1154 = vpop.permute.xlu0 %1153
      %vm1155 = vcmask 64512
      %v1156 = vsel %vm1155, %v1150, 0
      %v1158 = vsel %vm1155, %v1154, 0
      %1160 = vmatpush.xpose.msra.mxu0 0.0
      %1161 = vmatpush.xpose.msra.mxu0 0.0
      %1162 = vmatpush.xpose.msra.mxu0 0.0
      %1163 = vmatpush.xpose.msra.mxu0 0.0
      %1164 = vmatpush.xpose.msra.mxu0 0.0
      %1165 = vmatpush.xpose.msra.mxu0 0.0
      %1166 = vmatpush.xpose.msra.mxu0 0.0
      %1167 = vmatpush.xpose.msra.mxu0 0.0
      %1168 = vmatpush.xpose.msra.mxu0 0.0
      %1169 = vmatpush.xpose.msra.mxu0 0.0
      %1170 = vmatpush.xpose.msra.mxu0 0.0
      %1171 = vmatpush.xpose.msra.mxu0 0.0
      %1172 = vmatpush.xpose.msra.mxu0 0.0
      %1173 = vmatpush.xpose.msra.mxu0 0.0
      %1174 = vmatpush.xpose.msra.mxu0 0.0
      %1175 = vmatpush.xpose.msra.mxu0 %v1158
      %1176 = vmatmul.f32.gmra.mxu0 %v1156
      %v1177 = vpop.f32.mrf.mxu0
      %v1178 = vadd.f32 0.0, %v1177
      %1179 = vdwg.mxu0
      %v1180 = vmul.f32 %v1178, 0.35355338
      %v1182 = vperm.slane %v1080, 0
      %v1184 = vadd.f32 %v1180, %v1182
      %v1185 = vsel %vm1155, %v1184, -inf
      %1186 = vmax.xlane.f32.xlu0 %v1185
      %v1187 = vpop.xlane.xlu0 %1186
      %v1188 = vsub.f32 %v1184, %v1187
      %v1189 = vmul.f32 %v1188, 1.442695
      %v1190 = vpow.pop %v1189
      %v1191 = vsel %vm1155, %v1190, 0.0
      %1192 = vadd.xlane.f32.xlu0 %v1191
      %v1193 = vpop.xlane.xlu0 %1192
      %1194 = vrot.lane.b32.xlu0 %v1150, 64
      %v1195 = vpop.permute.xlu0 %1194
      %v1198 = vsel %vm1155, %v1190, 0
      %1200 = vmatpush.msra.mxu0 0.0
      %1201 = vmatpush.msra.mxu0 0.0
      %1202 = vmatpush.msra.mxu0 0.0
      %1203 = vmatpush.msra.mxu0 0.0
      %1204 = vmatpush.msra.mxu0 0.0
      %1205 = vmatpush.msra.mxu0 0.0
      %1206 = vmatpush.msra.mxu0 0.0
      %1207 = vmatpush.msra.mxu0 0.0
      %1208 = vmatpush.msra.mxu0 0.0
      %1209 = vmatpush.msra.mxu0 0.0
      %1210 = vmatpush.msra.mxu0 0.0
      %1211 = vmatpush.msra.mxu0 0.0
      %1212 = vmatpush.msra.mxu0 0.0
      %1213 = vmatpush.msra.mxu0 0.0
      %1214 = vmatpush.msra.mxu0 0.0
      %1215 = vmatpush.msra.mxu0 %v1195
      %1216 = vmatmul.f32.gmra.mxu0 %v1198
      %v1217 = vpop.f32.mrf.mxu0
      %v1218 = vadd.f32 0.0, %v1217
      %1219 = vdwg.mxu0
      %v1220 = vrcp.pop %v1193
      %v1221 = vmul.f32 %v1193, %v1220
      %v1222 = vsub.f32 1.0, %v1221
      %v1223 = vmul.f32 %v1220, %v1222
      %v1224 = vadd.f32 %v1220, %v1223
      %vm1225 = vweird.f32 %v1193
      %vm1226 = vweird.f32 %v1220
      %vm1227 = vmor %vm1225, %vm1226
      %v1228 = vsel %vm1227, %v1220, %v1224
      %v1229 = vand.u32 2147483647, %v1193
      %vm1230 = vcmp.eq.f32.partialorder %v1229, 8.507059e+37
      %v1231 = vand.u32 %v1193, 2147483648
      %v1232 = vor.u32 1.1754944e-38, %v1231
      %v1233 = vsel %vm1230, %v1232, %v1228
      %v1234 = vmul.f32 %v1218, %v1233
      %1235 = vrot.lane.b32.xlu0 %v1150, 120
      %v1236 = vpop.permute.xlu0 %1235
      %1237 = vrot.lane.b32.xlu0 %v1150, 88
      %v1238 = vpop.permute.xlu0 %1237
      %v1239 = vsel %vm1155, %v1236, 0
      %v1241 = vsel %vm1155, %v1238, 0
      %1243 = vmatpush.xpose.msra.mxu0 0.0
      %1244 = vmatpush.xpose.msra.mxu0 0.0
      %1245 = vmatpush.xpose.msra.mxu0 0.0
      %1246 = vmatpush.xpose.msra.mxu0 0.0
      %1247 = vmatpush.xpose.msra.mxu0 0.0
      %1248 = vmatpush.xpose.msra.mxu0 0.0
      %1249 = vmatpush.xpose.msra.mxu0 0.0
      %1250 = vmatpush.xpose.msra.mxu0 0.0
      %1251 = vmatpush.xpose.msra.mxu0 0.0
      %1252 = vmatpush.xpose.msra.mxu0 0.0
      %1253 = vmatpush.xpose.msra.mxu0 0.0
      %1254 = vmatpush.xpose.msra.mxu0 0.0
      %1255 = vmatpush.xpose.msra.mxu0 0.0
      %1256 = vmatpush.xpose.msra.mxu0 0.0
      %1257 = vmatpush.xpose.msra.mxu0 0.0
      %1258 = vmatpush.xpose.msra.mxu0 %v1241
      %1259 = vmatmul.f32.gmra.mxu0 %v1239
      %v1260 = vpop.f32.mrf.mxu0
      %v1261 = vadd.f32 0.0, %v1260
      %1262 = vdwg.mxu0
      %v1263 = vmul.f32 %v1261, 0.35355338
      %v1264 = vadd.f32 %v1263, %v1182
      %v1265 = vsel %vm1155, %v1264, -inf
      %1266 = vmax.xlane.f32.xlu0 %v1265
      %v1267 = vpop.xlane.xlu0 %1266
      %v1268 = vsub.f32 %v1264, %v1267
      %v1269 = vmul.f32 %v1268, 1.442695
      %v1270 = vpow.pop %v1269
      %v1271 = vsel %vm1155, %v1270, 0.0
      %1272 = vadd.xlane.f32.xlu0 %v1271
      %v1273 = vpop.xlane.xlu0 %1272
      %1274 = vrot.lane.b32.xlu0 %v1150, 56
      %v1275 = vpop.permute.xlu0 %1274
      %v1278 = vsel %vm1155, %v1270, 0
      %1280 = vmatpush.msra.mxu0 0.0
      %1281 = vmatpush.msra.mxu0 0.0
      %1282 = vmatpush.msra.mxu0 0.0
      %1283 = vmatpush.msra.mxu0 0.0
      %1284 = vmatpush.msra.mxu0 0.0
      %1285 = vmatpush.msra.mxu0 0.0
      %1286 = vmatpush.msra.mxu0 0.0
      %1287 = vmatpush.msra.mxu0 0.0
      %1288 = vmatpush.msra.mxu0 0.0
      %1289 = vmatpush.msra.mxu0 0.0
      %1290 = vmatpush.msra.mxu0 0.0
      %1291 = vmatpush.msra.mxu0 0.0
      %1292 = vmatpush.msra.mxu0 0.0
      %1293 = vmatpush.msra.mxu0 0.0
      %1294 = vmatpush.msra.mxu0 0.0
      %1295 = vmatpush.msra.mxu0 %v1275
      %1296 = vmatmul.f32.gmra.mxu0 %v1278
      %v1297 = vpop.f32.mrf.mxu0
      %v1298 = vadd.f32 0.0, %v1297
      %1299 = vdwg.mxu0
      %v1300 = vrcp.pop %v1273
      %v1301 = vmul.f32 %v1273, %v1300
      %v1302 = vsub.f32 1.0, %v1301
      %v1303 = vmul.f32 %v1300, %v1302
      %v1304 = vadd.f32 %v1300, %v1303
      %vm1305 = vweird.f32 %v1273
      %vm1306 = vweird.f32 %v1300
      %vm1307 = vmor %vm1305, %vm1306
      %v1308 = vsel %vm1307, %v1300, %v1304
      %v1309 = vand.u32 2147483647, %v1273
      %vm1310 = vcmp.eq.f32.partialorder %v1309, 8.507059e+37
      %v1311 = vand.u32 %v1273, 2147483648
      %v1312 = vor.u32 1.1754944e-38, %v1311
      %v1313 = vsel %vm1310, %v1312, %v1308
      %v1314 = vmul.f32 %v1298, %v1313
      %1315 = vrot.lane.b32.xlu0 %v1150, 112
      %v1316 = vpop.permute.xlu0 %1315
      %1317 = vrot.lane.b32.xlu0 %v1150, 80
      %v1318 = vpop.permute.xlu0 %1317
      %v1319 = vsel %vm1155, %v1316, 0
      %v1321 = vsel %vm1155, %v1318, 0
      %1323 = vmatpush.xpose.msra.mxu0 0.0
      %1324 = vmatpush.xpose.msra.mxu0 0.0
      %1325 = vmatpush.xpose.msra.mxu0 0.0
      %1326 = vmatpush.xpose.msra.mxu0 0.0
      %1327 = vmatpush.xpose.msra.mxu0 0.0
      %1328 = vmatpush.xpose.msra.mxu0 0.0
      %1329 = vmatpush.xpose.msra.mxu0 0.0
      %1330 = vmatpush.xpose.msra.mxu0 0.0
      %1331 = vmatpush.xpose.msra.mxu0 0.0
      %1332 = vmatpush.xpose.msra.mxu0 0.0
      %1333 = vmatpush.xpose.msra.mxu0 0.0
      %1334 = vmatpush.xpose.msra.mxu0 0.0
      %1335 = vmatpush.xpose.msra.mxu0 0.0
      %1336 = vmatpush.xpose.msra.mxu0 0.0
      %1337 = vmatpush.xpose.msra.mxu0 0.0
      %1338 = vmatpush.xpose.msra.mxu0 %v1321
      %1339 = vmatmul.f32.gmra.mxu0 %v1319
      %v1340 = vpop.f32.mrf.mxu0
      %v1341 = vadd.f32 0.0, %v1340
      %1342 = vdwg.mxu0
      %v1343 = vmul.f32 %v1341, 0.35355338
      %v1344 = vadd.f32 %v1343, %v1182
      %v1345 = vsel %vm1155, %v1344, -inf
      %1346 = vmax.xlane.f32.xlu0 %v1345
      %v1347 = vpop.xlane.xlu0 %1346
      %v1348 = vsub.f32 %v1344, %v1347
      %v1349 = vmul.f32 %v1348, 1.442695
      %v1350 = vpow.pop %v1349
      %v1351 = vsel %vm1155, %v1350, 0.0
      %1352 = vadd.xlane.f32.xlu0 %v1351
      %v1353 = vpop.xlane.xlu0 %1352
      %1354 = vrot.lane.b32.xlu0 %v1150, 48
      %v1355 = vpop.permute.xlu0 %1354
      %v1358 = vsel %vm1155, %v1350, 0
      %1360 = vmatpush.msra.mxu0 0.0
      %1361 = vmatpush.msra.mxu0 0.0
      %1362 = vmatpush.msra.mxu0 0.0
      %1363 = vmatpush.msra.mxu0 0.0
      %1364 = vmatpush.msra.mxu0 0.0
      %1365 = vmatpush.msra.mxu0 0.0
      %1366 = vmatpush.msra.mxu0 0.0
      %1367 = vmatpush.msra.mxu0 0.0
      %1368 = vmatpush.msra.mxu0 0.0
      %1369 = vmatpush.msra.mxu0 0.0
      %1370 = vmatpush.msra.mxu0 0.0
      %1371 = vmatpush.msra.mxu0 0.0
      %1372 = vmatpush.msra.mxu0 0.0
      %1373 = vmatpush.msra.mxu0 0.0
      %1374 = vmatpush.msra.mxu0 0.0
      %1375 = vmatpush.msra.mxu0 %v1355
      %1376 = vmatmul.f32.gmra.mxu0 %v1358
      %v1377 = vpop.f32.mrf.mxu0
      %v1378 = vadd.f32 0.0, %v1377
      %1379 = vdwg.mxu0
      %v1380 = vrcp.pop %v1353
      %v1381 = vmul.f32 %v1353, %v1380
      %v1382 = vsub.f32 1.0, %v1381
      %v1383 = vmul.f32 %v1380, %v1382
      %v1384 = vadd.f32 %v1380, %v1383
      %vm1385 = vweird.f32 %v1353
      %vm1386 = vweird.f32 %v1380
      %vm1387 = vmor %vm1385, %vm1386
      %v1388 = vsel %vm1387, %v1380, %v1384
      %v1389 = vand.u32 2147483647, %v1353
      %vm1390 = vcmp.eq.f32.partialorder %v1389, 8.507059e+37
      %v1391 = vand.u32 %v1353, 2147483648
      %v1392 = vor.u32 1.1754944e-38, %v1391
      %v1393 = vsel %vm1390, %v1392, %v1388
      %v1394 = vmul.f32 %v1378, %v1393
      %1395 = vrot.lane.b32.xlu0 %v1150, 104
      %v1396 = vpop.permute.xlu0 %1395
      %1397 = vrot.lane.b32.xlu0 %v1150, 72
      %v1398 = vpop.permute.xlu0 %1397
      %v1399 = vsel %vm1155, %v1396, 0
      %v1401 = vsel %vm1155, %v1398, 0
      %1403 = vmatpush.xpose.msra.mxu0 0.0
      %1404 = vmatpush.xpose.msra.mxu0 0.0
      %1405 = vmatpush.xpose.msra.mxu0 0.0
      %1406 = vmatpush.xpose.msra.mxu0 0.0
      %1407 = vmatpush.xpose.msra.mxu0 0.0
      %1408 = vmatpush.xpose.msra.mxu0 0.0
      %1409 = vmatpush.xpose.msra.mxu0 0.0
      %1410 = vmatpush.xpose.msra.mxu0 0.0
      %1411 = vmatpush.xpose.msra.mxu0 0.0
      %1412 = vmatpush.xpose.msra.mxu0 0.0
      %1413 = vmatpush.xpose.msra.mxu0 0.0
      %1414 = vmatpush.xpose.msra.mxu0 0.0
      %1415 = vmatpush.xpose.msra.mxu0 0.0
      %1416 = vmatpush.xpose.msra.mxu0 0.0
      %1417 = vmatpush.xpose.msra.mxu0 0.0
      %1418 = vmatpush.xpose.msra.mxu0 %v1401
      %1419 = vmatmul.f32.gmra.mxu0 %v1399
      %v1420 = vpop.f32.mrf.mxu0
      %v1421 = vadd.f32 0.0, %v1420
      %1422 = vdwg.mxu0
      %v1423 = vmul.f32 %v1421, 0.35355338
      %v1424 = vadd.f32 %v1423, %v1182
      %v1425 = vsel %vm1155, %v1424, -inf
      %1426 = vmax.xlane.f32.xlu0 %v1425
      %v1427 = vpop.xlane.xlu0 %1426
      %v1428 = vsub.f32 %v1424, %v1427
      %v1429 = vmul.f32 %v1428, 1.442695
      %v1430 = vpow.pop %v1429
      %v1431 = vsel %vm1155, %v1430, 0.0
      %1432 = vadd.xlane.f32.xlu0 %v1431
      %v1433 = vpop.xlane.xlu0 %1432
      %1434 = vrot.lane.b32.xlu0 %v1150, 40
      %v1435 = vpop.permute.xlu0 %1434
      %v1438 = vsel %vm1155, %v1430, 0
      %1440 = vmatpush.msra.mxu0 0.0
      %1441 = vmatpush.msra.mxu0 0.0
      %1442 = vmatpush.msra.mxu0 0.0
      %1443 = vmatpush.msra.mxu0 0.0
      %1444 = vmatpush.msra.mxu0 0.0
      %1445 = vmatpush.msra.mxu0 0.0
      %1446 = vmatpush.msra.mxu0 0.0
      %1447 = vmatpush.msra.mxu0 0.0
      %1448 = vmatpush.msra.mxu0 0.0
      %1449 = vmatpush.msra.mxu0 0.0
      %1450 = vmatpush.msra.mxu0 0.0
      %1451 = vmatpush.msra.mxu0 0.0
      %1452 = vmatpush.msra.mxu0 0.0
      %1453 = vmatpush.msra.mxu0 0.0
      %1454 = vmatpush.msra.mxu0 0.0
      %1455 = vmatpush.msra.mxu0 %v1435
      %1456 = vmatmul.f32.gmra.mxu0 %v1438
      %v1457 = vpop.f32.mrf.mxu0
      %v1458 = vadd.f32 0.0, %v1457
      %1459 = vdwg.mxu0
      %v1460 = vrcp.pop %v1433
      %v1461 = vmul.f32 %v1433, %v1460
      %v1462 = vsub.f32 1.0, %v1461
      %v1463 = vmul.f32 %v1460, %v1462
      %v1464 = vadd.f32 %v1460, %v1463
      %vm1465 = vweird.f32 %v1433
      %vm1466 = vweird.f32 %v1460
      %vm1467 = vmor %vm1465, %vm1466
      %v1468 = vsel %vm1467, %v1460, %v1464
      %v1469 = vand.u32 2147483647, %v1433
      %vm1470 = vcmp.eq.f32.partialorder %v1469, 8.507059e+37
      %v1471 = vand.u32 %v1433, 2147483648
      %v1472 = vor.u32 1.1754944e-38, %v1471
      %v1473 = vsel %vm1470, %v1472, %v1468
      %v1474 = vmul.f32 %v1458, %v1473
      %1476 = vrot.lane.b32.xlu0 %v1314, 8
      %v1477 = vpop.permute.xlu0 %1476
      %1480 = vrot.lane.b32.xlu0 %v1394, 16
      %v1481 = vpop.permute.xlu0 %1480
      %1484 = vrot.lane.b32.xlu0 %v1474, 24
      %v1485 = vpop.permute.xlu0 %1484
      %v1487 = vsel %vm1155, %v1234, %v1477
      %vm1488 = vcmask 130048
      %v1489 = vsel %vm1488, %v1487, %v1481
      %vm1490 = vcmask 195584
      %v1491 = vsel %vm1490, %v1489, %v1485
      %v1492 = vld [vmem:[%s1011] sm:$0xff]
      %v1493 = vld [vmem:[%s1011 + $0x8] sm:$0xff]
      %v1494 = vld [vmem:[%s1011 + $0x10] sm:$0xff]
      %v1495 = vld [vmem:[%s1011 + $0x18] sm:$0xff]
      %v1497 = vsel %vm1083, %v1491, 0
      %1499 = vmatpush.msra.mxu0 0.0
      %1500 = vmatpush.msra.mxu0 0.0
      %1501 = vmatpush.msra.mxu0 0.0
      %1502 = vmatpush.msra.mxu0 0.0
      %1503 = vmatpush.msra.mxu0 0.0
      %1504 = vmatpush.msra.mxu0 0.0
      %1505 = vmatpush.msra.mxu0 0.0
      %1506 = vmatpush.msra.mxu0 0.0
      %1507 = vmatpush.msra.mxu0 0.0
      %1508 = vmatpush.msra.mxu0 0.0
      %1509 = vmatpush.msra.mxu0 0.0
      %1510 = vmatpush.msra.mxu0 0.0
      %1511 = vmatpush.msra.mxu0 %v1495
      %1512 = vmatpush.msra.mxu0 %v1494
      %1513 = vmatpush.msra.mxu0 %v1493
      %1514 = vmatpush.msra.mxu0 %v1492
      %1515 = vmatmul.f32.gmra.mxu0 %v1497
      %v1516 = vpop.f32.mrf.mxu0
      %v1517 = vadd.f32 0.0, %v1516
      %1518 = vdwg.mxu0
      %v1519 = vadd.f32 %v1078, %v1517
      %v1520 = vld [vmem:[%s1014] sm:$0x1]
      %v1522 = vperm.slane %v1520, 0
      %v1524 = vadd.f32 %v1519, %v1522
      %v1525 = vld [vmem:[%s1017] sm:$0x1]
      %v1526 = vld [vmem:[%s1020] sm:$0x1]
      %v1527 = vsel %vm1083, %v1524, 0.0
      %1528 = vadd.xlane.f32.xlu0 %v1527
      %v1529 = vpop.xlane.xlu0 %1528
      %v1530 = vmul.f32 %v1529, %v1093
      %v1531 = vsub.f32 %v1524, %v1530
      %v1532 = vmul.f32 %v1531, %v1531
      %v1533 = vsel %vm1083, %v1532, 0.0
      %1534 = vadd.xlane.f32.xlu0 %v1533
      %v1535 = vpop.xlane.xlu0 %1534
      %v1536 = vmul.f32 %v1535, %v1093
      %v1537 = vadd.f32 %v1536, 1e-05
      %v1538 = vrsqrt.pop %v1537
      %v1539 = vmul.f32 %v1538, %v1537
      %v1540 = vmul.f32 %v1539, %v1538
      %v1541 = vmul.f32 0.5, %v1540
      %v1542 = vsub.f32 1.5, %v1541
      %v1543 = vmul.f32 %v1538, %v1542
      %vm1544 = vweird.f32 %v1537
      %vm1545 = vweird.f32 %v1538
      %vm1546 = vmor %vm1544, %vm1545
      %v1547 = vsel %vm1546, %v1538, %v1543
      %v1548 = vmul.f32 %v1531, %v1547
      %v1550 = vperm.slane %v1525, 0
      %v1552 = vmul.f32 %v1548, %v1550
      %v1554 = vperm.slane %v1526, 0
      %v1556 = vadd.f32 %v1552, %v1554
      %v1557 = vld [vmem:[%s1025] sm:$0xff]
      %v1558 = vld [vmem:[%s1025 + $0x8] sm:$0xff]
      %v1559 = vld [vmem:[%s1025 + $0x10] sm:$0xff]
      %v1560 = vld [vmem:[%s1025 + $0x18] sm:$0xff]
      %v1561 = vld [vmem:[%s1028] sm:$0x1]
      %v1563 = vperm.slane %v1561, 0
      %v1566 = vsel %vm1083, %v1556, 0
      %1568 = vmatpush.msra.mxu0 0.0
      %1569 = vmatpush.msra.mxu0 0.0
      %1570 = vmatpush.msra.mxu0 0.0
      %1571 = vmatpush.msra.mxu0 0.0
      %1572 = vmatpush.msra.mxu0 0.0
      %1573 = vmatpush.msra.mxu0 0.0
      %1574 = vmatpush.msra.mxu0 0.0
      %1575 = vmatpush.msra.mxu0 0.0
      %1576 = vmatpush.msra.mxu0 0.0
      %1577 = vmatpush.msra.mxu0 0.0
      %1578 = vmatpush.msra.mxu0 0.0
      %1579 = vmatpush.msra.mxu0 0.0
      %1580 = vmatpush.msra.mxu0 %v1560
      %1581 = vmatpush.msra.mxu0 %v1559
      %1582 = vmatpush.msra.mxu0 %v1558
      %1583 = vmatpush.msra.mxu0 %v1557
      %1584 = vmatmul.f32.gmra.mxu0 %v1566
      %v1585 = vpop.f32.mrf.mxu0
      %v1586 = vadd.f32 %v1563, %v1585
      %1587 = vdwg.mxu0
      %v1588 = vld [vmem:[%s1033] sm:$0xff]
      %v1589 = vld [vmem:[%s1033 + $0x8] sm:$0xff]
      %v1590 = vld [vmem:[%s1033 + $0x10] sm:$0xff]
      %v1591 = vld [vmem:[%s1033 + $0x18] sm:$0xff]
      %v1592 = vld [vmem:[%s1036] sm:$0x1]
      %v1594 = vperm.slane %v1592, 0
      %v1597 = vsel %vm1083, %v1079, 0
      %1599 = vmatpush.msra.mxu0 0.0
      %1600 = vmatpush.msra.mxu0 0.0
      %1601 = vmatpush.msra.mxu0 0.0
      %1602 = vmatpush.msra.mxu0 0.0
      %1603 = vmatpush.msra.mxu0 0.0
      %1604 = vmatpush.msra.mxu0 0.0
      %1605 = vmatpush.msra.mxu0 0.0
      %1606 = vmatpush.msra.mxu0 0.0
      %1607 = vmatpush.msra.mxu0 0.0
      %1608 = vmatpush.msra.mxu0 0.0
      %1609 = vmatpush.msra.mxu0 0.0
      %1610 = vmatpush.msra.mxu0 0.0
      %1611 = vmatpush.msra.mxu0 %v1591
      %1612 = vmatpush.msra.mxu0 %v1590
      %1613 = vmatpush.msra.mxu0 %v1589
      %1614 = vmatpush.msra.mxu0 %v1588
      %1615 = vmatmul.f32.gmra.mxu0 %v1597
      %v1616 = vpop.f32.mrf.mxu0
      %v1617 = vadd.f32 %v1594, %v1616
      %1618 = vdwg.mxu0
      %v1620 = vsel %vm1155, %v1586, 0
      %v1623 = vsel %vm1155, %v1617, 0
      %1625 = vmatpush.xpose.msra.mxu0 0.0
      %1626 = vmatpush.xpose.msra.mxu0 0.0
      %1627 = vmatpush.xpose.msra.mxu0 0.0
      %1628 = vmatpush.xpose.msra.mxu0 0.0
      %1629 = vmatpush.xpose.msra.mxu0 0.0
      %1630 = vmatpush.xpose.msra.mxu0 0.0
      %1631 = vmatpush.xpose.msra.mxu0 0.0
      %1632 = vmatpush.xpose.msra.mxu0 0.0
      %1633 = vmatpush.xpose.msra.mxu0 0.0
      %1634 = vmatpush.xpose.msra.mxu0 0.0
      %1635 = vmatpush.xpose.msra.mxu0 0.0
      %1636 = vmatpush.xpose.msra.mxu0 0.0
      %1637 = vmatpush.xpose.msra.mxu0 0.0
      %1638 = vmatpush.xpose.msra.mxu0 0.0
      %1639 = vmatpush.xpose.msra.mxu0 0.0
      %1640 = vmatpush.xpose.msra.mxu0 %v1623
      %1641 = vmatmul.f32.gmra.mxu0 %v1620
      %v1642 = vpop.f32.mrf.mxu0
      %v1643 = vadd.f32 0.0, %v1642
      %1644 = vdwg.mxu0
      %v1645 = vmul.f32 %v1643, 0.35355338
      %v1646 = vadd.f32 %v1645, %v1182
      %v1647 = vsel %vm1155, %v1646, -inf
      %1648 = vmax.xlane.f32.xlu0 %v1647
      %v1649 = vpop.xlane.xlu0 %1648
      %v1650 = vsub.f32 %v1646, %v1649
      %v1651 = vmul.f32 %v1650, 1.442695
      %v1652 = vpow.pop %v1651
      %v1653 = vsel %vm1155, %v1652, 0.0
      %1654 = vadd.xlane.f32.xlu0 %v1653
      %v1655 = vpop.xlane.xlu0 %1654
      %1656 = vrot.lane.b32.xlu0 %v1617, 96
      %v1657 = vpop.permute.xlu0 %1656
      %v1660 = vsel %vm1155, %v1652, 0
      %1662 = vmatpush.msra.mxu0 0.0
      %1663 = vmatpush.msra.mxu0 0.0
      %1664 = vmatpush.msra.mxu0 0.0
      %1665 = vmatpush.msra.mxu0 0.0
      %1666 = vmatpush.msra.mxu0 0.0
      %1667 = vmatpush.msra.mxu0 0.0
      %1668 = vmatpush.msra.mxu0 0.0
      %1669 = vmatpush.msra.mxu0 0.0
      %1670 = vmatpush.msra.mxu0 0.0
      %1671 = vmatpush.msra.mxu0 0.0
      %1672 = vmatpush.msra.mxu0 0.0
      %1673 = vmatpush.msra.mxu0 0.0
      %1674 = vmatpush.msra.mxu0 0.0
      %1675 = vmatpush.msra.mxu0 0.0
      %1676 = vmatpush.msra.mxu0 0.0
      %1677 = vmatpush.msra.mxu0 %v1657
      %1678 = vmatmul.f32.gmra.mxu0 %v1660
      %v1679 = vpop.f32.mrf.mxu0
      %v1680 = vadd.f32 0.0, %v1679
      %1681 = vdwg.mxu0
      %v1682 = vrcp.pop %v1655
      %v1683 = vmul.f32 %v1655, %v1682
      %v1684 = vsub.f32 1.0, %v1683
      %v1685 = vmul.f32 %v1682, %v1684
      %v1686 = vadd.f32 %v1682, %v1685
      %vm1687 = vweird.f32 %v1655
      %vm1688 = vweird.f32 %v1682
      %vm1689 = vmor %vm1687, %vm1688
      %v1690 = vsel %vm1689, %v1682, %v1686
      %v1691 = vand.u32 2147483647, %v1655
      %vm1692 = vcmp.eq.f32.partialorder %v1691, 8.507059e+37
      %v1693 = vand.u32 %v1655, 2147483648
      %v1694 = vor.u32 1.1754944e-38, %v1693
      %v1695 = vsel %vm1692, %v1694, %v1690
      %v1696 = vmul.f32 %v1680, %v1695
      %1697 = vrot.lane.b32.xlu0 %v1586, 120
      %v1698 = vpop.permute.xlu0 %1697
      %1699 = vrot.lane.b32.xlu0 %v1617, 120
      %v1700 = vpop.permute.xlu0 %1699
      %v1701 = vsel %vm1155, %v1698, 0
      %v1703 = vsel %vm1155, %v1700, 0
      %1705 = vmatpush.xpose.msra.mxu0 0.0
      %1706 = vmatpush.xpose.msra.mxu0 0.0
      %1707 = vmatpush.xpose.msra.mxu0 0.0
      %1708 = vmatpush.xpose.msra.mxu0 0.0
      %1709 = vmatpush.xpose.msra.mxu0 0.0
      %1710 = vmatpush.xpose.msra.mxu0 0.0
      %1711 = vmatpush.xpose.msra.mxu0 0.0
      %1712 = vmatpush.xpose.msra.mxu0 0.0
      %1713 = vmatpush.xpose.msra.mxu0 0.0
      %1714 = vmatpush.xpose.msra.mxu0 0.0
      %1715 = vmatpush.xpose.msra.mxu0 0.0
      %1716 = vmatpush.xpose.msra.mxu0 0.0
      %1717 = vmatpush.xpose.msra.mxu0 0.0
      %1718 = vmatpush.xpose.msra.mxu0 0.0
      %1719 = vmatpush.xpose.msra.mxu0 0.0
      %1720 = vmatpush.xpose.msra.mxu0 %v1703
      %1721 = vmatmul.f32.gmra.mxu0 %v1701
      %v1722 = vpop.f32.mrf.mxu0
      %v1723 = vadd.f32 0.0, %v1722
      %1724 = vdwg.mxu0
      %v1725 = vmul.f32 %v1723, 0.35355338
      %v1726 = vadd.f32 %v1725, %v1182
      %v1727 = vsel %vm1155, %v1726, -inf
      %1728 = vmax.xlane.f32.xlu0 %v1727
      %v1729 = vpop.xlane.xlu0 %1728
      %v1730 = vsub.f32 %v1726, %v1729
      %v1731 = vmul.f32 %v1730, 1.442695
      %v1732 = vpow.pop %v1731
      %v1733 = vsel %vm1155, %v1732, 0.0
      %1734 = vadd.xlane.f32.xlu0 %v1733
      %v1735 = vpop.xlane.xlu0 %1734
      %1736 = vrot.lane.b32.xlu0 %v1617, 88
      %v1737 = vpop.permute.xlu0 %1736
      %v1740 = vsel %vm1155, %v1732, 0
      %1742 = vmatpush.msra.mxu0 0.0
      %1743 = vmatpush.msra.mxu0 0.0
      %1744 = vmatpush.msra.mxu0 0.0
      %1745 = vmatpush.msra.mxu0 0.0
      %1746 = vmatpush.msra.mxu0 0.0
      %1747 = vmatpush.msra.mxu0 0.0
      %1748 = vmatpush.msra.mxu0 0.0
      %1749 = vmatpush.msra.mxu0 0.0
      %1750 = vmatpush.msra.mxu0 0.0
      %1751 = vmatpush.msra.mxu0 0.0
      %1752 = vmatpush.msra.mxu0 0.0
      %1753 = vmatpush.msra.mxu0 0.0
      %1754 = vmatpush.msra.mxu0 0.0
      %1755 = vmatpush.msra.mxu0 0.0
      %1756 = vmatpush.msra.mxu0 0.0
      %1757 = vmatpush.msra.mxu0 %v1737
      %1758 = vmatmul.f32.gmra.mxu0 %v1740
      %v1759 = vpop.f32.mrf.mxu0
      %v1760 = vadd.f32 0.0, %v1759
      %1761 = vdwg.mxu0
      %v1762 = vrcp.pop %v1735
      %v1763 = vmul.f32 %v1735, %v1762
      %v1764 = vsub.f32 1.0, %v1763
      %v1765 = vmul.f32 %v1762, %v1764
      %v1766 = vadd.f32 %v1762, %v1765
      %vm1767 = vweird.f32 %v1735
      %vm1768 = vweird.f32 %v1762
      %vm1769 = vmor %vm1767, %vm1768
      %v1770 = vsel %vm1769, %v1762, %v1766
      %v1771 = vand.u32 2147483647, %v1735
      %vm1772 = vcmp.eq.f32.partialorder %v1771, 8.507059e+37
      %v1773 = vand.u32 %v1735, 2147483648
      %v1774 = vor.u32 1.1754944e-38, %v1773
      %v1775 = vsel %vm1772, %v1774, %v1770
      %v1776 = vmul.f32 %v1760, %v1775
      %1777 = vrot.lane.b32.xlu0 %v1586, 112
      %v1778 = vpop.permute.xlu0 %1777
      %1779 = vrot.lane.b32.xlu0 %v1617, 112
      %v1780 = vpop.permute.xlu0 %1779
      %v1781 = vsel %vm1155, %v1778, 0
      %v1783 = vsel %vm1155, %v1780, 0
      %1785 = vmatpush.xpose.msra.mxu0 0.0
      %1786 = vmatpush.xpose.msra.mxu0 0.0
      %1787 = vmatpush.xpose.msra.mxu0 0.0
      %1788 = vmatpush.xpose.msra.mxu0 0.0
      %1789 = vmatpush.xpose.msra.mxu0 0.0
      %1790 = vmatpush.xpose.msra.mxu0 0.0
      %1791 = vmatpush.xpose.msra.mxu0 0.0
      %1792 = vmatpush.xpose.msra.mxu0 0.0
      %1793 = vmatpush.xpose.msra.mxu0 0.0
      %1794 = vmatpush.xpose.msra.mxu0 0.0
      %1795 = vmatpush.xpose.msra.mxu0 0.0
      %1796 = vmatpush.xpose.msra.mxu0 0.0
      %1797 = vmatpush.xpose.msra.mxu0 0.0
      %1798 = vmatpush.xpose.msra.mxu0 0.0
      %1799 = vmatpush.xpose.msra.mxu0 0.0
      %1800 = vmatpush.xpose.msra.mxu0 %v1783
      %1801 = vmatmul.f32.gmra.mxu0 %v1781
      %v1802 = vpop.f32.mrf.mxu0
      %v1803 = vadd.f32 0.0, %v1802
      %1804 = vdwg.mxu0
      %v1805 = vmul.f32 %v1803, 0.35355338
      %v1806 = vadd.f32 %v1805, %v1182
      %v1807 = vsel %vm1155, %v1806, -inf
      %1808 = vmax.xlane.f32.xlu0 %v1807
      %v1809 = vpop.xlane.xlu0 %1808
      %v1810 = vsub.f32 %v1806, %v1809
      %v1811 = vmul.f32 %v1810, 1.442695
      %v1812 = vpow.pop %v1811
      %v1813 = vsel %vm1155, %v1812, 0.0
      %1814 = vadd.xlane.f32.xlu0 %v1813
      %v1815 = vpop.xlane.xlu0 %1814
      %1816 = vrot.lane.b32.xlu0 %v1617, 80
      %v1817 = vpop.permute.xlu0 %1816
      %v1820 = vsel %vm1155, %v1812, 0
      %1822 = vmatpush.msra.mxu0 0.0
      %1823 = vmatpush.msra.mxu0 0.0
      %1824 = vmatpush.msra.mxu0 0.0
      %1825 = vmatpush.msra.mxu0 0.0
      %1826 = vmatpush.msra.mxu0 0.0
      %1827 = vmatpush.msra.mxu0 0.0
      %1828 = vmatpush.msra.mxu0 0.0
      %1829 = vmatpush.msra.mxu0 0.0
      %1830 = vmatpush.msra.mxu0 0.0
      %1831 = vmatpush.msra.mxu0 0.0
      %1832 = vmatpush.msra.mxu0 0.0
      %1833 = vmatpush.msra.mxu0 0.0
      %1834 = vmatpush.msra.mxu0 0.0
      %1835 = vmatpush.msra.mxu0 0.0
      %1836 = vmatpush.msra.mxu0 0.0
      %1837 = vmatpush.msra.mxu0 %v1817
      %1838 = vmatmul.f32.gmra.mxu0 %v1820
      %v1839 = vpop.f32.mrf.mxu0
      %v1840 = vadd.f32 0.0, %v1839
      %1841 = vdwg.mxu0
      %v1842 = vrcp.pop %v1815
      %v1843 = vmul.f32 %v1815, %v1842
      %v1844 = vsub.f32 1.0, %v1843
      %v1845 = vmul.f32 %v1842, %v1844
      %v1846 = vadd.f32 %v1842, %v1845
      %vm1847 = vweird.f32 %v1815
      %vm1848 = vweird.f32 %v1842
      %vm1849 = vmor %vm1847, %vm1848
      %v1850 = vsel %vm1849, %v1842, %v1846
      %v1851 = vand.u32 2147483647, %v1815
      %vm1852 = vcmp.eq.f32.partialorder %v1851, 8.507059e+37
      %v1853 = vand.u32 %v1815, 2147483648
      %v1854 = vor.u32 1.1754944e-38, %v1853
      %v1855 = vsel %vm1852, %v1854, %v1850
      %v1856 = vmul.f32 %v1840, %v1855
      %1857 = vrot.lane.b32.xlu0 %v1586, 104
      %v1858 = vpop.permute.xlu0 %1857
      %1859 = vrot.lane.b32.xlu0 %v1617, 104
      %v1860 = vpop.permute.xlu0 %1859
      %v1861 = vsel %vm1155, %v1858, 0
      %v1863 = vsel %vm1155, %v1860, 0
      %1865 = vmatpush.xpose.msra.mxu0 0.0
      %1866 = vmatpush.xpose.msra.mxu0 0.0
      %1867 = vmatpush.xpose.msra.mxu0 0.0
      %1868 = vmatpush.xpose.msra.mxu0 0.0
      %1869 = vmatpush.xpose.msra.mxu0 0.0
      %1870 = vmatpush.xpose.msra.mxu0 0.0
      %1871 = vmatpush.xpose.msra.mxu0 0.0
      %1872 = vmatpush.xpose.msra.mxu0 0.0
      %1873 = vmatpush.xpose.msra.mxu0 0.0
      %1874 = vmatpush.xpose.msra.mxu0 0.0
      %1875 = vmatpush.xpose.msra.mxu0 0.0
      %1876 = vmatpush.xpose.msra.mxu0 0.0
      %1877 = vmatpush.xpose.msra.mxu0 0.0
      %1878 = vmatpush.xpose.msra.mxu0 0.0
      %1879 = vmatpush.xpose.msra.mxu0 0.0
      %1880 = vmatpush.xpose.msra.mxu0 %v1863
      %1881 = vmatmul.f32.gmra.mxu0 %v1861
      %v1882 = vpop.f32.mrf.mxu0
      %v1883 = vadd.f32 0.0, %v1882
      %1884 = vdwg.mxu0
      %v1885 = vmul.f32 %v1883, 0.35355338
      %v1886 = vadd.f32 %v1885, %v1182
      %v1887 = vsel %vm1155, %v1886, -inf
      %1888 = vmax.xlane.f32.xlu0 %v1887
      %v1889 = vpop.xlane.xlu0 %1888
      %v1890 = vsub.f32 %v1886, %v1889
      %v1891 = vmul.f32 %v1890, 1.442695
      %v1892 = vpow.pop %v1891
      %v1893 = vsel %vm1155, %v1892, 0.0
      %1894 = vadd.xlane.f32.xlu0 %v1893
      %v1895 = vpop.xlane.xlu0 %1894
      %1896 = vrot.lane.b32.xlu0 %v1617, 72
      %v1897 = vpop.permute.xlu0 %1896
      %v1900 = vsel %vm1155, %v1892, 0
      %1902 = vmatpush.msra.mxu0 0.0
      %1903 = vmatpush.msra.mxu0 0.0
      %1904 = vmatpush.msra.mxu0 0.0
      %1905 = vmatpush.msra.mxu0 0.0
      %1906 = vmatpush.msra.mxu0 0.0
      %1907 = vmatpush.msra.mxu0 0.0
      %1908 = vmatpush.msra.mxu0 0.0
      %1909 = vmatpush.msra.mxu0 0.0
      %1910 = vmatpush.msra.mxu0 0.0
      %1911 = vmatpush.msra.mxu0 0.0
      %1912 = vmatpush.msra.mxu0 0.0
      %1913 = vmatpush.msra.mxu0 0.0
      %1914 = vmatpush.msra.mxu0 0.0
      %1915 = vmatpush.msra.mxu0 0.0
      %1916 = vmatpush.msra.mxu0 0.0
      %1917 = vmatpush.msra.mxu0 %v1897
      %1918 = vmatmul.f32.gmra.mxu0 %v1900
      %v1919 = vpop.f32.mrf.mxu0
      %v1920 = vadd.f32 0.0, %v1919
      %1921 = vdwg.mxu0
      %v1922 = vrcp.pop %v1895
      %v1923 = vmul.f32 %v1895, %v1922
      %v1924 = vsub.f32 1.0, %v1923
      %v1925 = vmul.f32 %v1922, %v1924
      %v1926 = vadd.f32 %v1922, %v1925
      %vm1927 = vweird.f32 %v1895
      %vm1928 = vweird.f32 %v1922
      %vm1929 = vmor %vm1927, %vm1928
      %v1930 = vsel %vm1929, %v1922, %v1926
      %v1931 = vand.u32 2147483647, %v1895
      %vm1932 = vcmp.eq.f32.partialorder %v1931, 8.507059e+37
      %v1933 = vand.u32 %v1895, 2147483648
      %v1934 = vor.u32 1.1754944e-38, %v1933
      %v1935 = vsel %vm1932, %v1934, %v1930
      %v1936 = vmul.f32 %v1920, %v1935
      %1938 = vrot.lane.b32.xlu0 %v1776, 8
      %v1939 = vpop.permute.xlu0 %1938
      %1942 = vrot.lane.b32.xlu0 %v1856, 16
      %v1943 = vpop.permute.xlu0 %1942
      %1946 = vrot.lane.b32.xlu0 %v1936, 24
      %v1947 = vpop.permute.xlu0 %1946
      %v1949 = vsel %vm1155, %v1696, %v1939
      %v1950 = vsel %vm1488, %v1949, %v1943
      %v1951 = vsel %vm1490, %v1950, %v1947
      %v1952 = vld [vmem:[%s1041] sm:$0xff]
      %v1953 = vld [vmem:[%s1041 + $0x8] sm:$0xff]
      %v1954 = vld [vmem:[%s1041 + $0x10] sm:$0xff]
      %v1955 = vld [vmem:[%s1041 + $0x18] sm:$0xff]
      %v1957 = vsel %vm1083, %v1951, 0
      %1959 = vmatpush.msra.mxu0 0.0
      %1960 = vmatpush.msra.mxu0 0.0
      %1961 = vmatpush.msra.mxu0 0.0
      %1962 = vmatpush.msra.mxu0 0.0
      %1963 = vmatpush.msra.mxu0 0.0
      %1964 = vmatpush.msra.mxu0 0.0
      %1965 = vmatpush.msra.mxu0 0.0
      %1966 = vmatpush.msra.mxu0 0.0
      %1967 = vmatpush.msra.mxu0 0.0
      %1968 = vmatpush.msra.mxu0 0.0
      %1969 = vmatpush.msra.mxu0 0.0
      %1970 = vmatpush.msra.mxu0 0.0
      %1971 = vmatpush.msra.mxu0 %v1955
      %1972 = vmatpush.msra.mxu0 %v1954
      %1973 = vmatpush.msra.mxu0 %v1953
      %1974 = vmatpush.msra.mxu0 %v1952
      %1975 = vmatmul.f32.gmra.mxu0 %v1957
      %v1976 = vpop.f32.mrf.mxu0
      %v1977 = vadd.f32 0.0, %v1976
      %1978 = vdwg.mxu0
      %v1979 = vadd.f32 %v1524, %v1977
      %v1980 = vld [vmem:[%s1044] sm:$0x1]
      %v1982 = vperm.slane %v1980, 0
      %v1984 = vadd.f32 %v1979, %v1982
      %v1985 = vld [vmem:[%s1047] sm:$0x1]
      %v1986 = vld [vmem:[%s1050] sm:$0x1]
      %v1987 = vsel %vm1083, %v1984, 0.0
      %1988 = vadd.xlane.f32.xlu0 %v1987
      %v1989 = vpop.xlane.xlu0 %1988
      %v1990 = vmul.f32 %v1989, %v1093
      %v1991 = vsub.f32 %v1984, %v1990
      %v1992 = vmul.f32 %v1991, %v1991
      %v1993 = vsel %vm1083, %v1992, 0.0
      %1994 = vadd.xlane.f32.xlu0 %v1993
      %v1995 = vpop.xlane.xlu0 %1994
      %v1996 = vmul.f32 %v1995, %v1093
      %v1997 = vadd.f32 %v1996, 1e-05
      %v1998 = vrsqrt.pop %v1997
      %v1999 = vmul.f32 %v1998, %v1997
      %v2000 = vmul.f32 %v1999, %v1998
      %v2001 = vmul.f32 0.5, %v2000
      %v2002 = vsub.f32 1.5, %v2001
      %v2003 = vmul.f32 %v1998, %v2002
      %vm2004 = vweird.f32 %v1997
      %vm2005 = vweird.f32 %v1998
      %vm2006 = vmor %vm2004, %vm2005
      %v2007 = vsel %vm2006, %v1998, %v2003
      %v2008 = vmul.f32 %v1991, %v2007
      %v2010 = vperm.slane %v1985, 0
      %v2012 = vmul.f32 %v2008, %v2010
      %v2014 = vperm.slane %v1986, 0
      %v2016 = vadd.f32 %v2012, %v2014
      %v2017 = vld [vmem:[%s1055] sm:$0xff]
      %v2018 = vld [vmem:[%s1055 + $0x8] sm:$0xff]
      %v2019 = vld [vmem:[%s1055 + $0x10] sm:$0xff]
      %v2020 = vld [vmem:[%s1055 + $0x18] sm:$0xff]
      %v2021 = vld [vmem:[%s1058] sm:$0x1]
      %v2023 = vperm.slane %v2021, 0
      %v2026 = vsel %vm1083, %v2016, 0
      %2028 = vmatpush.msra.mxu0 0.0
      %2029 = vmatpush.msra.mxu0 0.0
      %2030 = vmatpush.msra.mxu0 0.0
      %2031 = vmatpush.msra.mxu0 0.0
      %2032 = vmatpush.msra.mxu0 0.0
      %2033 = vmatpush.msra.mxu0 0.0
      %2034 = vmatpush.msra.mxu0 0.0
      %2035 = vmatpush.msra.mxu0 0.0
      %2036 = vmatpush.msra.mxu0 0.0
      %2037 = vmatpush.msra.mxu0 0.0
      %2038 = vmatpush.msra.mxu0 0.0
      %2039 = vmatpush.msra.mxu0 0.0
      %2040 = vmatpush.msra.mxu0 %v2020
      %2041 = vmatpush.msra.mxu0 %v2019
      %2042 = vmatpush.msra.mxu0 %v2018
      %2043 = vmatpush.msra.mxu0 %v2017
      %2044 = vmatmul.f32.gmra.mxu0 %v2026
      %v2045 = vpop.f32.mrf.mxu0
      %v2046 = vadd.f32 %v2023, %v2045
      %2047 = vdwg.mxu0
      %vm2048 = vcmp.ge.f32.partialorder %v2046, 0.0
      %v2049 = vmul.f32 %v2046, 0.01
      %v2050 = vsel %vm2048, %v2046, %v2049
      %v2051 = vld [vmem:[%s1063] sm:$0xff]
      %v2052 = vld [vmem:[%s1063 + $0x8] sm:$0xff]
      %v2053 = vld [vmem:[%s1063 + $0x10] sm:$0xff]
      %v2054 = vld [vmem:[%s1063 + $0x18] sm:$0xff]
      %v2055 = vld [vmem:[%s1063 + $0x20] sm:$0xff]
      %v2056 = vld [vmem:[%s1063 + $0x28] sm:$0xff]
      %v2057 = vld [vmem:[%s1063 + $0x30] sm:$0xff]
      %v2058 = vld [vmem:[%s1063 + $0x38] sm:$0xff]
      %vm2059 = vcmask 523264
      %v2061 = vsel %vm2059, %v2050, 0
      %2063 = vmatpush.msra.mxu0 0.0
      %2064 = vmatpush.msra.mxu0 0.0
      %2065 = vmatpush.msra.mxu0 0.0
      %2066 = vmatpush.msra.mxu0 0.0
      %2067 = vmatpush.msra.mxu0 0.0
      %2068 = vmatpush.msra.mxu0 0.0
      %2069 = vmatpush.msra.mxu0 0.0
      %2070 = vmatpush.msra.mxu0 0.0
      %2071 = vmatpush.msra.mxu0 %v2058
      %2072 = vmatpush.msra.mxu0 %v2057
      %2073 = vmatpush.msra.mxu0 %v2056
      %2074 = vmatpush.msra.mxu0 %v2055
      %2075 = vmatpush.msra.mxu0 %v2054
      %2076 = vmatpush.msra.mxu0 %v2053
      %2077 = vmatpush.msra.mxu0 %v2052
      %2078 = vmatpush.msra.mxu0 %v2051
      %2079 = vmatmul.f32.gmra.mxu0 %v2061
      %v2080 = vpop.f32.mrf.mxu0
      %v2081 = vadd.f32 0.0, %v2080
      %2082 = vdwg.mxu0
      %v2083 = vadd.f32 %v1984, %v2081
      %v2084 = vld [vmem:[%s1066] sm:$0x1]
      %v2086 = vperm.slane %v2084, 0
      %v2088 = vadd.f32 %v2083, %v2086
      %2089 = vst.msk [vmem:[#allocation2] sm:$0xff] %vm1083, %v2088
      %p2090 = scmp.eq.s32.totalorder %s39, 1
      // Predicated region
      $region117: #{decoder_forward.4} parent=111 // pred_check
        %p2091 = pneg %p2090
      $region118: #{decoder_forward.4} parent=111 // pred_check_branch
        %2093 = sbr.rel (%p2091) target = $region120
      $region119: #{decoder_forward.4} parent=111 // pred_region
        %v2094 = vld [vmem:[#allocation2] sm:$0xff]
        %2095 = vst.msk [vmem:[%s1070] sm:$0xff] %vm1083, %v2094
      $region120: #{decoder_forward.4} parent=111 // pred_fallthru
        _
      %p2096 = scmp.lt.s32.totalorder %s38, 1
      %s2097 = scalar_select %p2096, %s38, 1
      %s2098 = smul.addr %s2097, 8
      %s2099 = scalar_lea.vmem %s23, %s2098
      // Predicated region
      $region121: #{decoder_forward.4} parent=111 // pred_check
        %p2100 = pneg %p662
      $region122: #{decoder_forward.4} parent=111 // pred_check_branch
        %2102 = sbr.rel (%p2100) target = $region124
      $region123: #{decoder_forward.4} parent=111 // pred_region
        _
      $region124: #{decoder_forward.4} parent=111 // pred_fallthru
        _
    $region112: #{decoder_forward.4} parent=5 // pred_fallthru
      _
    %p2103 = scmp.le.s32.totalorder 2, %s29
    // Predicated region
    $region125: #{decoder_forward.4} parent=5 // pred_check
      %p2104 = pneg %p2103
    $region126: #{decoder_forward.4} parent=5 // pred_check_branch
      %2106 = sbr.rel (%p2104) target = $region128
    $region127: #{decoder_forward.4} parent=5 // pred_region
      %s2107 = ssub.s32 %s29, 2
      // Predicated region
      $region129: #{decoder_forward.4} parent=127 // pred_check
        %p2108 = pneg %p668
      $region130: #{decoder_forward.4} parent=127 // pred_check_branch
        %2110 = sbr.rel (%p2108) target = $region132
      $region131: #{decoder_forward.4} parent=127 // pred_region
        %p2111 = scmp.lt.s32.totalorder %s40, 1
        %s2112 = scalar_select %p2111, %s40, 1
        %s2113 = smul.addr %s2112, 8
        %s2114 = scalar_lea.vmem %s23, %s2113
      $region132: #{decoder_forward.4} parent=127 // pred_fallthru
        _
    $region128: #{decoder_forward.4} parent=5 // pred_fallthru
      _
  $region6: #{decoder_forward.4} parent=0 // loop_footer
    %s33 = sadd.s32 1, %s29
  $region7: #{decoder_forward.4} parent=0 // loop_footer_branch
    %28 = sbr.rel target = $region3
  $region8: #{decoder_forward.4} parent=0 // loop_exit
    _

</llo_original>
